<compile_context>
chip_gen: v5e
topology: v5e:2x2
jax: 0.10.0
libtpu: 0.0.40
codegen_flags: <defaults>
</compile_context>

<pallas_src>
import jax
import jax.numpy as jnp
from jax.experimental import pallas as pl
from jax.experimental.pallas import tpu as pltpu


def _full_spec(shape):
    nd = len(shape)
    return pl.BlockSpec(shape, lambda *_: (0,) * nd)


# ----------------------------------------------------------------------------
# Kernel: lane-dense conv matmul   out(Cout, M) = W(Cout, K) @ P(K, M) + b
# (M = N*OH*OW on the lane axis -> wide stores, channel-major result)
# ----------------------------------------------------------------------------
def conv_mm_kernel(w_ref, p_ref, b_ref, o_ref):
    o_ref[...] = (
        jnp.dot(w_ref[...], p_ref[...], preferred_element_type=jnp.float32)
        + b_ref[...]
    )


def conv_matmul(w_flat, patches_t, b):
    cout, k = w_flat.shape
    m = patches_t.shape[1]
    return pl.pallas_call(
        conv_mm_kernel,
        out_shape=jax.ShapeDtypeStruct((cout, m), jnp.float32),
        grid=(1,),
        in_specs=[_full_spec((cout, k)),
                  _full_spec((k, m)),
                  _full_spec((cout, 1))],
        out_specs=_full_spec((cout, m)),
        compiler_params=pltpu.CompilerParams(
            dimension_semantics=("arbitrary",)),
    )(w_flat, patches_t, b.reshape(cout, 1))


# ----------------------------------------------------------------------------
# Kernel: fused head = feature_net (fc1+sigmoid+fc2+sigmoid) + LSTM,
# K-tiled over the 4608-wide contraction axis.
#   step k:   h1_acc += x[:,k] @ fc1_w[:,k].T     (streamed 9.4 MB weight)
#             gx_acc += x[:,k] @ w_ih[:,k].T      (streamed LSTM input proj)
#   last k:   sigmoid / fc2 / sigmoid / LSTM recurrence (tiny, all in VMEM)
# All weights arrive in torch layout; dot_general(((1,),(1,))) contracts the
# last dims so no transposed copies are ever materialized.
# ----------------------------------------------------------------------------
def head_kernel(x_ref, fc1w_ref, wih_ref, fc1b_ref, fc2w_ref, fc2b_ref,
                bl_ref, whh_ref, feat_ref, act_ref, h1_acc, gx_acc):
    dn = (((1,), (1,)), ((), ()))          # contract last dims == rhs.T
    k = pl.program_id(0)

    @pl.when(k == 0)
    def _():
        h1_acc[...] = jnp.zeros_like(h1_acc)
        gx_acc[...] = jnp.zeros_like(gx_acc)

    x = x_ref[...]                         # (T, tk)
    h1_acc[...] += jax.lax.dot_general(
        x, fc1w_ref[...], dn, preferred_element_type=jnp.float32)   # (T, 512)
    gx_acc[...] += jax.lax.dot_general(
        x, wih_ref[...], dn, preferred_element_type=jnp.float32)    # (T, 4A)

    @pl.when(k == pl.num_programs(0) - 1)
    def _():
        # feature_net tail
        h1 = jax.nn.sigmoid(h1_acc[...] + fc1b_ref[...])            # (T, 512)
        feat_ref[...] = jax.nn.sigmoid(
            jax.lax.dot_general(h1, fc2w_ref[...], dn,
                                preferred_element_type=jnp.float32)
            + fc2b_ref[...])                                        # (T, F)

        # decision_net: LSTM over the (T, 4608) "unbatched sequence".
        gx = gx_acc[...] + bl_ref[...]                               # (T, 4A)
        whh = whh_ref[...]                                           # (4A, A)
        a = whh.shape[1]
        t_len = gx.shape[0]                                          # static
        h = jnp.zeros((1, a), jnp.float32)
        c = jnp.zeros((1, a), jnp.float32)
        for t in range(t_len):
            g = gx[t:t + 1, :] + jax.lax.dot_general(
                h, whh, dn, preferred_element_type=jnp.float32)      # (1, 4A)
            i_g = jax.nn.sigmoid(g[:, 0 * a:1 * a])
            f_g = jax.nn.sigmoid(g[:, 1 * a:2 * a])
            g_g = jnp.tanh(g[:, 2 * a:3 * a])
            o_g = jax.nn.sigmoid(g[:, 3 * a:4 * a])
            c = f_g * c + i_g * g_g
            h = o_g * jnp.tanh(c)
            act_ref[pl.ds(t, 1), :] = h


def head_forward(x_flat, fc1_w, fc1_b, fc2_w, fc2_b, w_ih, w_hh, b_ih, b_hh,
                 *, tk=1152):
    t, d = x_flat.shape
    nh = fc1_w.shape[0]                    # 512
    f = fc2_w.shape[0]
    a = w_hh.shape[1]
    assert d % tk == 0 and tk % 128 == 0
    nk = d // tk
    b_l = (b_ih + b_hh).reshape(1, 4 * a)
    return pl.pallas_call(
        head_kernel,
        out_shape=(jax.ShapeDtypeStruct((t, f), jnp.float32),
                   jax.ShapeDtypeStruct((t, a), jnp.float32)),
        grid=(nk,),
        in_specs=[
            pl.BlockSpec((t, tk), lambda k: (0, k)),         # x_flat   (streamed)
            pl.BlockSpec((nh, tk), lambda k: (0, k)),        # fc1_w    (streamed)
            pl.BlockSpec((4 * a, tk), lambda k: (0, k)),     # lstm_w_ih(streamed)
            pl.BlockSpec((1, nh), lambda k: (0, 0)),         # fc1_b    (resident)
            pl.BlockSpec(fc2_w.shape, lambda k: (0, 0)),     # fc2_w    (resident)
            pl.BlockSpec((1, f), lambda k: (0, 0)),          # fc2_b    (resident)
            pl.BlockSpec((1, 4 * a), lambda k: (0, 0)),      # b_ih+b_hh(resident)
            pl.BlockSpec(w_hh.shape, lambda k: (0, 0)),      # lstm_w_hh(resident)
        ],
        out_specs=(pl.BlockSpec((t, f), lambda k: (0, 0)),
                   pl.BlockSpec((t, a), lambda k: (0, 0))),
        scratch_shapes=[pltpu.VMEM((t, nh), jnp.float32),    # fc1 accumulator
                        pltpu.VMEM((t, 4 * a), jnp.float32)],  # w_ih accumulator
        compiler_params=pltpu.CompilerParams(
            dimension_semantics=("arbitrary",)),
    )(x_flat, fc1_w, w_ih, fc1_b.reshape(1, -1), fc2_w, fc2_b.reshape(1, -1),
      b_l, w_hh)


# ----------------------------------------------------------------------------
# Host-side im2col glue (cheap, <600 KB), producing *transposed* patch
# matrices so the Pallas conv matmuls are channel-major and lane-dense.
#   rows = (c, kh, kw)  (matches torch weight.reshape(Cout, -1) columns)
#   cols = (n, oh, ow)
# ----------------------------------------------------------------------------
def _im2col_t(x_nchw, kh, kw, stride):
    n, c, h, w = x_nchw.shape
    oh = (h - kh) // stride + 1
    ow = (w - kw) // stride + 1
    cols = []
    for i in range(kh):
        for j in range(kw):
            cols.append(
                x_nchw[:, :, i:i + oh * stride:stride, j:j + ow * stride:stride])
    p = jnp.stack(cols, axis=2)                          # (n, c, kh*kw, oh, ow)
    p_t = p.transpose(1, 2, 0, 3, 4).reshape(c * kh * kw, n * oh * ow)
    return p_t, oh, ow


# ----------------------------------------------------------------------------
# DRQNv1 forward
# ----------------------------------------------------------------------------
@jax.jit
def drqnv1_forward(x, p):
    n = x.shape[0]

    # conv1: Conv2d(3, 32, 8, stride=4) -> channel-major (32, N*18*20)
    p1_t, oh1, ow1 = _im2col_t(x, 8, 8, 4)
    y1 = conv_matmul(p['conv1_w'].reshape(32, -1), p1_t, p['conv1_b'])

    # conv2: Conv2d(32, 64, 4, stride=2), im2col taken directly from the
    # channel-major conv1 output (no NCHW round trip).
    y1 = y1.reshape(32, n, oh1, ow1)
    oh2 = (oh1 - 4) // 2 + 1
    ow2 = (ow1 - 4) // 2 + 1
    cols = []
    for i in range(4):
        for j in range(4):
            cols.append(y1[:, :, i:i + oh2 * 2:2, j:j + ow2 * 2:2])  # (32,n,8,9)
    p2_t = jnp.stack(cols, axis=1).reshape(32 * 16, n * oh2 * ow2)
    y2 = conv_matmul(p['conv2_w'].reshape(64, -1), p2_t, p['conv2_b'])  # (64, n*72)

    # torch x.view(-1, 4608): channel-major (c2, oh2, ow2) per sample.
    x_flat = y2.reshape(64, n, oh2 * ow2).transpose(1, 0, 2).reshape(n, -1)

    feature, actions = head_forward(
        x_flat, p['fc1_w'], p['fc1_b'], p['fc2_w'], p['fc2_b'],
        p['lstm_w_ih'], p['lstm_w_hh'], p['lstm_b_ih'], p['lstm_b_hh'])
    return feature, actions


# ----------------------------------------------------------------------------
# Pure-JAX fp32 (HIGHEST) reference, for correctness check only.
# ----------------------------------------------------------------------------
def reference_forward(x, p):
    hi = jax.lax.Precision.HIGHEST
    dn = ('NCHW', 'OIHW', 'NCHW')
    y = jax.lax.conv_general_dilated(x, p['conv1_w'], (4, 4), 'VALID',
                                     dimension_numbers=dn, precision=hi)
    y = y + p['conv1_b'][None, :, None, None]
    y = jax.lax.conv_general_dilated(y, p['conv2_w'], (2, 2), 'VALID',
                                     dimension_numbers=dn, precision=hi)
    y = y + p['conv2_b'][None, :, None, None]
    xf = y.reshape(x.shape[0], -1)
    h1 = jax.nn.sigmoid(jnp.dot(xf, p['fc1_w'].T, precision=hi) + p['fc1_b'])
    feat = jax.nn.sigmoid(jnp.dot(h1, p['fc2_w'].T, precision=hi) + p['fc2_b'])
    a = p['lstm_w_hh'].shape[1]
    h = jnp.zeros((a,), jnp.float32)
    c = jnp.zeros((a,), jnp.float32)
    outs = []
    for t in range(xf.shape[0]):
        g = (jnp.dot(p['lstm_w_ih'], xf[t], precision=hi) + p['lstm_b_ih']
             + jnp.dot(p['lstm_w_hh'], h, precision=hi) + p['lstm_b_hh'])
        i_g = jax.nn.sigmoid(g[0:a]); f_g = jax.nn.sigmoid(g[a:2 * a])
        g_g = jnp.tanh(g[2 * a:3 * a]); o_g = jax.nn.sigmoid(g[3 * a:4 * a])
        c = f_g * c + i_g * g_g
        h = o_g * jnp.tanh(c)
        outs.append(h)
    return feat, jnp.stack(outs)


if __name__ == "__main__":
    key = jax.random.PRNGKey(0)
    action_num, feature_num = 4, 8
    # Spatial size chosen so the conv stack yields exactly 64*8*9 = 4608
    # features per sample, matching the hard-coded 4608 in the module.
    N, C, H, W = 2, 3, 76, 84

    ks = jax.random.split(key, 13)
    s = jnp.float32(0.05)
    params = {
        'conv1_w': jax.random.normal(ks[0], (32, 3, 8, 8), jnp.float32) * s,
        'conv1_b': jax.random.normal(ks[1], (32,), jnp.float32) * s,
        'conv2_w': jax.random.normal(ks[2], (64, 32, 4, 4), jnp.float32) * s,
        'conv2_b': jax.random.normal(ks[3], (64,), jnp.float32) * s,
        'lstm_w_ih': jax.random.normal(ks[4], (4 * action_num, 4608), jnp.float32) * s,
        'lstm_w_hh': jax.random.normal(ks[5], (4 * action_num, action_num), jnp.float32) * s,
        'lstm_b_ih': jax.random.normal(ks[6], (4 * action_num,), jnp.float32) * s,
        'lstm_b_hh': jax.random.normal(ks[7], (4 * action_num,), jnp.float32) * s,
        'fc1_w': jax.random.normal(ks[8], (512, 4608), jnp.float32) * s,
        'fc1_b': jax.random.normal(ks[9], (512,), jnp.float32) * s,
        'fc2_w': jax.random.normal(ks[10], (feature_num, 512), jnp.float32) * s,
        'fc2_b': jax.random.normal(ks[11], (feature_num,), jnp.float32) * s,
    }
    x = jax.random.normal(ks[12], (N, C, H, W), jnp.float32)

    feature, actions = drqnv1_forward(x, params)
    jax.block_until_ready((feature, actions))

    assert feature.shape == (N, feature_num)
    assert actions.shape == (N, action_num)

    # Check against an fp32 (HIGHEST) reference; kernels use DEFAULT-precision
    # MXU passes, so allow a slightly looser tolerance.
    ref_feat, ref_act = reference_forward(x, params)
    assert jnp.allclose(feature, ref_feat, atol=3e-2, rtol=3e-2)
    assert jnp.allclose(actions, ref_act, atol=3e-2, rtol=3e-2)

    print("KERNEL_OK")
</pallas_src>

<mosaic_0001>
module attributes {stable_mosaic.version = 11 : i64} {
  func.func @conv_mm_kernel(%arg0: i32, %arg1: memref<32x192xf32, #tpu.memory_space<vmem>>, %arg2: memref<192x720xf32, #tpu.memory_space<vmem>>, %arg3: memref<32x1xf32, #tpu.memory_space<vmem>>, %arg4: memref<32x720xf32, #tpu.memory_space<vmem>>) attributes {dimension_semantics = [#tpu.dimension_semantics<arbitrary>], iteration_bounds = array<i64: 1>, scalar_prefetch = 0 : i64, scratch_operands = 0 : i64, tpu.core_type = #tpu.core_type<tc>, window_params = [{pipeline_mode = #tpu.pipeline_mode<synchronous>, transform_indices = @transform_0, window_bounds = array<i64: 32, 192>}, {pipeline_mode = #tpu.pipeline_mode<synchronous>, transform_indices = @transform_1, window_bounds = array<i64: 192, 720>}, {pipeline_mode = #tpu.pipeline_mode<synchronous>, transform_indices = @transform_2, window_bounds = array<i64: 32, 1>}, {pipeline_mode = #tpu.pipeline_mode<synchronous>, transform_indices = @transform_3, window_bounds = array<i64: 32, 720>}]} {
    %c0 = arith.constant 0 : index
    %c0_0 = arith.constant 0 : index
    %0 = vector.load %arg1[%c0, %c0_0] : memref<32x192xf32, #tpu.memory_space<vmem>>, vector<32x192xf32>
    %c0_1 = arith.constant 0 : index
    %c0_2 = arith.constant 0 : index
    %1 = vector.load %arg2[%c0_1, %c0_2] : memref<192x720xf32, #tpu.memory_space<vmem>>, vector<192x720xf32>
    %cst = arith.constant dense<0.000000e+00> : vector<32x720xf32>
    %2 = tpu.matmul %0, %1, %cst {dimension_numbers = #tpu.dot_dimension_numbers<[1], [0], [0], [1], [0, 0, 1, 1], [], []>} : vector<32x192xf32>, vector<192x720xf32>, vector<32x720xf32> -> vector<32x720xf32>
    %c0_3 = arith.constant 0 : index
    %c0_4 = arith.constant 0 : index
    %3 = vector.load %arg3[%c0_3, %c0_4] : memref<32x1xf32, #tpu.memory_space<vmem>>, vector<32x1xf32>
    %4 = vector.broadcast %3 : vector<32x1xf32> to vector<32x720xf32>
    %5 = arith.addf %2, %4 : vector<32x720xf32>
    %c0_5 = arith.constant 0 : index
    %c0_6 = arith.constant 0 : index
    %6 = vector.load %arg4[%c0_5, %c0_6] : memref<32x720xf32, #tpu.memory_space<vmem>>, vector<32x720xf32>
    tpu.vector_store %arg4[%c0_5, %c0_6], %5 {strides = array<i32>} : memref<32x720xf32, #tpu.memory_space<vmem>>, vector<32x720xf32>,
    return
  }
  func.func @transform_0(%arg0: i32) -> (i32, i32) {
    %c0_i32 = arith.constant 0 : i32
    %c0_i32_0 = arith.constant 0 : i32
    %c0_i32_1 = arith.constant 0 : i32
    return %c0_i32, %c0_i32_0 : i32, i32
  }
  func.func @transform_1(%arg0: i32) -> (i32, i32) {
    %c0_i32 = arith.constant 0 : i32
    %c0_i32_0 = arith.constant 0 : i32
    %c0_i32_1 = arith.constant 0 : i32
    return %c0_i32, %c0_i32_0 : i32, i32
  }
  func.func @transform_2(%arg0: i32) -> (i32, i32) {
    %c0_i32 = arith.constant 0 : i32
    %c0_i32_0 = arith.constant 0 : i32
    %c0_i32_1 = arith.constant 0 : i32
    return %c0_i32, %c0_i32_0 : i32, i32
  }
  func.func @transform_3(%arg0: i32) -> (i32, i32) {
    %c0_i32 = arith.constant 0 : i32
    %c0_i32_0 = arith.constant 0 : i32
    %c0_i32_1 = arith.constant 0 : i32
    return %c0_i32, %c0_i32_0 : i32, i32
  }
}

module attributes {stable_mosaic.version = 11 : i64} {
  func.func @conv_mm_kernel(%arg0: i32, %arg1: memref<64x512xf32, #tpu.memory_space<vmem>>, %arg2: memref<512x144xf32, #tpu.memory_space<vmem>>, %arg3: memref<64x1xf32, #tpu.memory_space<vmem>>, %arg4: memref<64x144xf32, #tpu.memory_space<vmem>>) attributes {dimension_semantics = [#tpu.dimension_semantics<arbitrary>], iteration_bounds = array<i64: 1>, scalar_prefetch = 0 : i64, scratch_operands = 0 : i64, tpu.core_type = #tpu.core_type<tc>, window_params = [{pipeline_mode = #tpu.pipeline_mode<synchronous>, transform_indices = @transform_0, window_bounds = array<i64: 64, 512>}, {pipeline_mode = #tpu.pipeline_mode<synchronous>, transform_indices = @transform_1, window_bounds = array<i64: 512, 144>}, {pipeline_mode = #tpu.pipeline_mode<synchronous>, transform_indices = @transform_2, window_bounds = array<i64: 64, 1>}, {pipeline_mode = #tpu.pipeline_mode<synchronous>, transform_indices = @transform_3, window_bounds = array<i64: 64, 144>}]} {
    %c0 = arith.constant 0 : index
    %c0_0 = arith.constant 0 : index
    %0 = vector.load %arg1[%c0, %c0_0] : memref<64x512xf32, #tpu.memory_space<vmem>>, vector<64x512xf32>
    %c0_1 = arith.constant 0 : index
    %c0_2 = arith.constant 0 : index
    %1 = vector.load %arg2[%c0_1, %c0_2] : memref<512x144xf32, #tpu.memory_space<vmem>>, vector<512x144xf32>
    %cst = arith.constant dense<0.000000e+00> : vector<64x144xf32>
    %2 = tpu.matmul %0, %1, %cst {dimension_numbers = #tpu.dot_dimension_numbers<[1], [0], [0], [1], [0, 0, 1, 1], [], []>} : vector<64x512xf32>, vector<512x144xf32>, vector<64x144xf32> -> vector<64x144xf32>
    %c0_3 = arith.constant 0 : index
    %c0_4 = arith.constant 0 : index
    %3 = vector.load %arg3[%c0_3, %c0_4] : memref<64x1xf32, #tpu.memory_space<vmem>>, vector<64x1xf32>
    %4 = vector.broadcast %3 : vector<64x1xf32> to vector<64x144xf32>
    %5 = arith.addf %2, %4 : vector<64x144xf32>
    %c0_5 = arith.constant 0 : index
    %c0_6 = arith.constant 0 : index
    %6 = vector.load %arg4[%c0_5, %c0_6] : memref<64x144xf32, #tpu.memory_space<vmem>>, vector<64x144xf32>
    tpu.vector_store %arg4[%c0_5, %c0_6], %5 {strides = array<i32>} : memref<64x144xf32, #tpu.memory_space<vmem>>, vector<64x144xf32>,
    return
  }
  func.func @transform_0(%arg0: i32) -> (i32, i32) {
    %c0_i32 = arith.constant 0 : i32
    %c0_i32_0 = arith.constant 0 : i32
    %c0_i32_1 = arith.constant 0 : i32
    return %c0_i32, %c0_i32_0 : i32, i32
  }
  func.func @transform_1(%arg0: i32) -> (i32, i32) {
    %c0_i32 = arith.constant 0 : i32
    %c0_i32_0 = arith.constant 0 : i32
    %c0_i32_1 = arith.constant 0 : i32
    return %c0_i32, %c0_i32_0 : i32, i32
  }
  func.func @transform_2(%arg0: i32) -> (i32, i32) {
    %c0_i32 = arith.constant 0 : i32
    %c0_i32_0 = arith.constant 0 : i32
    %c0_i32_1 = arith.constant 0 : i32
    return %c0_i32, %c0_i32_0 : i32, i32
  }
  func.func @transform_3(%arg0: i32) -> (i32, i32) {
    %c0_i32 = arith.constant 0 : i32
    %c0_i32_0 = arith.constant 0 : i32
    %c0_i32_1 = arith.constant 0 : i32
    return %c0_i32, %c0_i32_0 : i32, i32
  }
}

module attributes {stable_mosaic.version = 11 : i64} {
  func.func @head_kernel(%arg0: i32, %arg1: memref<2x1152xf32, #tpu.memory_space<vmem>>, %arg2: memref<512x1152xf32, #tpu.memory_space<vmem>>, %arg3: memref<16x1152xf32, #tpu.memory_space<vmem>>, %arg4: memref<1x512xf32, #tpu.memory_space<vmem>>, %arg5: memref<8x512xf32, #tpu.memory_space<vmem>>, %arg6: memref<1x8xf32, #tpu.memory_space<vmem>>, %arg7: memref<1x16xf32, #tpu.memory_space<vmem>>, %arg8: memref<16x4xf32, #tpu.memory_space<vmem>>, %arg9: memref<2x8xf32, #tpu.memory_space<vmem>>, %arg10: memref<2x4xf32, #tpu.memory_space<vmem>>, %arg11: memref<2x512xf32, #tpu.memory_space<vmem>>, %arg12: memref<2x16xf32, #tpu.memory_space<vmem>>) attributes {dimension_semantics = [#tpu.dimension_semantics<arbitrary>], iteration_bounds = array<i64: 4>, scalar_prefetch = 0 : i64, scratch_operands = 2 : i64, tpu.core_type = #tpu.core_type<tc>, window_params = [{transform_indices = @transform_0, window_bounds = array<i64: 2, 1152>}, {transform_indices = @transform_1, window_bounds = array<i64: 512, 1152>}, {transform_indices = @transform_2, window_bounds = array<i64: 16, 1152>}, {pipeline_mode = #tpu.pipeline_mode<synchronous>, transform_indices = @transform_3, window_bounds = array<i64: 1, 512>}, {pipeline_mode = #tpu.pipeline_mode<synchronous>, transform_indices = @transform_4, window_bounds = array<i64: 8, 512>}, {pipeline_mode = #tpu.pipeline_mode<synchronous>, transform_indices = @transform_5, window_bounds = array<i64: 1, 8>}, {pipeline_mode = #tpu.pipeline_mode<synchronous>, transform_indices = @transform_6, window_bounds = array<i64: 1, 16>}, {pipeline_mode = #tpu.pipeline_mode<synchronous>, transform_indices = @transform_7, window_bounds = array<i64: 16, 4>}, {pipeline_mode = #tpu.pipeline_mode<synchronous>, transform_indices = @transform_8, window_bounds = array<i64: 2, 8>}, {pipeline_mode = #tpu.pipeline_mode<synchronous>, transform_indices = @transform_9, window_bounds = array<i64: 2, 4>}]} {
    %c0_i32 = arith.constant 0 : i32
    %0 = arith.cmpi eq, %arg0, %c0_i32 : i32
    %1 = arith.extui %0 : i1 to i32
    %c0_i32_0 = arith.constant 0 : i32
    %2 = arith.cmpi ne, %1, %c0_i32_0 : i32
    scf.if %2 {
      %cst_16 = arith.constant 0.000000e+00 : f32
      %17 = vector.broadcast %cst_16 : f32 to vector<2x512xf32>
      %c0_17 = arith.constant 0 : index
      %c0_18 = arith.constant 0 : index
      %18 = vector.load %arg11[%c0_17, %c0_18] : memref<2x512xf32, #tpu.memory_space<vmem>>, vector<2x512xf32>
      tpu.vector_store %arg11[%c0_17, %c0_18], %17 {strides = array<i32>} : memref<2x512xf32, #tpu.memory_space<vmem>>, vector<2x512xf32>,
      %cst_19 = arith.constant 0.000000e+00 : f32
      %19 = vector.broadcast %cst_19 : f32 to vector<2x16xf32>
      %c0_20 = arith.constant 0 : index
      %c0_21 = arith.constant 0 : index
      %20 = vector.load %arg12[%c0_20, %c0_21] : memref<2x16xf32, #tpu.memory_space<vmem>>, vector<2x16xf32>
      tpu.vector_store %arg12[%c0_20, %c0_21], %19 {strides = array<i32>} : memref<2x16xf32, #tpu.memory_space<vmem>>, vector<2x16xf32>,
    } else {
    }
    %c0 = arith.constant 0 : index
    %c0_1 = arith.constant 0 : index
    %3 = vector.load %arg1[%c0, %c0_1] : memref<2x1152xf32, #tpu.memory_space<vmem>>, vector<2x1152xf32>
    %c0_2 = arith.constant 0 : index
    %c0_3 = arith.constant 0 : index
    %4 = vector.load %arg11[%c0_2, %c0_3] : memref<2x512xf32, #tpu.memory_space<vmem>>, vector<2x512xf32>
    %c0_4 = arith.constant 0 : index
    %c0_5 = arith.constant 0 : index
    %5 = vector.load %arg2[%c0_4, %c0_5] : memref<512x1152xf32, #tpu.memory_space<vmem>>, vector<512x1152xf32>
    %cst = arith.constant dense<0.000000e+00> : vector<2x512xf32>
    %6 = tpu.matmul %3, %5, %cst {dimension_numbers = #tpu.dot_dimension_numbers<[1], [1], [0], [0], [0, 0, 1, 0], [], []>} : vector<2x1152xf32>, vector<512x1152xf32>, vector<2x512xf32> -> vector<2x512xf32>
    %7 = arith.addf %4, %6 : vector<2x512xf32>
    %c0_6 = arith.constant 0 : index
    %c0_7 = arith.constant 0 : index
    %8 = vector.load %arg11[%c0_6, %c0_7] : memref<2x512xf32, #tpu.memory_space<vmem>>, vector<2x512xf32>
    tpu.vector_store %arg11[%c0_6, %c0_7], %7 {strides = array<i32>} : memref<2x512xf32, #tpu.memory_space<vmem>>, vector<2x512xf32>,
    %c0_8 = arith.constant 0 : index
    %c0_9 = arith.constant 0 : index
    %9 = vector.load %arg12[%c0_8, %c0_9] : memref<2x16xf32, #tpu.memory_space<vmem>>, vector<2x16xf32>
    %c0_10 = arith.constant 0 : index
    %c0_11 = arith.constant 0 : index
    %10 = vector.load %arg3[%c0_10, %c0_11] : memref<16x1152xf32, #tpu.memory_space<vmem>>, vector<16x1152xf32>
    %cst_12 = arith.constant dense<0.000000e+00> : vector<2x16xf32>
    %11 = tpu.matmul %3, %10, %cst_12 {dimension_numbers = #tpu.dot_dimension_numbers<[1], [1], [0], [0], [0, 0, 1, 0], [], []>} : vector<2x1152xf32>, vector<16x1152xf32>, vector<2x16xf32> -> vector<2x16xf32>
    %12 = arith.addf %9, %11 : vector<2x16xf32>
    %c0_13 = arith.constant 0 : index
    %c0_14 = arith.constant 0 : index
    %13 = vector.load %arg12[%c0_13, %c0_14] : memref<2x16xf32, #tpu.memory_space<vmem>>, vector<2x16xf32>
    tpu.vector_store %arg12[%c0_13, %c0_14], %12 {strides = array<i32>} : memref<2x16xf32, #tpu.memory_space<vmem>>, vector<2x16xf32>,
    %c3_i32 = arith.constant 3 : i32
    %14 = arith.cmpi eq, %arg0, %c3_i32 : i32
    %15 = arith.extui %14 : i1 to i32
    %c0_i32_15 = arith.constant 0 : i32
    %16 = arith.cmpi ne, %15, %c0_i32_15 : i32
    scf.if %16 {
      %c0_16 = arith.constant 0 : index
      %c0_17 = arith.constant 0 : index
      %17 = vector.load %arg11[%c0_16, %c0_17] : memref<2x512xf32, #tpu.memory_space<vmem>>, vector<2x512xf32>
      %c0_18 = arith.constant 0 : index
      %c0_19 = arith.constant 0 : index
      %18 = vector.load %arg4[%c0_18, %c0_19] : memref<1x512xf32, #tpu.memory_space<vmem>>, vector<1x512xf32>
      %19 = vector.broadcast %18 : vector<1x512xf32> to vector<2x512xf32>
      %20 = arith.addf %17, %19 : vector<2x512xf32>
      %21 = arith.negf %20 : vector<2x512xf32>
      %22 = math.exp %21 : vector<2x512xf32>
      %cst_20 = arith.constant 1.000000e+00 : f32
      %23 = vector.broadcast %cst_20 : f32 to vector<2x512xf32>
      %24 = arith.addf %23, %22 : vector<2x512xf32>
      %25 = arith.divf %23, %24 : vector<2x512xf32>
      %c0_21 = arith.constant 0 : index
      %c0_22 = arith.constant 0 : index
      %26 = vector.load %arg5[%c0_21, %c0_22] : memref<8x512xf32, #tpu.memory_space<vmem>>, vector<8x512xf32>
      %cst_23 = arith.constant dense<0.000000e+00> : vector<2x8xf32>
      %27 = tpu.matmul %25, %26, %cst_23 {dimension_numbers = #tpu.dot_dimension_numbers<[1], [1], [0], [0], [0, 0, 1, 0], [], []>} : vector<2x512xf32>, vector<8x512xf32>, vector<2x8xf32> -> vector<2x8xf32>
      %c0_24 = arith.constant 0 : index
      %c0_25 = arith.constant 0 : index
      %28 = vector.load %arg6[%c0_24, %c0_25] : memref<1x8xf32, #tpu.memory_space<vmem>>, vector<1x8xf32>
      %29 = vector.broadcast %28 : vector<1x8xf32> to vector<2x8xf32>
      %30 = arith.addf %27, %29 : vector<2x8xf32>
      %31 = arith.negf %30 : vector<2x8xf32>
      %32 = math.exp %31 : vector<2x8xf32>
      %cst_26 = arith.constant 1.000000e+00 : f32
      %33 = vector.broadcast %cst_26 : f32 to vector<2x8xf32>
      %34 = arith.addf %33, %32 : vector<2x8xf32>
      %35 = arith.divf %33, %34 : vector<2x8xf32>
      %c0_27 = arith.constant 0 : index
      %c0_28 = arith.constant 0 : index
      %36 = vector.load %arg9[%c0_27, %c0_28] : memref<2x8xf32, #tpu.memory_space<vmem>>, vector<2x8xf32>
      tpu.vector_store %arg9[%c0_27, %c0_28], %35 {strides = array<i32>} : memref<2x8xf32, #tpu.memory_space<vmem>>, vector<2x8xf32>,
      %c0_29 = arith.constant 0 : index
      %c0_30 = arith.constant 0 : index
      %37 = vector.load %arg12[%c0_29, %c0_30] : memref<2x16xf32, #tpu.memory_space<vmem>>, vector<2x16xf32>
      %c0_31 = arith.constant 0 : index
      %c0_32 = arith.constant 0 : index
      %38 = vector.load %arg7[%c0_31, %c0_32] : memref<1x16xf32, #tpu.memory_space<vmem>>, vector<1x16xf32>
      %39 = vector.broadcast %38 : vector<1x16xf32> to vector<2x16xf32>
      %40 = arith.addf %37, %39 : vector<2x16xf32>
      %c0_33 = arith.constant 0 : index
      %c0_34 = arith.constant 0 : index
      %41 = vector.load %arg8[%c0_33, %c0_34] : memref<16x4xf32, #tpu.memory_space<vmem>>, vector<16x4xf32>
      %cst_35 = arith.constant 0.000000e+00 : f32
      %42 = vector.broadcast %cst_35 : f32 to vector<1x4xf32>
      %cst_36 = arith.constant 0.000000e+00 : f32
      %43 = vector.broadcast %cst_36 : f32 to vector<1x4xf32>
      %44 = vector.extract_strided_slice %40 {offsets = [0, 0], sizes = [1, 16], strides = [1, 1]} : vector<2x16xf32> to vector<1x16xf32>
      %cst_37 = arith.constant dense<0.000000e+00> : vector<1x16xf32>
      %45 = tpu.matmul %42, %41, %cst_37 {dimension_numbers = #tpu.dot_dimension_numbers<[1], [1], [0], [0], [0, 0, 1, 0], [], []>} : vector<1x4xf32>, vector<16x4xf32>, vector<1x16xf32> -> vector<1x16xf32>
      %46 = arith.addf %44, %45 : vector<1x16xf32>
      %47 = vector.extract_strided_slice %46 {offsets = [0, 0], sizes = [1, 4], strides = [1, 1]} : vector<1x16xf32> to vector<1x4xf32>
      %48 = arith.negf %47 : vector<1x4xf32>
      %49 = math.exp %48 : vector<1x4xf32>
      %cst_38 = arith.constant 1.000000e+00 : f32
      %50 = vector.broadcast %cst_38 : f32 to vector<1x4xf32>
      %51 = arith.addf %50, %49 : vector<1x4xf32>
      %52 = arith.divf %50, %51 : vector<1x4xf32>
      %53 = vector.extract_strided_slice %46 {offsets = [0, 4], sizes = [1, 4], strides = [1, 1]} : vector<1x16xf32> to vector<1x4xf32>
      %54 = arith.negf %53 : vector<1x4xf32>
      %55 = math.exp %54 : vector<1x4xf32>
      %cst_39 = arith.constant 1.000000e+00 : f32
      %56 = vector.broadcast %cst_39 : f32 to vector<1x4xf32>
      %57 = arith.addf %56, %55 : vector<1x4xf32>
      %58 = arith.divf %56, %57 : vector<1x4xf32>
      %59 = vector.extract_strided_slice %46 {offsets = [0, 8], sizes = [1, 4], strides = [1, 1]} : vector<1x16xf32> to vector<1x4xf32>
      %60 = math.tanh %59 : vector<1x4xf32>
      %61 = vector.extract_strided_slice %46 {offsets = [0, 12], sizes = [1, 4], strides = [1, 1]} : vector<1x16xf32> to vector<1x4xf32>
      %62 = arith.negf %61 : vector<1x4xf32>
      %63 = math.exp %62 : vector<1x4xf32>
      %cst_40 = arith.constant 1.000000e+00 : f32
      %64 = vector.broadcast %cst_40 : f32 to vector<1x4xf32>
      %65 = arith.addf %64, %63 : vector<1x4xf32>
      %66 = arith.divf %64, %65 : vector<1x4xf32>
      %67 = arith.mulf %58, %43 : vector<1x4xf32>
      %68 = arith.mulf %52, %60 : vector<1x4xf32>
      %69 = arith.addf %67, %68 : vector<1x4xf32>
      %70 = math.tanh %69 : vector<1x4xf32>
      %71 = arith.mulf %66, %70 : vector<1x4xf32>
      %c0_41 = arith.constant 0 : index
      %c0_42 = arith.constant 0 : index
      %72 = vector.load %arg10[%c0_41, %c0_42] : memref<2x4xf32, #tpu.memory_space<vmem>>, vector<1x4xf32>
      tpu.vector_store %arg10[%c0_41, %c0_42], %71 {strides = array<i32>} : memref<2x4xf32, #tpu.memory_space<vmem>>, vector<1x4xf32>,
      %73 = vector.extract_strided_slice %40 {offsets = [1, 0], sizes = [1, 16], strides = [1, 1]} : vector<2x16xf32> to vector<1x16xf32>
      %cst_43 = arith.constant dense<0.000000e+00> : vector<1x16xf32>
      %74 = tpu.matmul %71, %41, %cst_43 {dimension_numbers = #tpu.dot_dimension_numbers<[1], [1], [0], [0], [0, 0, 1, 0], [], []>} : vector<1x4xf32>, vector<16x4xf32>, vector<1x16xf32> -> vector<1x16xf32>
      %75 = arith.addf %73, %74 : vector<1x16xf32>
      %76 = vector.extract_strided_slice %75 {offsets = [0, 0], sizes = [1, 4], strides = [1, 1]} : vector<1x16xf32> to vector<1x4xf32>
      %77 = arith.negf %76 : vector<1x4xf32>
      %78 = math.exp %77 : vector<1x4xf32>
      %cst_44 = arith.constant 1.000000e+00 : f32
      %79 = vector.broadcast %cst_44 : f32 to vector<1x4xf32>
      %80 = arith.addf %79, %78 : vector<1x4xf32>
      %81 = arith.divf %79, %80 : vector<1x4xf32>
      %82 = vector.extract_strided_slice %75 {offsets = [0, 4], sizes = [1, 4], strides = [1, 1]} : vector<1x16xf32> to vector<1x4xf32>
      %83 = arith.negf %82 : vector<1x4xf32>
      %84 = math.exp %83 : vector<1x4xf32>
      %cst_45 = arith.constant 1.000000e+00 : f32
      %85 = vector.broadcast %cst_45 : f32 to vector<1x4xf32>
      %86 = arith.addf %85, %84 : vector<1x4xf32>
      %87 = arith.divf %85, %86 : vector<1x4xf32>
      %88 = vector.extract_strided_slice %75 {offsets = [0, 8], sizes = [1, 4], strides = [1, 1]} : vector<1x16xf32> to vector<1x4xf32>
      %89 = math.tanh %88 : vector<1x4xf32>
      %90 = vector.extract_strided_slice %75 {offsets = [0, 12], sizes = [1, 4], strides = [1, 1]} : vector<1x16xf32> to vector<1x4xf32>
      %91 = arith.negf %90 : vector<1x4xf32>
      %92 = math.exp %91 : vector<1x4xf32>
      %cst_46 = arith.constant 1.000000e+00 : f32
      %93 = vector.broadcast %cst_46 : f32 to vector<1x4xf32>
      %94 = arith.addf %93, %92 : vector<1x4xf32>
      %95 = arith.divf %93, %94 : vector<1x4xf32>
      %96 = arith.mulf %87, %69 : vector<1x4xf32>
      %97 = arith.mulf %81, %89 : vector<1x4xf32>
      %98 = arith.addf %96, %97 : vector<1x4xf32>
      %99 = math.tanh %98 : vector<1x4xf32>
      %100 = arith.mulf %95, %99 : vector<1x4xf32>
      %c1 = arith.constant 1 : index
      %c0_47 = arith.constant 0 : index
      %101 = vector.load %arg10[%c1, %c0_47] : memref<2x4xf32, #tpu.memory_space<vmem>>, vector<1x4xf32>
      tpu.vector_store %arg10[%c1, %c0_47], %100 {strides = array<i32>} : memref<2x4xf32, #tpu.memory_space<vmem>>, vector<1x4xf32>,
    } else {
    }
    return
  }
  func.func @transform_0(%arg0: i32) -> (i32, i32) {
    %c0_i32 = arith.constant 0 : i32
    %c0_i32_0 = arith.constant 0 : i32
    return %c0_i32, %arg0 : i32, i32
  }
  func.func @transform_1(%arg0: i32) -> (i32, i32) {
    %c0_i32 = arith.constant 0 : i32
    %c0_i32_0 = arith.constant 0 : i32
    return %c0_i32, %arg0 : i32, i32
  }
  func.func @transform_2(%arg0: i32) -> (i32, i32) {
    %c0_i32 = arith.constant 0 : i32
    %c0_i32_0 = arith.constant 0 : i32
    return %c0_i32, %arg0 : i32, i32
  }
  func.func @transform_3(%arg0: i32) -> (i32, i32) {
    %c0_i32 = arith.constant 0 : i32
    %c0_i32_0 = arith.constant 0 : i32
    %c0_i32_1 = arith.constant 0 : i32
    return %c0_i32, %c0_i32_0 : i32, i32
  }
  func.func @transform_4(%arg0: i32) -> (i32, i32) {
    %c0_i32 = arith.constant 0 : i32
    %c0_i32_0 = arith.constant 0 : i32
    %c0_i32_1 = arith.constant 0 : i32
    return %c0_i32, %c0_i32_0 : i32, i32
  }
  func.func @transform_5(%arg0: i32) -> (i32, i32) {
    %c0_i32 = arith.constant 0 : i32
    %c0_i32_0 = arith.constant 0 : i32
    %c0_i32_1 = arith.constant 0 : i32
    return %c0_i32, %c0_i32_0 : i32, i32
  }
  func.func @transform_6(%arg0: i32) -> (i32, i32) {
    %c0_i32 = arith.constant 0 : i32
    %c0_i32_0 = arith.constant 0 : i32
    %c0_i32_1 = arith.constant 0 : i32
    return %c0_i32, %c0_i32_0 : i32, i32
  }
  func.func @transform_7(%arg0: i32) -> (i32, i32) {
    %c0_i32 = arith.constant 0 : i32
    %c0_i32_0 = arith.constant 0 : i32
    %c0_i32_1 = arith.constant 0 : i32
    return %c0_i32, %c0_i32_0 : i32, i32
  }
  func.func @transform_8(%arg0: i32) -> (i32, i32) {
    %c0_i32 = arith.constant 0 : i32
    %c0_i32_0 = arith.constant 0 : i32
    %c0_i32_1 = arith.constant 0 : i32
    return %c0_i32, %c0_i32_0 : i32, i32
  }
  func.func @transform_9(%arg0: i32) -> (i32, i32) {
    %c0_i32 = arith.constant 0 : i32
    %c0_i32_0 = arith.constant 0 : i32
    %c0_i32_1 = arith.constant 0 : i32
    return %c0_i32, %c0_i32_0 : i32, i32
  }
}

</mosaic_0001>

<llo_original>
// kernel: drqnv1_forward.3
$region0: #{drqnv1_forward.3}
  #allocation0 [shape = 'u32[]', space=smem, size = 0x4, offset = 0x4, fixed_abs, tag = 'smem constant byte address 0x4 - core index']
  #allocation1 [shape = 'u32[72,128]{1,0:T(1,128)}', space=vmem, size = 0x9000, scoped, tag = 'internal scratch']
  %s0 = inlined_call_operand.vmem [shape: f32[32,192], index: 0, kind: input, shape index: {}]
  %s1 = inlined_call_operand.vmem [shape: f32[192,720], index: 1, kind: input, shape index: {}]
  %s2 = inlined_call_operand.vmem [shape: f32[32,1], index: 2, kind: input, shape index: {}]
  %s3 = inlined_call_operand.vmem [shape: f32[32,720], index: 3, kind: output, shape index: {}]
  %s4 = sld [smem:[#allocation0]]
  $region22: #{drqnv1_forward.3} parent=0
    _
  %s6 = ssub.s32 1, %s4
  %s7 = scalar_select 0, %s6, %s4
  // Predicated region
  $region2: #{drqnv1_forward.3} parent=0 // pred_check
    _
  $region3: #{drqnv1_forward.3} parent=0 // pred_check_branch
    %9 = sbr.rel (0) target = $region5
  $region4: #{drqnv1_forward.3} parent=0 // pred_region
    _
  $region5: #{drqnv1_forward.3} parent=0 // pred_fallthru
    _
  // Predicated region
  $region6: #{drqnv1_forward.3} parent=0 // pred_check
    _
  $region7: #{drqnv1_forward.3} parent=0 // pred_check_branch
    %11 = sbr.rel (0) target = $region9
  $region8: #{drqnv1_forward.3} parent=0 // pred_region
    _
  $region9: #{drqnv1_forward.3} parent=0 // pred_fallthru
    _
  // Predicated region
  $region10: #{drqnv1_forward.3} parent=0 // pred_check
    _
  $region11: #{drqnv1_forward.3} parent=0 // pred_check_branch
    %13 = sbr.rel (0) target = $region13
  $region12: #{drqnv1_forward.3} parent=0 // pred_region
    _
  $region13: #{drqnv1_forward.3} parent=0 // pred_fallthru
    _
  %v14 = vld [vmem:[%s0] sm:$0xff]
  %v15 = vld [vmem:[%s0 + $0x8] sm:$0xff]
  %v16 = vld [vmem:[%s0 + $0x10] sm:$0xff]
  %v17 = vld [vmem:[%s0 + $0x18] sm:$0xff]
  %v18 = vld [vmem:[%s0 + $0x20] sm:$0xff]
  %v19 = vld [vmem:[%s0 + $0x28] sm:$0xff]
  %v20 = vld [vmem:[%s0 + $0x30] sm:$0xff]
  %v21 = vld [vmem:[%s0 + $0x38] sm:$0xff]
  %v22 = vld [vmem:[%s1] sm:$0xff]
  %v23 = vld [vmem:[%s1 + $0x8] sm:$0xff]
  %v24 = vld [vmem:[%s1 + $0x10] sm:$0xff]
  %v25 = vld [vmem:[%s1 + $0x18] sm:$0xff]
  %v26 = vld [vmem:[%s1 + $0x20] sm:$0xff]
  %v27 = vld [vmem:[%s1 + $0x28] sm:$0xff]
  %v28 = vld [vmem:[%s1 + $0x30] sm:$0xff]
  %v29 = vld [vmem:[%s1 + $0x38] sm:$0xff]
  %v30 = vld [vmem:[%s1 + $0x40] sm:$0xff]
  %v31 = vld [vmem:[%s1 + $0x48] sm:$0xff]
  %v32 = vld [vmem:[%s1 + $0x50] sm:$0xff]
  %v33 = vld [vmem:[%s1 + $0x58] sm:$0xff]
  %v34 = vld [vmem:[%s1 + $0x60] sm:$0xff]
  %v35 = vld [vmem:[%s1 + $0x68] sm:$0xff]
  %v36 = vld [vmem:[%s1 + $0x70] sm:$0xff]
  %v37 = vld [vmem:[%s1 + $0x78] sm:$0xff]
  %v38 = vld [vmem:[%s1 + $0x80] sm:$0xff]
  %v39 = vld [vmem:[%s1 + $0x88] sm:$0xff]
  %v40 = vld [vmem:[%s1 + $0x90] sm:$0xff]
  %v41 = vld [vmem:[%s1 + $0x98] sm:$0xff]
  %v42 = vld [vmem:[%s1 + $0xa0] sm:$0xff]
  %v43 = vld [vmem:[%s1 + $0xa8] sm:$0xff]
  %v44 = vld [vmem:[%s1 + $0xb0] sm:$0xff]
  %v45 = vld [vmem:[%s1 + $0xb8] sm:$0xff]
  %v46 = vld [vmem:[%s1 + $0xc0] sm:$0xff]
  %v47 = vld [vmem:[%s1 + $0xc8] sm:$0xff]
  %v48 = vld [vmem:[%s1 + $0xd0] sm:$0xff]
  %v49 = vld [vmem:[%s1 + $0xd8] sm:$0xff]
  %v50 = vld [vmem:[%s1 + $0xe0] sm:$0xff]
  %v51 = vld [vmem:[%s1 + $0xe8] sm:$0xff]
  %v52 = vld [vmem:[%s1 + $0xf0] sm:$0xff]
  %v53 = vld [vmem:[%s1 + $0xf8] sm:$0xff]
  %v54 = vld [vmem:[%s1 + $0x100] sm:$0xff]
  %v55 = vld [vmem:[%s1 + $0x108] sm:$0xff]
  %v56 = vld [vmem:[%s1 + $0x110] sm:$0xff]
  %v57 = vld [vmem:[%s1 + $0x118] sm:$0xff]
  %v58 = vld [vmem:[%s1 + $0x120] sm:$0xff]
  %v59 = vld [vmem:[%s1 + $0x128] sm:$0xff]
  %v60 = vld [vmem:[%s1 + $0x130] sm:$0xff]
  %v61 = vld [vmem:[%s1 + $0x138] sm:$0xff]
  %v62 = vld [vmem:[%s1 + $0x140] sm:$0xff]
  %v63 = vld [vmem:[%s1 + $0x148] sm:$0xff]
  %v64 = vld [vmem:[%s1 + $0x150] sm:$0xff]
  %v65 = vld [vmem:[%s1 + $0x158] sm:$0xff]
  %v66 = vld [vmem:[%s1 + $0x160] sm:$0xff]
  %v67 = vld [vmem:[%s1 + $0x168] sm:$0xff]
  %v68 = vld [vmem:[%s1 + $0x170] sm:$0xff]
  %v69 = vld [vmem:[%s1 + $0x178] sm:$0xff]
  %v70 = vld [vmem:[%s1 + $0x180] sm:$0xff]
  %v71 = vld [vmem:[%s1 + $0x188] sm:$0xff]
  %v72 = vld [vmem:[%s1 + $0x190] sm:$0xff]
  %v73 = vld [vmem:[%s1 + $0x198] sm:$0xff]
  %v74 = vld [vmem:[%s1 + $0x1a0] sm:$0xff]
  %v75 = vld [vmem:[%s1 + $0x1a8] sm:$0xff]
  %v76 = vld [vmem:[%s1 + $0x1b0] sm:$0xff]
  %v77 = vld [vmem:[%s1 + $0x1b8] sm:$0xff]
  %v78 = vld [vmem:[%s1 + $0x1c0] sm:$0xff]
  %v79 = vld [vmem:[%s1 + $0x1c8] sm:$0xff]
  %v80 = vld [vmem:[%s1 + $0x1d0] sm:$0xff]
  %v81 = vld [vmem:[%s1 + $0x1d8] sm:$0xff]
  %v82 = vld [vmem:[%s1 + $0x1e0] sm:$0xff]
  %v83 = vld [vmem:[%s1 + $0x1e8] sm:$0xff]
  %v84 = vld [vmem:[%s1 + $0x1f0] sm:$0xff]
  %v85 = vld [vmem:[%s1 + $0x1f8] sm:$0xff]
  %v86 = vld [vmem:[%s1 + $0x200] sm:$0xff]
  %v87 = vld [vmem:[%s1 + $0x208] sm:$0xff]
  %v88 = vld [vmem:[%s1 + $0x210] sm:$0xff]
  %v89 = vld [vmem:[%s1 + $0x218] sm:$0xff]
  %v90 = vld [vmem:[%s1 + $0x220] sm:$0xff]
  %v91 = vld [vmem:[%s1 + $0x228] sm:$0xff]
  %v92 = vld [vmem:[%s1 + $0x230] sm:$0xff]
  %v93 = vld [vmem:[%s1 + $0x238] sm:$0xff]
  %v94 = vld [vmem:[%s1 + $0x240] sm:$0xff]
  %v95 = vld [vmem:[%s1 + $0x248] sm:$0xff]
  %v96 = vld [vmem:[%s1 + $0x250] sm:$0xff]
  %v97 = vld [vmem:[%s1 + $0x258] sm:$0xff]
  %v98 = vld [vmem:[%s1 + $0x260] sm:$0xff]
  %v99 = vld [vmem:[%s1 + $0x268] sm:$0xff]
  %v100 = vld [vmem:[%s1 + $0x270] sm:$0xff]
  %v101 = vld [vmem:[%s1 + $0x278] sm:$0xff]
  %v102 = vld [vmem:[%s1 + $0x280] sm:$0xff]
  %v103 = vld [vmem:[%s1 + $0x288] sm:$0xff]
  %v104 = vld [vmem:[%s1 + $0x290] sm:$0xff]
  %v105 = vld [vmem:[%s1 + $0x298] sm:$0xff]
  %v106 = vld [vmem:[%s1 + $0x2a0] sm:$0xff]
  %v107 = vld [vmem:[%s1 + $0x2a8] sm:$0xff]
  %v108 = vld [vmem:[%s1 + $0x2b0] sm:$0xff]
  %v109 = vld [vmem:[%s1 + $0x2b8] sm:$0xff]
  %v110 = vld [vmem:[%s1 + $0x2c0] sm:$0xff]
  %v111 = vld [vmem:[%s1 + $0x2c8] sm:$0xff]
  %v112 = vld [vmem:[%s1 + $0x2d0] sm:$0xff]
  %v113 = vld [vmem:[%s1 + $0x2d8] sm:$0xff]
  %v114 = vld [vmem:[%s1 + $0x2e0] sm:$0xff]
  %v115 = vld [vmem:[%s1 + $0x2e8] sm:$0xff]
  %v116 = vld [vmem:[%s1 + $0x2f0] sm:$0xff]
  %v117 = vld [vmem:[%s1 + $0x2f8] sm:$0xff]
  %v118 = vld [vmem:[%s1 + $0x300] sm:$0xff]
  %v119 = vld [vmem:[%s1 + $0x308] sm:$0xff]
  %v120 = vld [vmem:[%s1 + $0x310] sm:$0xff]
  %v121 = vld [vmem:[%s1 + $0x318] sm:$0xff]
  %v122 = vld [vmem:[%s1 + $0x320] sm:$0xff]
  %v123 = vld [vmem:[%s1 + $0x328] sm:$0xff]
  %v124 = vld [vmem:[%s1 + $0x330] sm:$0xff]
  %v125 = vld [vmem:[%s1 + $0x338] sm:$0xff]
  %v126 = vld [vmem:[%s1 + $0x340] sm:$0xff]
  %v127 = vld [vmem:[%s1 + $0x348] sm:$0xff]
  %v128 = vld [vmem:[%s1 + $0x350] sm:$0xff]
  %v129 = vld [vmem:[%s1 + $0x358] sm:$0xff]
  %v130 = vld [vmem:[%s1 + $0x360] sm:$0xff]
  %v131 = vld [vmem:[%s1 + $0x368] sm:$0xff]
  %v132 = vld [vmem:[%s1 + $0x370] sm:$0xff]
  %v133 = vld [vmem:[%s1 + $0x378] sm:$0xff]
  %v134 = vld [vmem:[%s1 + $0x380] sm:$0xff]
  %v135 = vld [vmem:[%s1 + $0x388] sm:$0xff]
  %v136 = vld [vmem:[%s1 + $0x390] sm:$0xff]
  %v137 = vld [vmem:[%s1 + $0x398] sm:$0xff]
  %v138 = vld [vmem:[%s1 + $0x3a0] sm:$0xff]
  %v139 = vld [vmem:[%s1 + $0x3a8] sm:$0xff]
  %v140 = vld [vmem:[%s1 + $0x3b0] sm:$0xff]
  %v141 = vld [vmem:[%s1 + $0x3b8] sm:$0xff]
  %v142 = vld [vmem:[%s1 + $0x3c0] sm:$0xff]
  %v143 = vld [vmem:[%s1 + $0x3c8] sm:$0xff]
  %v144 = vld [vmem:[%s1 + $0x3d0] sm:$0xff]
  %v145 = vld [vmem:[%s1 + $0x3d8] sm:$0xff]
  %v146 = vld [vmem:[%s1 + $0x3e0] sm:$0xff]
  %v147 = vld [vmem:[%s1 + $0x3e8] sm:$0xff]
  %v148 = vld [vmem:[%s1 + $0x3f0] sm:$0xff]
  %v149 = vld [vmem:[%s1 + $0x3f8] sm:$0xff]
  %v150 = vld [vmem:[%s1 + $0x400] sm:$0xff]
  %v151 = vld [vmem:[%s1 + $0x408] sm:$0xff]
  %v152 = vld [vmem:[%s1 + $0x410] sm:$0xff]
  %v153 = vld [vmem:[%s1 + $0x418] sm:$0xff]
  %v154 = vld [vmem:[%s1 + $0x420] sm:$0xff]
  %v155 = vld [vmem:[%s1 + $0x428] sm:$0xff]
  %v156 = vld [vmem:[%s1 + $0x430] sm:$0xff]
  %v157 = vld [vmem:[%s1 + $0x438] sm:$0xff]
  %v158 = vld [vmem:[%s1 + $0x440] sm:$0xff]
  %v159 = vld [vmem:[%s1 + $0x448] sm:$0xff]
  %v160 = vld [vmem:[%s1 + $0x450] sm:$0xff]
  %v161 = vld [vmem:[%s1 + $0x458] sm:$0xff]
  %v162 = vld [vmem:[%s1 + $0x460] sm:$0xff]
  %v163 = vld [vmem:[%s1 + $0x468] sm:$0xff]
  %v164 = vld [vmem:[%s1 + $0x470] sm:$0xff]
  %v165 = vld [vmem:[%s1 + $0x478] sm:$0xff]
  %v166 = vld [vmem:[%s2] sm:$0xff]
  %v167 = vld [vmem:[%s2 + $0x8] sm:$0xff]
  %v168 = vld [vmem:[%s2 + $0x10] sm:$0xff]
  %v169 = vld [vmem:[%s2 + $0x18] sm:$0xff]
  %171 = vset.pattern.permute.xlu0 0
  %172 = vperm.xlu0 %171, %v166
  %v173 = vpop.permute.xlu0 %172
  %176 = vset.pattern.permute.xlu0 0
  %177 = vperm.xlu0 %176, %v167
  %v178 = vpop.permute.xlu0 %177
  %181 = vset.pattern.permute.xlu0 0
  %182 = vperm.xlu0 %181, %v168
  %v183 = vpop.permute.xlu0 %182
  %186 = vset.pattern.permute.xlu0 0
  %187 = vperm.xlu0 %186, %v169
  %v188 = vpop.permute.xlu0 %187
  %vm190 = vcmask 523264
  %v192 = vsel %vm190, %v15, 0
  %v195 = vsel %vm190, %v17, 0
  %v198 = vsel %vm190, %v19, 0
  %v201 = vsel %vm190, %v21, 0
  %203 = vmatpush.msra.mxu0 %v112
  %204 = vmatpush.msra.mxu0 %v106
  %205 = vmatpush.msra.mxu0 %v100
  %206 = vmatpush.msra.mxu0 %v94
  %207 = vmatpush.msra.mxu0 %v88
  %208 = vmatpush.msra.mxu0 %v82
  %209 = vmatpush.msra.mxu0 %v76
  %210 = vmatpush.msra.mxu0 %v70
  %211 = vmatpush.msra.mxu0 %v64
  %212 = vmatpush.msra.mxu0 %v58
  %213 = vmatpush.msra.mxu0 %v52
  %214 = vmatpush.msra.mxu0 %v46
  %215 = vmatpush.msra.mxu0 %v40
  %216 = vmatpush.msra.mxu0 %v34
  %217 = vmatpush.msra.mxu0 %v28
  %218 = vmatpush.msra.mxu0 %v22
  %219 = vmatmul.f32.gmra.mxu0 %v14
  %v220 = vpop.f32.mrf.mxu0
  %v221 = vadd.f32 %v173, %v220
  %222 = vmatmul.f32.gmra.mxu0 %v16
  %v223 = vpop.f32.mrf.mxu0
  %v224 = vadd.f32 %v178, %v223
  %225 = vmatmul.f32.gmra.mxu0 %v18
  %v226 = vpop.f32.mrf.mxu0
  %v227 = vadd.f32 %v183, %v226
  %228 = vmatmul.f32.gmra.mxu0 %v20
  %v229 = vpop.f32.mrf.mxu0
  %v230 = vadd.f32 %v188, %v229
  %231 = vdwg.mxu0
  %232 = vmatpush.msra.mxu0 0.0
  %233 = vmatpush.msra.mxu0 0.0
  %234 = vmatpush.msra.mxu0 0.0
  %235 = vmatpush.msra.mxu0 0.0
  %236 = vmatpush.msra.mxu0 0.0
  %237 = vmatpush.msra.mxu0 0.0
  %238 = vmatpush.msra.mxu0 0.0
  %239 = vmatpush.msra.mxu0 0.0
  %240 = vmatpush.msra.mxu0 %v160
  %241 = vmatpush.msra.mxu0 %v154
  %242 = vmatpush.msra.mxu0 %v148
  %243 = vmatpush.msra.mxu0 %v142
  %244 = vmatpush.msra.mxu0 %v136
  %245 = vmatpush.msra.mxu0 %v130
  %246 = vmatpush.msra.mxu0 %v124
  %247 = vmatpush.msra.mxu0 %v118
  %248 = vmatmul.f32.gmra.mxu0 %v192
  %v249 = vpop.f32.mrf.mxu0
  %v250 = vadd.f32 %v221, %v249
  %251 = vmatmul.f32.gmra.mxu0 %v195
  %v252 = vpop.f32.mrf.mxu0
  %v253 = vadd.f32 %v224, %v252
  %254 = vmatmul.f32.gmra.mxu0 %v198
  %v255 = vpop.f32.mrf.mxu0
  %v256 = vadd.f32 %v227, %v255
  %257 = vmatmul.f32.gmra.mxu0 %v201
  %v258 = vpop.f32.mrf.mxu0
  %v259 = vadd.f32 %v230, %v258
  %260 = vdwg.mxu0
  %261 = vmatpush.msra.mxu0 %v113
  %262 = vmatpush.msra.mxu0 %v107
  %263 = vmatpush.msra.mxu0 %v101
  %264 = vmatpush.msra.mxu0 %v95
  %265 = vmatpush.msra.mxu0 %v89
  %266 = vmatpush.msra.mxu0 %v83
  %267 = vmatpush.msra.mxu0 %v77
  %268 = vmatpush.msra.mxu0 %v71
  %269 = vmatpush.msra.mxu0 %v65
  %270 = vmatpush.msra.mxu0 %v59
  %271 = vmatpush.msra.mxu0 %v53
  %272 = vmatpush.msra.mxu0 %v47
  %273 = vmatpush.msra.mxu0 %v41
  %274 = vmatpush.msra.mxu0 %v35
  %275 = vmatpush.msra.mxu0 %v29
  %276 = vmatpush.msra.mxu0 %v23
  %277 = vmatmul.f32.gmra.mxu0 %v14
  %v278 = vpop.f32.mrf.mxu0
  %v279 = vadd.f32 %v173, %v278
  %280 = vmatmul.f32.gmra.mxu0 %v16
  %v281 = vpop.f32.mrf.mxu0
  %v282 = vadd.f32 %v178, %v281
  %283 = vmatmul.f32.gmra.mxu0 %v18
  %v284 = vpop.f32.mrf.mxu0
  %v285 = vadd.f32 %v183, %v284
  %286 = vmatmul.f32.gmra.mxu0 %v20
  %v287 = vpop.f32.mrf.mxu0
  %v288 = vadd.f32 %v188, %v287
  %289 = vdwg.mxu0
  %290 = vmatpush.msra.mxu0 0.0
  %291 = vmatpush.msra.mxu0 0.0
  %292 = vmatpush.msra.mxu0 0.0
  %293 = vmatpush.msra.mxu0 0.0
  %294 = vmatpush.msra.mxu0 0.0
  %295 = vmatpush.msra.mxu0 0.0
  %296 = vmatpush.msra.mxu0 0.0
  %297 = vmatpush.msra.mxu0 0.0
  %298 = vmatpush.msra.mxu0 %v161
  %299 = vmatpush.msra.mxu0 %v155
  %300 = vmatpush.msra.mxu0 %v149
  %301 = vmatpush.msra.mxu0 %v143
  %302 = vmatpush.msra.mxu0 %v137
  %303 = vmatpush.msra.mxu0 %v131
  %304 = vmatpush.msra.mxu0 %v125
  %305 = vmatpush.msra.mxu0 %v119
  %306 = vmatmul.f32.gmra.mxu0 %v192
  %v307 = vpop.f32.mrf.mxu0
  %v308 = vadd.f32 %v279, %v307
  %309 = vmatmul.f32.gmra.mxu0 %v195
  %v310 = vpop.f32.mrf.mxu0
  %v311 = vadd.f32 %v282, %v310
  %312 = vmatmul.f32.gmra.mxu0 %v198
  %v313 = vpop.f32.mrf.mxu0
  %v314 = vadd.f32 %v285, %v313
  %315 = vmatmul.f32.gmra.mxu0 %v201
  %v316 = vpop.f32.mrf.mxu0
  %v317 = vadd.f32 %v288, %v316
  %318 = vdwg.mxu0
  %319 = vmatpush.msra.mxu0 %v114
  %320 = vmatpush.msra.mxu0 %v108
  %321 = vmatpush.msra.mxu0 %v102
  %322 = vmatpush.msra.mxu0 %v96
  %323 = vmatpush.msra.mxu0 %v90
  %324 = vmatpush.msra.mxu0 %v84
  %325 = vmatpush.msra.mxu0 %v78
  %326 = vmatpush.msra.mxu0 %v72
  %327 = vmatpush.msra.mxu0 %v66
  %328 = vmatpush.msra.mxu0 %v60
  %329 = vmatpush.msra.mxu0 %v54
  %330 = vmatpush.msra.mxu0 %v48
  %331 = vmatpush.msra.mxu0 %v42
  %332 = vmatpush.msra.mxu0 %v36
  %333 = vmatpush.msra.mxu0 %v30
  %334 = vmatpush.msra.mxu0 %v24
  %335 = vmatmul.f32.gmra.mxu0 %v14
  %v336 = vpop.f32.mrf.mxu0
  %v337 = vadd.f32 %v173, %v336
  %338 = vmatmul.f32.gmra.mxu0 %v16
  %v339 = vpop.f32.mrf.mxu0
  %v340 = vadd.f32 %v178, %v339
  %341 = vmatmul.f32.gmra.mxu0 %v18
  %v342 = vpop.f32.mrf.mxu0
  %v343 = vadd.f32 %v183, %v342
  %344 = vmatmul.f32.gmra.mxu0 %v20
  %v345 = vpop.f32.mrf.mxu0
  %v346 = vadd.f32 %v188, %v345
  %347 = vdwg.mxu0
  %348 = vmatpush.msra.mxu0 0.0
  %349 = vmatpush.msra.mxu0 0.0
  %350 = vmatpush.msra.mxu0 0.0
  %351 = vmatpush.msra.mxu0 0.0
  %352 = vmatpush.msra.mxu0 0.0
  %353 = vmatpush.msra.mxu0 0.0
  %354 = vmatpush.msra.mxu0 0.0
  %355 = vmatpush.msra.mxu0 0.0
  %356 = vmatpush.msra.mxu0 %v162
  %357 = vmatpush.msra.mxu0 %v156
  %358 = vmatpush.msra.mxu0 %v150
  %359 = vmatpush.msra.mxu0 %v144
  %360 = vmatpush.msra.mxu0 %v138
  %361 = vmatpush.msra.mxu0 %v132
  %362 = vmatpush.msra.mxu0 %v126
  %363 = vmatpush.msra.mxu0 %v120
  %364 = vmatmul.f32.gmra.mxu0 %v192
  %v365 = vpop.f32.mrf.mxu0
  %v366 = vadd.f32 %v337, %v365
  %367 = vmatmul.f32.gmra.mxu0 %v195
  %v368 = vpop.f32.mrf.mxu0
  %v369 = vadd.f32 %v340, %v368
  %370 = vmatmul.f32.gmra.mxu0 %v198
  %v371 = vpop.f32.mrf.mxu0
  %v372 = vadd.f32 %v343, %v371
  %373 = vmatmul.f32.gmra.mxu0 %v201
  %v374 = vpop.f32.mrf.mxu0
  %v375 = vadd.f32 %v346, %v374
  %376 = vdwg.mxu0
  %377 = vmatpush.msra.mxu0 %v115
  %378 = vmatpush.msra.mxu0 %v109
  %379 = vmatpush.msra.mxu0 %v103
  %380 = vmatpush.msra.mxu0 %v97
  %381 = vmatpush.msra.mxu0 %v91
  %382 = vmatpush.msra.mxu0 %v85
  %383 = vmatpush.msra.mxu0 %v79
  %384 = vmatpush.msra.mxu0 %v73
  %385 = vmatpush.msra.mxu0 %v67
  %386 = vmatpush.msra.mxu0 %v61
  %387 = vmatpush.msra.mxu0 %v55
  %388 = vmatpush.msra.mxu0 %v49
  %389 = vmatpush.msra.mxu0 %v43
  %390 = vmatpush.msra.mxu0 %v37
  %391 = vmatpush.msra.mxu0 %v31
  %392 = vmatpush.msra.mxu0 %v25
  %393 = vmatmul.f32.gmra.mxu0 %v14
  %v394 = vpop.f32.mrf.mxu0
  %v395 = vadd.f32 %v173, %v394
  %396 = vmatmul.f32.gmra.mxu0 %v16
  %v397 = vpop.f32.mrf.mxu0
  %v398 = vadd.f32 %v178, %v397
  %399 = vmatmul.f32.gmra.mxu0 %v18
  %v400 = vpop.f32.mrf.mxu0
  %v401 = vadd.f32 %v183, %v400
  %402 = vmatmul.f32.gmra.mxu0 %v20
  %v403 = vpop.f32.mrf.mxu0
  %v404 = vadd.f32 %v188, %v403
  %405 = vdwg.mxu0
  %406 = vmatpush.msra.mxu0 0.0
  %407 = vmatpush.msra.mxu0 0.0
  %408 = vmatpush.msra.mxu0 0.0
  %409 = vmatpush.msra.mxu0 0.0
  %410 = vmatpush.msra.mxu0 0.0
  %411 = vmatpush.msra.mxu0 0.0
  %412 = vmatpush.msra.mxu0 0.0
  %413 = vmatpush.msra.mxu0 0.0
  %414 = vmatpush.msra.mxu0 %v163
  %415 = vmatpush.msra.mxu0 %v157
  %416 = vmatpush.msra.mxu0 %v151
  %417 = vmatpush.msra.mxu0 %v145
  %418 = vmatpush.msra.mxu0 %v139
  %419 = vmatpush.msra.mxu0 %v133
  %420 = vmatpush.msra.mxu0 %v127
  %421 = vmatpush.msra.mxu0 %v121
  %422 = vmatmul.f32.gmra.mxu0 %v192
  %v423 = vpop.f32.mrf.mxu0
  %v424 = vadd.f32 %v395, %v423
  %425 = vmatmul.f32.gmra.mxu0 %v195
  %v426 = vpop.f32.mrf.mxu0
  %v427 = vadd.f32 %v398, %v426
  %428 = vmatmul.f32.gmra.mxu0 %v198
  %v429 = vpop.f32.mrf.mxu0
  %v430 = vadd.f32 %v401, %v429
  %431 = vmatmul.f32.gmra.mxu0 %v201
  %v432 = vpop.f32.mrf.mxu0
  %v433 = vadd.f32 %v404, %v432
  %434 = vdwg.mxu0
  %435 = vmatpush.msra.mxu0 %v116
  %436 = vmatpush.msra.mxu0 %v110
  %437 = vmatpush.msra.mxu0 %v104
  %438 = vmatpush.msra.mxu0 %v98
  %439 = vmatpush.msra.mxu0 %v92
  %440 = vmatpush.msra.mxu0 %v86
  %441 = vmatpush.msra.mxu0 %v80
  %442 = vmatpush.msra.mxu0 %v74
  %443 = vmatpush.msra.mxu0 %v68
  %444 = vmatpush.msra.mxu0 %v62
  %445 = vmatpush.msra.mxu0 %v56
  %446 = vmatpush.msra.mxu0 %v50
  %447 = vmatpush.msra.mxu0 %v44
  %448 = vmatpush.msra.mxu0 %v38
  %449 = vmatpush.msra.mxu0 %v32
  %450 = vmatpush.msra.mxu0 %v26
  %451 = vmatmul.f32.gmra.mxu0 %v14
  %v452 = vpop.f32.mrf.mxu0
  %v453 = vadd.f32 %v173, %v452
  %454 = vmatmul.f32.gmra.mxu0 %v16
  %v455 = vpop.f32.mrf.mxu0
  %v456 = vadd.f32 %v178, %v455
  %457 = vmatmul.f32.gmra.mxu0 %v18
  %v458 = vpop.f32.mrf.mxu0
  %v459 = vadd.f32 %v183, %v458
  %460 = vmatmul.f32.gmra.mxu0 %v20
  %v461 = vpop.f32.mrf.mxu0
  %v462 = vadd.f32 %v188, %v461
  %463 = vdwg.mxu0
  %464 = vmatpush.msra.mxu0 0.0
  %465 = vmatpush.msra.mxu0 0.0
  %466 = vmatpush.msra.mxu0 0.0
  %467 = vmatpush.msra.mxu0 0.0
  %468 = vmatpush.msra.mxu0 0.0
  %469 = vmatpush.msra.mxu0 0.0
  %470 = vmatpush.msra.mxu0 0.0
  %471 = vmatpush.msra.mxu0 0.0
  %472 = vmatpush.msra.mxu0 %v164
  %473 = vmatpush.msra.mxu0 %v158
  %474 = vmatpush.msra.mxu0 %v152
  %475 = vmatpush.msra.mxu0 %v146
  %476 = vmatpush.msra.mxu0 %v140
  %477 = vmatpush.msra.mxu0 %v134
  %478 = vmatpush.msra.mxu0 %v128
  %479 = vmatpush.msra.mxu0 %v122
  %480 = vmatmul.f32.gmra.mxu0 %v192
  %v481 = vpop.f32.mrf.mxu0
  %v482 = vadd.f32 %v453, %v481
  %483 = vmatmul.f32.gmra.mxu0 %v195
  %v484 = vpop.f32.mrf.mxu0
  %v485 = vadd.f32 %v456, %v484
  %486 = vmatmul.f32.gmra.mxu0 %v198
  %v487 = vpop.f32.mrf.mxu0
  %v488 = vadd.f32 %v459, %v487
  %489 = vmatmul.f32.gmra.mxu0 %v201
  %v490 = vpop.f32.mrf.mxu0
  %v491 = vadd.f32 %v462, %v490
  %492 = vdwg.mxu0
  %493 = vmatpush.msra.mxu0 %v117
  %494 = vmatpush.msra.mxu0 %v111
  %495 = vmatpush.msra.mxu0 %v105
  %496 = vmatpush.msra.mxu0 %v99
  %497 = vmatpush.msra.mxu0 %v93
  %498 = vmatpush.msra.mxu0 %v87
  %499 = vmatpush.msra.mxu0 %v81
  %500 = vmatpush.msra.mxu0 %v75
  %501 = vmatpush.msra.mxu0 %v69
  %502 = vmatpush.msra.mxu0 %v63
  %503 = vmatpush.msra.mxu0 %v57
  %504 = vmatpush.msra.mxu0 %v51
  %505 = vmatpush.msra.mxu0 %v45
  %506 = vmatpush.msra.mxu0 %v39
  %507 = vmatpush.msra.mxu0 %v33
  %508 = vmatpush.msra.mxu0 %v27
  %509 = vmatmul.f32.gmra.mxu0 %v14
  %v510 = vpop.f32.mrf.mxu0
  %v511 = vadd.f32 %v173, %v510
  %512 = vmatmul.f32.gmra.mxu0 %v16
  %v513 = vpop.f32.mrf.mxu0
  %v514 = vadd.f32 %v178, %v513
  %515 = vmatmul.f32.gmra.mxu0 %v18
  %v516 = vpop.f32.mrf.mxu0
  %v517 = vadd.f32 %v183, %v516
  %518 = vmatmul.f32.gmra.mxu0 %v20
  %v519 = vpop.f32.mrf.mxu0
  %v520 = vadd.f32 %v188, %v519
  %521 = vdwg.mxu0
  %522 = vmatpush.msra.mxu0 0.0
  %523 = vmatpush.msra.mxu0 0.0
  %524 = vmatpush.msra.mxu0 0.0
  %525 = vmatpush.msra.mxu0 0.0
  %526 = vmatpush.msra.mxu0 0.0
  %527 = vmatpush.msra.mxu0 0.0
  %528 = vmatpush.msra.mxu0 0.0
  %529 = vmatpush.msra.mxu0 0.0
  %530 = vmatpush.msra.mxu0 %v165
  %531 = vmatpush.msra.mxu0 %v159
  %532 = vmatpush.msra.mxu0 %v153
  %533 = vmatpush.msra.mxu0 %v147
  %534 = vmatpush.msra.mxu0 %v141
  %535 = vmatpush.msra.mxu0 %v135
  %536 = vmatpush.msra.mxu0 %v129
  %537 = vmatpush.msra.mxu0 %v123
  %538 = vmatmul.f32.gmra.mxu0 %v192
  %v539 = vpop.f32.mrf.mxu0
  %v540 = vadd.f32 %v511, %v539
  %541 = vmatmul.f32.gmra.mxu0 %v195
  %v542 = vpop.f32.mrf.mxu0
  %v543 = vadd.f32 %v514, %v542
  %544 = vmatmul.f32.gmra.mxu0 %v198
  %v545 = vpop.f32.mrf.mxu0
  %v546 = vadd.f32 %v517, %v545
  %547 = vmatmul.f32.gmra.mxu0 %v201
  %v548 = vpop.f32.mrf.mxu0
  %v549 = vadd.f32 %v520, %v548
  %550 = vdwg.mxu0
  %551 = vst [vmem:[%s3] sm:$0xff] %v250
  %552 = vst [vmem:[%s3 + $0x8] sm:$0xff] %v308
  %553 = vst [vmem:[%s3 + $0x10] sm:$0xff] %v366
  %554 = vst [vmem:[%s3 + $0x18] sm:$0xff] %v424
  %555 = vst [vmem:[%s3 + $0x20] sm:$0xff] %v482
  %vm556 = vcmask 654336
  %557 = vst.msk [vmem:[%s3 + $0x28] sm:$0xff] %vm556, %v540
  %558 = vst [vmem:[%s3 + $0x30] sm:$0xff] %v253
  %559 = vst [vmem:[%s3 + $0x38] sm:$0xff] %v311
  %560 = vst [vmem:[%s3 + $0x40] sm:$0xff] %v369
  %561 = vst [vmem:[%s3 + $0x48] sm:$0xff] %v427
  %562 = vst [vmem:[%s3 + $0x50] sm:$0xff] %v485
  %563 = vst.msk [vmem:[%s3 + $0x58] sm:$0xff] %vm556, %v543
  %564 = vst [vmem:[%s3 + $0x60] sm:$0xff] %v256
  %565 = vst [vmem:[%s3 + $0x68] sm:$0xff] %v314
  %566 = vst [vmem:[%s3 + $0x70] sm:$0xff] %v372
  %567 = vst [vmem:[%s3 + $0x78] sm:$0xff] %v430
  %568 = vst [vmem:[%s3 + $0x80] sm:$0xff] %v488
  %569 = vst.msk [vmem:[%s3 + $0x88] sm:$0xff] %vm556, %v546
  %570 = vst [vmem:[%s3 + $0x90] sm:$0xff] %v259
  %571 = vst [vmem:[%s3 + $0x98] sm:$0xff] %v317
  %572 = vst [vmem:[%s3 + $0xa0] sm:$0xff] %v375
  %573 = vst [vmem:[%s3 + $0xa8] sm:$0xff] %v433
  %574 = vst [vmem:[%s3 + $0xb0] sm:$0xff] %v491
  %575 = vst.msk [vmem:[%s3 + $0xb8] sm:$0xff] %vm556, %v549
  // Predicated region
  $region14: #{drqnv1_forward.3} parent=0 // pred_check
    _
  $region15: #{drqnv1_forward.3} parent=0 // pred_check_branch
    %577 = sbr.rel (0) target = $region17
  $region16: #{drqnv1_forward.3} parent=0 // pred_region
    _
  $region17: #{drqnv1_forward.3} parent=0 // pred_fallthru
    _
  // Predicated region
  $region18: #{drqnv1_forward.3} parent=0 // pred_check
    _
  $region19: #{drqnv1_forward.3} parent=0 // pred_check_branch
    %579 = sbr.rel (0) target = $region21
  $region20: #{drqnv1_forward.3} parent=0 // pred_region
    _
  $region21: #{drqnv1_forward.3} parent=0 // pred_fallthru
    _

// kernel: drqnv1_forward.4
$region0: #{drqnv1_forward.4}
  #allocation0 [shape = 'u32[]', space=smem, size = 0x4, offset = 0x4, fixed_abs, tag = 'smem constant byte address 0x4 - core index']
  #allocation1 [shape = 'u32[72,128]{1,0:T(1,128)}', space=vmem, size = 0x9000, scoped, tag = 'internal scratch']
  %s0 = inlined_call_operand.vmem [shape: f32[64,512], index: 0, kind: input, shape index: {}]
  %s1 = inlined_call_operand.vmem [shape: f32[512,144], index: 1, kind: input, shape index: {}]
  %s2 = inlined_call_operand.vmem [shape: f32[64,1], index: 2, kind: input, shape index: {}]
  %s3 = inlined_call_operand.vmem [shape: f32[64,144], index: 3, kind: output, shape index: {}]
  %s4 = sld [smem:[#allocation0]]
  $region22: #{drqnv1_forward.4} parent=0
    _
  %s6 = ssub.s32 1, %s4
  %s7 = scalar_select 0, %s6, %s4
  // Predicated region
  $region2: #{drqnv1_forward.4} parent=0 // pred_check
    _
  $region3: #{drqnv1_forward.4} parent=0 // pred_check_branch
    %9 = sbr.rel (0) target = $region5
  $region4: #{drqnv1_forward.4} parent=0 // pred_region
    _
  $region5: #{drqnv1_forward.4} parent=0 // pred_fallthru
    _
  // Predicated region
  $region6: #{drqnv1_forward.4} parent=0 // pred_check
    _
  $region7: #{drqnv1_forward.4} parent=0 // pred_check_branch
    %11 = sbr.rel (0) target = $region9
  $region8: #{drqnv1_forward.4} parent=0 // pred_region
    _
  $region9: #{drqnv1_forward.4} parent=0 // pred_fallthru
    _
  // Predicated region
  $region10: #{drqnv1_forward.4} parent=0 // pred_check
    _
  $region11: #{drqnv1_forward.4} parent=0 // pred_check_branch
    %13 = sbr.rel (0) target = $region13
  $region12: #{drqnv1_forward.4} parent=0 // pred_region
    _
  $region13: #{drqnv1_forward.4} parent=0 // pred_fallthru
    _
  %v14 = vld [vmem:[%s0] sm:$0xff]
  %v15 = vld [vmem:[%s0 + $0x8] sm:$0xff]
  %v16 = vld [vmem:[%s0 + $0x10] sm:$0xff]
  %v17 = vld [vmem:[%s0 + $0x18] sm:$0xff]
  %v18 = vld [vmem:[%s0 + $0x20] sm:$0xff]
  %v19 = vld [vmem:[%s0 + $0x28] sm:$0xff]
  %v20 = vld [vmem:[%s0 + $0x30] sm:$0xff]
  %v21 = vld [vmem:[%s0 + $0x38] sm:$0xff]
  %v22 = vld [vmem:[%s0 + $0x40] sm:$0xff]
  %v23 = vld [vmem:[%s0 + $0x48] sm:$0xff]
  %v24 = vld [vmem:[%s0 + $0x50] sm:$0xff]
  %v25 = vld [vmem:[%s0 + $0x58] sm:$0xff]
  %v26 = vld [vmem:[%s0 + $0x60] sm:$0xff]
  %v27 = vld [vmem:[%s0 + $0x68] sm:$0xff]
  %v28 = vld [vmem:[%s0 + $0x70] sm:$0xff]
  %v29 = vld [vmem:[%s0 + $0x78] sm:$0xff]
  %v30 = vld [vmem:[%s0 + $0x80] sm:$0xff]
  %v31 = vld [vmem:[%s0 + $0x88] sm:$0xff]
  %v32 = vld [vmem:[%s0 + $0x90] sm:$0xff]
  %v33 = vld [vmem:[%s0 + $0x98] sm:$0xff]
  %v34 = vld [vmem:[%s0 + $0xa0] sm:$0xff]
  %v35 = vld [vmem:[%s0 + $0xa8] sm:$0xff]
  %v36 = vld [vmem:[%s0 + $0xb0] sm:$0xff]
  %v37 = vld [vmem:[%s0 + $0xb8] sm:$0xff]
  %v38 = vld [vmem:[%s0 + $0xc0] sm:$0xff]
  %v39 = vld [vmem:[%s0 + $0xc8] sm:$0xff]
  %v40 = vld [vmem:[%s0 + $0xd0] sm:$0xff]
  %v41 = vld [vmem:[%s0 + $0xd8] sm:$0xff]
  %v42 = vld [vmem:[%s0 + $0xe0] sm:$0xff]
  %v43 = vld [vmem:[%s0 + $0xe8] sm:$0xff]
  %v44 = vld [vmem:[%s0 + $0xf0] sm:$0xff]
  %v45 = vld [vmem:[%s0 + $0xf8] sm:$0xff]
  %v46 = vld [vmem:[%s1] sm:$0xff]
  %v47 = vld [vmem:[%s1 + $0x8] sm:$0xff]
  %v48 = vld [vmem:[%s1 + $0x10] sm:$0xff]
  %v49 = vld [vmem:[%s1 + $0x18] sm:$0xff]
  %v50 = vld [vmem:[%s1 + $0x20] sm:$0xff]
  %v51 = vld [vmem:[%s1 + $0x28] sm:$0xff]
  %v52 = vld [vmem:[%s1 + $0x30] sm:$0xff]
  %v53 = vld [vmem:[%s1 + $0x38] sm:$0xff]
  %v54 = vld [vmem:[%s1 + $0x40] sm:$0xff]
  %v55 = vld [vmem:[%s1 + $0x48] sm:$0xff]
  %v56 = vld [vmem:[%s1 + $0x50] sm:$0xff]
  %v57 = vld [vmem:[%s1 + $0x58] sm:$0xff]
  %v58 = vld [vmem:[%s1 + $0x60] sm:$0xff]
  %v59 = vld [vmem:[%s1 + $0x68] sm:$0xff]
  %v60 = vld [vmem:[%s1 + $0x70] sm:$0xff]
  %v61 = vld [vmem:[%s1 + $0x78] sm:$0xff]
  %v62 = vld [vmem:[%s1 + $0x80] sm:$0xff]
  %v63 = vld [vmem:[%s1 + $0x88] sm:$0xff]
  %v64 = vld [vmem:[%s1 + $0x90] sm:$0xff]
  %v65 = vld [vmem:[%s1 + $0x98] sm:$0xff]
  %v66 = vld [vmem:[%s1 + $0xa0] sm:$0xff]
  %v67 = vld [vmem:[%s1 + $0xa8] sm:$0xff]
  %v68 = vld [vmem:[%s1 + $0xb0] sm:$0xff]
  %v69 = vld [vmem:[%s1 + $0xb8] sm:$0xff]
  %v70 = vld [vmem:[%s1 + $0xc0] sm:$0xff]
  %v71 = vld [vmem:[%s1 + $0xc8] sm:$0xff]
  %v72 = vld [vmem:[%s1 + $0xd0] sm:$0xff]
  %v73 = vld [vmem:[%s1 + $0xd8] sm:$0xff]
  %v74 = vld [vmem:[%s1 + $0xe0] sm:$0xff]
  %v75 = vld [vmem:[%s1 + $0xe8] sm:$0xff]
  %v76 = vld [vmem:[%s1 + $0xf0] sm:$0xff]
  %v77 = vld [vmem:[%s1 + $0xf8] sm:$0xff]
  %v78 = vld [vmem:[%s1 + $0x100] sm:$0xff]
  %v79 = vld [vmem:[%s1 + $0x108] sm:$0xff]
  %v80 = vld [vmem:[%s1 + $0x110] sm:$0xff]
  %v81 = vld [vmem:[%s1 + $0x118] sm:$0xff]
  %v82 = vld [vmem:[%s1 + $0x120] sm:$0xff]
  %v83 = vld [vmem:[%s1 + $0x128] sm:$0xff]
  %v84 = vld [vmem:[%s1 + $0x130] sm:$0xff]
  %v85 = vld [vmem:[%s1 + $0x138] sm:$0xff]
  %v86 = vld [vmem:[%s1 + $0x140] sm:$0xff]
  %v87 = vld [vmem:[%s1 + $0x148] sm:$0xff]
  %v88 = vld [vmem:[%s1 + $0x150] sm:$0xff]
  %v89 = vld [vmem:[%s1 + $0x158] sm:$0xff]
  %v90 = vld [vmem:[%s1 + $0x160] sm:$0xff]
  %v91 = vld [vmem:[%s1 + $0x168] sm:$0xff]
  %v92 = vld [vmem:[%s1 + $0x170] sm:$0xff]
  %v93 = vld [vmem:[%s1 + $0x178] sm:$0xff]
  %v94 = vld [vmem:[%s1 + $0x180] sm:$0xff]
  %v95 = vld [vmem:[%s1 + $0x188] sm:$0xff]
  %v96 = vld [vmem:[%s1 + $0x190] sm:$0xff]
  %v97 = vld [vmem:[%s1 + $0x198] sm:$0xff]
  %v98 = vld [vmem:[%s1 + $0x1a0] sm:$0xff]
  %v99 = vld [vmem:[%s1 + $0x1a8] sm:$0xff]
  %v100 = vld [vmem:[%s1 + $0x1b0] sm:$0xff]
  %v101 = vld [vmem:[%s1 + $0x1b8] sm:$0xff]
  %v102 = vld [vmem:[%s1 + $0x1c0] sm:$0xff]
  %v103 = vld [vmem:[%s1 + $0x1c8] sm:$0xff]
  %v104 = vld [vmem:[%s1 + $0x1d0] sm:$0xff]
  %v105 = vld [vmem:[%s1 + $0x1d8] sm:$0xff]
  %v106 = vld [vmem:[%s1 + $0x1e0] sm:$0xff]
  %v107 = vld [vmem:[%s1 + $0x1e8] sm:$0xff]
  %v108 = vld [vmem:[%s1 + $0x1f0] sm:$0xff]
  %v109 = vld [vmem:[%s1 + $0x1f8] sm:$0xff]
  %v110 = vld [vmem:[%s1 + $0x200] sm:$0xff]
  %v111 = vld [vmem:[%s1 + $0x208] sm:$0xff]
  %v112 = vld [vmem:[%s1 + $0x210] sm:$0xff]
  %v113 = vld [vmem:[%s1 + $0x218] sm:$0xff]
  %v114 = vld [vmem:[%s1 + $0x220] sm:$0xff]
  %v115 = vld [vmem:[%s1 + $0x228] sm:$0xff]
  %v116 = vld [vmem:[%s1 + $0x230] sm:$0xff]
  %v117 = vld [vmem:[%s1 + $0x238] sm:$0xff]
  %v118 = vld [vmem:[%s1 + $0x240] sm:$0xff]
  %v119 = vld [vmem:[%s1 + $0x248] sm:$0xff]
  %v120 = vld [vmem:[%s1 + $0x250] sm:$0xff]
  %v121 = vld [vmem:[%s1 + $0x258] sm:$0xff]
  %v122 = vld [vmem:[%s1 + $0x260] sm:$0xff]
  %v123 = vld [vmem:[%s1 + $0x268] sm:$0xff]
  %v124 = vld [vmem:[%s1 + $0x270] sm:$0xff]
  %v125 = vld [vmem:[%s1 + $0x278] sm:$0xff]
  %v126 = vld [vmem:[%s1 + $0x280] sm:$0xff]
  %v127 = vld [vmem:[%s1 + $0x288] sm:$0xff]
  %v128 = vld [vmem:[%s1 + $0x290] sm:$0xff]
  %v129 = vld [vmem:[%s1 + $0x298] sm:$0xff]
  %v130 = vld [vmem:[%s1 + $0x2a0] sm:$0xff]
  %v131 = vld [vmem:[%s1 + $0x2a8] sm:$0xff]
  %v132 = vld [vmem:[%s1 + $0x2b0] sm:$0xff]
  %v133 = vld [vmem:[%s1 + $0x2b8] sm:$0xff]
  %v134 = vld [vmem:[%s1 + $0x2c0] sm:$0xff]
  %v135 = vld [vmem:[%s1 + $0x2c8] sm:$0xff]
  %v136 = vld [vmem:[%s1 + $0x2d0] sm:$0xff]
  %v137 = vld [vmem:[%s1 + $0x2d8] sm:$0xff]
  %v138 = vld [vmem:[%s1 + $0x2e0] sm:$0xff]
  %v139 = vld [vmem:[%s1 + $0x2e8] sm:$0xff]
  %v140 = vld [vmem:[%s1 + $0x2f0] sm:$0xff]
  %v141 = vld [vmem:[%s1 + $0x2f8] sm:$0xff]
  %v142 = vld [vmem:[%s1 + $0x300] sm:$0xff]
  %v143 = vld [vmem:[%s1 + $0x308] sm:$0xff]
  %v144 = vld [vmem:[%s1 + $0x310] sm:$0xff]
  %v145 = vld [vmem:[%s1 + $0x318] sm:$0xff]
  %v146 = vld [vmem:[%s1 + $0x320] sm:$0xff]
  %v147 = vld [vmem:[%s1 + $0x328] sm:$0xff]
  %v148 = vld [vmem:[%s1 + $0x330] sm:$0xff]
  %v149 = vld [vmem:[%s1 + $0x338] sm:$0xff]
  %v150 = vld [vmem:[%s1 + $0x340] sm:$0xff]
  %v151 = vld [vmem:[%s1 + $0x348] sm:$0xff]
  %v152 = vld [vmem:[%s1 + $0x350] sm:$0xff]
  %v153 = vld [vmem:[%s1 + $0x358] sm:$0xff]
  %v154 = vld [vmem:[%s1 + $0x360] sm:$0xff]
  %v155 = vld [vmem:[%s1 + $0x368] sm:$0xff]
  %v156 = vld [vmem:[%s1 + $0x370] sm:$0xff]
  %v157 = vld [vmem:[%s1 + $0x378] sm:$0xff]
  %v158 = vld [vmem:[%s1 + $0x380] sm:$0xff]
  %v159 = vld [vmem:[%s1 + $0x388] sm:$0xff]
  %v160 = vld [vmem:[%s1 + $0x390] sm:$0xff]
  %v161 = vld [vmem:[%s1 + $0x398] sm:$0xff]
  %v162 = vld [vmem:[%s1 + $0x3a0] sm:$0xff]
  %v163 = vld [vmem:[%s1 + $0x3a8] sm:$0xff]
  %v164 = vld [vmem:[%s1 + $0x3b0] sm:$0xff]
  %v165 = vld [vmem:[%s1 + $0x3b8] sm:$0xff]
  %v166 = vld [vmem:[%s1 + $0x3c0] sm:$0xff]
  %v167 = vld [vmem:[%s1 + $0x3c8] sm:$0xff]
  %v168 = vld [vmem:[%s1 + $0x3d0] sm:$0xff]
  %v169 = vld [vmem:[%s1 + $0x3d8] sm:$0xff]
  %v170 = vld [vmem:[%s1 + $0x3e0] sm:$0xff]
  %v171 = vld [vmem:[%s1 + $0x3e8] sm:$0xff]
  %v172 = vld [vmem:[%s1 + $0x3f0] sm:$0xff]
  %v173 = vld [vmem:[%s1 + $0x3f8] sm:$0xff]
  %v174 = vld [vmem:[%s2] sm:$0xff]
  %v175 = vld [vmem:[%s2 + $0x8] sm:$0xff]
  %v176 = vld [vmem:[%s2 + $0x10] sm:$0xff]
  %v177 = vld [vmem:[%s2 + $0x18] sm:$0xff]
  %v178 = vld [vmem:[%s2 + $0x20] sm:$0xff]
  %v179 = vld [vmem:[%s2 + $0x28] sm:$0xff]
  %v180 = vld [vmem:[%s2 + $0x30] sm:$0xff]
  %v181 = vld [vmem:[%s2 + $0x38] sm:$0xff]
  %183 = vset.pattern.permute.xlu0 0
  %184 = vperm.xlu0 %183, %v174
  %v185 = vpop.permute.xlu0 %184
  %188 = vset.pattern.permute.xlu0 0
  %189 = vperm.xlu0 %188, %v175
  %v190 = vpop.permute.xlu0 %189
  %193 = vset.pattern.permute.xlu0 0
  %194 = vperm.xlu0 %193, %v176
  %v195 = vpop.permute.xlu0 %194
  %198 = vset.pattern.permute.xlu0 0
  %199 = vperm.xlu0 %198, %v177
  %v200 = vpop.permute.xlu0 %199
  %203 = vset.pattern.permute.xlu0 0
  %204 = vperm.xlu0 %203, %v178
  %v205 = vpop.permute.xlu0 %204
  %208 = vset.pattern.permute.xlu0 0
  %209 = vperm.xlu0 %208, %v179
  %v210 = vpop.permute.xlu0 %209
  %213 = vset.pattern.permute.xlu0 0
  %214 = vperm.xlu0 %213, %v180
  %v215 = vpop.permute.xlu0 %214
  %218 = vset.pattern.permute.xlu0 0
  %219 = vperm.xlu0 %218, %v181
  %v220 = vpop.permute.xlu0 %219
  %222 = vmatpush.msra.mxu0 %v76
  %223 = vmatpush.msra.mxu0 %v74
  %224 = vmatpush.msra.mxu0 %v72
  %225 = vmatpush.msra.mxu0 %v70
  %226 = vmatpush.msra.mxu0 %v68
  %227 = vmatpush.msra.mxu0 %v66
  %228 = vmatpush.msra.mxu0 %v64
  %229 = vmatpush.msra.mxu0 %v62
  %230 = vmatpush.msra.mxu0 %v60
  %231 = vmatpush.msra.mxu0 %v58
  %232 = vmatpush.msra.mxu0 %v56
  %233 = vmatpush.msra.mxu0 %v54
  %234 = vmatpush.msra.mxu0 %v52
  %235 = vmatpush.msra.mxu0 %v50
  %236 = vmatpush.msra.mxu0 %v48
  %237 = vmatpush.msra.mxu0 %v46
  %238 = vmatmul.f32.gmra.mxu0 %v14
  %v239 = vpop.f32.mrf.mxu0
  %v240 = vadd.f32 %v185, %v239
  %241 = vmatmul.f32.gmra.mxu0 %v18
  %v242 = vpop.f32.mrf.mxu0
  %v243 = vadd.f32 %v190, %v242
  %244 = vmatmul.f32.gmra.mxu0 %v22
  %v245 = vpop.f32.mrf.mxu0
  %v246 = vadd.f32 %v195, %v245
  %247 = vmatmul.f32.gmra.mxu0 %v26
  %v248 = vpop.f32.mrf.mxu0
  %v249 = vadd.f32 %v200, %v248
  %250 = vmatmul.f32.gmra.mxu0 %v30
  %v251 = vpop.f32.mrf.mxu0
  %v252 = vadd.f32 %v205, %v251
  %253 = vmatmul.f32.gmra.mxu0 %v34
  %v254 = vpop.f32.mrf.mxu0
  %v255 = vadd.f32 %v210, %v254
  %256 = vmatmul.f32.gmra.mxu0 %v38
  %v257 = vpop.f32.mrf.mxu0
  %v258 = vadd.f32 %v215, %v257
  %259 = vmatmul.f32.gmra.mxu0 %v42
  %v260 = vpop.f32.mrf.mxu0
  %v261 = vadd.f32 %v220, %v260
  %262 = vdwg.mxu0
  %263 = vmatpush.msra.mxu0 %v108
  %264 = vmatpush.msra.mxu0 %v106
  %265 = vmatpush.msra.mxu0 %v104
  %266 = vmatpush.msra.mxu0 %v102
  %267 = vmatpush.msra.mxu0 %v100
  %268 = vmatpush.msra.mxu0 %v98
  %269 = vmatpush.msra.mxu0 %v96
  %270 = vmatpush.msra.mxu0 %v94
  %271 = vmatpush.msra.mxu0 %v92
  %272 = vmatpush.msra.mxu0 %v90
  %273 = vmatpush.msra.mxu0 %v88
  %274 = vmatpush.msra.mxu0 %v86
  %275 = vmatpush.msra.mxu0 %v84
  %276 = vmatpush.msra.mxu0 %v82
  %277 = vmatpush.msra.mxu0 %v80
  %278 = vmatpush.msra.mxu0 %v78
  %279 = vmatmul.f32.gmra.mxu0 %v15
  %v280 = vpop.f32.mrf.mxu0
  %v281 = vadd.f32 %v240, %v280
  %282 = vmatmul.f32.gmra.mxu0 %v19
  %v283 = vpop.f32.mrf.mxu0
  %v284 = vadd.f32 %v243, %v283
  %285 = vmatmul.f32.gmra.mxu0 %v23
  %v286 = vpop.f32.mrf.mxu0
  %v287 = vadd.f32 %v246, %v286
  %288 = vmatmul.f32.gmra.mxu0 %v27
  %v289 = vpop.f32.mrf.mxu0
  %v290 = vadd.f32 %v249, %v289
  %291 = vmatmul.f32.gmra.mxu0 %v31
  %v292 = vpop.f32.mrf.mxu0
  %v293 = vadd.f32 %v252, %v292
  %294 = vmatmul.f32.gmra.mxu0 %v35
  %v295 = vpop.f32.mrf.mxu0
  %v296 = vadd.f32 %v255, %v295
  %297 = vmatmul.f32.gmra.mxu0 %v39
  %v298 = vpop.f32.mrf.mxu0
  %v299 = vadd.f32 %v258, %v298
  %300 = vmatmul.f32.gmra.mxu0 %v43
  %v301 = vpop.f32.mrf.mxu0
  %v302 = vadd.f32 %v261, %v301
  %303 = vdwg.mxu0
  %304 = vmatpush.msra.mxu0 %v140
  %305 = vmatpush.msra.mxu0 %v138
  %306 = vmatpush.msra.mxu0 %v136
  %307 = vmatpush.msra.mxu0 %v134
  %308 = vmatpush.msra.mxu0 %v132
  %309 = vmatpush.msra.mxu0 %v130
  %310 = vmatpush.msra.mxu0 %v128
  %311 = vmatpush.msra.mxu0 %v126
  %312 = vmatpush.msra.mxu0 %v124
  %313 = vmatpush.msra.mxu0 %v122
  %314 = vmatpush.msra.mxu0 %v120
  %315 = vmatpush.msra.mxu0 %v118
  %316 = vmatpush.msra.mxu0 %v116
  %317 = vmatpush.msra.mxu0 %v114
  %318 = vmatpush.msra.mxu0 %v112
  %319 = vmatpush.msra.mxu0 %v110
  %320 = vmatmul.f32.gmra.mxu0 %v16
  %v321 = vpop.f32.mrf.mxu0
  %v322 = vadd.f32 %v281, %v321
  %323 = vmatmul.f32.gmra.mxu0 %v20
  %v324 = vpop.f32.mrf.mxu0
  %v325 = vadd.f32 %v284, %v324
  %326 = vmatmul.f32.gmra.mxu0 %v24
  %v327 = vpop.f32.mrf.mxu0
  %v328 = vadd.f32 %v287, %v327
  %329 = vmatmul.f32.gmra.mxu0 %v28
  %v330 = vpop.f32.mrf.mxu0
  %v331 = vadd.f32 %v290, %v330
  %332 = vmatmul.f32.gmra.mxu0 %v32
  %v333 = vpop.f32.mrf.mxu0
  %v334 = vadd.f32 %v293, %v333
  %335 = vmatmul.f32.gmra.mxu0 %v36
  %v336 = vpop.f32.mrf.mxu0
  %v337 = vadd.f32 %v296, %v336
  %338 = vmatmul.f32.gmra.mxu0 %v40
  %v339 = vpop.f32.mrf.mxu0
  %v340 = vadd.f32 %v299, %v339
  %341 = vmatmul.f32.gmra.mxu0 %v44
  %v342 = vpop.f32.mrf.mxu0
  %v343 = vadd.f32 %v302, %v342
  %344 = vdwg.mxu0
  %345 = vmatpush.msra.mxu0 %v172
  %346 = vmatpush.msra.mxu0 %v170
  %347 = vmatpush.msra.mxu0 %v168
  %348 = vmatpush.msra.mxu0 %v166
  %349 = vmatpush.msra.mxu0 %v164
  %350 = vmatpush.msra.mxu0 %v162
  %351 = vmatpush.msra.mxu0 %v160
  %352 = vmatpush.msra.mxu0 %v158
  %353 = vmatpush.msra.mxu0 %v156
  %354 = vmatpush.msra.mxu0 %v154
  %355 = vmatpush.msra.mxu0 %v152
  %356 = vmatpush.msra.mxu0 %v150
  %357 = vmatpush.msra.mxu0 %v148
  %358 = vmatpush.msra.mxu0 %v146
  %359 = vmatpush.msra.mxu0 %v144
  %360 = vmatpush.msra.mxu0 %v142
  %361 = vmatmul.f32.gmra.mxu0 %v17
  %v362 = vpop.f32.mrf.mxu0
  %v363 = vadd.f32 %v322, %v362
  %364 = vmatmul.f32.gmra.mxu0 %v21
  %v365 = vpop.f32.mrf.mxu0
  %v366 = vadd.f32 %v325, %v365
  %367 = vmatmul.f32.gmra.mxu0 %v25
  %v368 = vpop.f32.mrf.mxu0
  %v369 = vadd.f32 %v328, %v368
  %370 = vmatmul.f32.gmra.mxu0 %v29
  %v371 = vpop.f32.mrf.mxu0
  %v372 = vadd.f32 %v331, %v371
  %373 = vmatmul.f32.gmra.mxu0 %v33
  %v374 = vpop.f32.mrf.mxu0
  %v375 = vadd.f32 %v334, %v374
  %376 = vmatmul.f32.gmra.mxu0 %v37
  %v377 = vpop.f32.mrf.mxu0
  %v378 = vadd.f32 %v337, %v377
  %379 = vmatmul.f32.gmra.mxu0 %v41
  %v380 = vpop.f32.mrf.mxu0
  %v381 = vadd.f32 %v340, %v380
  %382 = vmatmul.f32.gmra.mxu0 %v45
  %v383 = vpop.f32.mrf.mxu0
  %v384 = vadd.f32 %v343, %v383
  %385 = vdwg.mxu0
  %386 = vmatpush.msra.mxu0 %v77
  %387 = vmatpush.msra.mxu0 %v75
  %388 = vmatpush.msra.mxu0 %v73
  %389 = vmatpush.msra.mxu0 %v71
  %390 = vmatpush.msra.mxu0 %v69
  %391 = vmatpush.msra.mxu0 %v67
  %392 = vmatpush.msra.mxu0 %v65
  %393 = vmatpush.msra.mxu0 %v63
  %394 = vmatpush.msra.mxu0 %v61
  %395 = vmatpush.msra.mxu0 %v59
  %396 = vmatpush.msra.mxu0 %v57
  %397 = vmatpush.msra.mxu0 %v55
  %398 = vmatpush.msra.mxu0 %v53
  %399 = vmatpush.msra.mxu0 %v51
  %400 = vmatpush.msra.mxu0 %v49
  %401 = vmatpush.msra.mxu0 %v47
  %402 = vmatmul.f32.gmra.mxu0 %v14
  %v403 = vpop.f32.mrf.mxu0
  %v404 = vadd.f32 %v185, %v403
  %405 = vmatmul.f32.gmra.mxu0 %v18
  %v406 = vpop.f32.mrf.mxu0
  %v407 = vadd.f32 %v190, %v406
  %408 = vmatmul.f32.gmra.mxu0 %v22
  %v409 = vpop.f32.mrf.mxu0
  %v410 = vadd.f32 %v195, %v409
  %411 = vmatmul.f32.gmra.mxu0 %v26
  %v412 = vpop.f32.mrf.mxu0
  %v413 = vadd.f32 %v200, %v412
  %414 = vmatmul.f32.gmra.mxu0 %v30
  %v415 = vpop.f32.mrf.mxu0
  %v416 = vadd.f32 %v205, %v415
  %417 = vmatmul.f32.gmra.mxu0 %v34
  %v418 = vpop.f32.mrf.mxu0
  %v419 = vadd.f32 %v210, %v418
  %420 = vmatmul.f32.gmra.mxu0 %v38
  %v421 = vpop.f32.mrf.mxu0
  %v422 = vadd.f32 %v215, %v421
  %423 = vmatmul.f32.gmra.mxu0 %v42
  %v424 = vpop.f32.mrf.mxu0
  %v425 = vadd.f32 %v220, %v424
  %426 = vdwg.mxu0
  %427 = vmatpush.msra.mxu0 %v109
  %428 = vmatpush.msra.mxu0 %v107
  %429 = vmatpush.msra.mxu0 %v105
  %430 = vmatpush.msra.mxu0 %v103
  %431 = vmatpush.msra.mxu0 %v101
  %432 = vmatpush.msra.mxu0 %v99
  %433 = vmatpush.msra.mxu0 %v97
  %434 = vmatpush.msra.mxu0 %v95
  %435 = vmatpush.msra.mxu0 %v93
  %436 = vmatpush.msra.mxu0 %v91
  %437 = vmatpush.msra.mxu0 %v89
  %438 = vmatpush.msra.mxu0 %v87
  %439 = vmatpush.msra.mxu0 %v85
  %440 = vmatpush.msra.mxu0 %v83
  %441 = vmatpush.msra.mxu0 %v81
  %442 = vmatpush.msra.mxu0 %v79
  %443 = vmatmul.f32.gmra.mxu0 %v15
  %v444 = vpop.f32.mrf.mxu0
  %v445 = vadd.f32 %v404, %v444
  %446 = vmatmul.f32.gmra.mxu0 %v19
  %v447 = vpop.f32.mrf.mxu0
  %v448 = vadd.f32 %v407, %v447
  %449 = vmatmul.f32.gmra.mxu0 %v23
  %v450 = vpop.f32.mrf.mxu0
  %v451 = vadd.f32 %v410, %v450
  %452 = vmatmul.f32.gmra.mxu0 %v27
  %v453 = vpop.f32.mrf.mxu0
  %v454 = vadd.f32 %v413, %v453
  %455 = vmatmul.f32.gmra.mxu0 %v31
  %v456 = vpop.f32.mrf.mxu0
  %v457 = vadd.f32 %v416, %v456
  %458 = vmatmul.f32.gmra.mxu0 %v35
  %v459 = vpop.f32.mrf.mxu0
  %v460 = vadd.f32 %v419, %v459
  %461 = vmatmul.f32.gmra.mxu0 %v39
  %v462 = vpop.f32.mrf.mxu0
  %v463 = vadd.f32 %v422, %v462
  %464 = vmatmul.f32.gmra.mxu0 %v43
  %v465 = vpop.f32.mrf.mxu0
  %v466 = vadd.f32 %v425, %v465
  %467 = vdwg.mxu0
  %468 = vmatpush.msra.mxu0 %v141
  %469 = vmatpush.msra.mxu0 %v139
  %470 = vmatpush.msra.mxu0 %v137
  %471 = vmatpush.msra.mxu0 %v135
  %472 = vmatpush.msra.mxu0 %v133
  %473 = vmatpush.msra.mxu0 %v131
  %474 = vmatpush.msra.mxu0 %v129
  %475 = vmatpush.msra.mxu0 %v127
  %476 = vmatpush.msra.mxu0 %v125
  %477 = vmatpush.msra.mxu0 %v123
  %478 = vmatpush.msra.mxu0 %v121
  %479 = vmatpush.msra.mxu0 %v119
  %480 = vmatpush.msra.mxu0 %v117
  %481 = vmatpush.msra.mxu0 %v115
  %482 = vmatpush.msra.mxu0 %v113
  %483 = vmatpush.msra.mxu0 %v111
  %484 = vmatmul.f32.gmra.mxu0 %v16
  %v485 = vpop.f32.mrf.mxu0
  %v486 = vadd.f32 %v445, %v485
  %487 = vmatmul.f32.gmra.mxu0 %v20
  %v488 = vpop.f32.mrf.mxu0
  %v489 = vadd.f32 %v448, %v488
  %490 = vmatmul.f32.gmra.mxu0 %v24
  %v491 = vpop.f32.mrf.mxu0
  %v492 = vadd.f32 %v451, %v491
  %493 = vmatmul.f32.gmra.mxu0 %v28
  %v494 = vpop.f32.mrf.mxu0
  %v495 = vadd.f32 %v454, %v494
  %496 = vmatmul.f32.gmra.mxu0 %v32
  %v497 = vpop.f32.mrf.mxu0
  %v498 = vadd.f32 %v457, %v497
  %499 = vmatmul.f32.gmra.mxu0 %v36
  %v500 = vpop.f32.mrf.mxu0
  %v501 = vadd.f32 %v460, %v500
  %502 = vmatmul.f32.gmra.mxu0 %v40
  %v503 = vpop.f32.mrf.mxu0
  %v504 = vadd.f32 %v463, %v503
  %505 = vmatmul.f32.gmra.mxu0 %v44
  %v506 = vpop.f32.mrf.mxu0
  %v507 = vadd.f32 %v466, %v506
  %508 = vdwg.mxu0
  %509 = vmatpush.msra.mxu0 %v173
  %510 = vmatpush.msra.mxu0 %v171
  %511 = vmatpush.msra.mxu0 %v169
  %512 = vmatpush.msra.mxu0 %v167
  %513 = vmatpush.msra.mxu0 %v165
  %514 = vmatpush.msra.mxu0 %v163
  %515 = vmatpush.msra.mxu0 %v161
  %516 = vmatpush.msra.mxu0 %v159
  %517 = vmatpush.msra.mxu0 %v157
  %518 = vmatpush.msra.mxu0 %v155
  %519 = vmatpush.msra.mxu0 %v153
  %520 = vmatpush.msra.mxu0 %v151
  %521 = vmatpush.msra.mxu0 %v149
  %522 = vmatpush.msra.mxu0 %v147
  %523 = vmatpush.msra.mxu0 %v145
  %524 = vmatpush.msra.mxu0 %v143
  %525 = vmatmul.f32.gmra.mxu0 %v17
  %v526 = vpop.f32.mrf.mxu0
  %v527 = vadd.f32 %v486, %v526
  %528 = vmatmul.f32.gmra.mxu0 %v21
  %v529 = vpop.f32.mrf.mxu0
  %v530 = vadd.f32 %v489, %v529
  %531 = vmatmul.f32.gmra.mxu0 %v25
  %v532 = vpop.f32.mrf.mxu0
  %v533 = vadd.f32 %v492, %v532
  %534 = vmatmul.f32.gmra.mxu0 %v29
  %v535 = vpop.f32.mrf.mxu0
  %v536 = vadd.f32 %v495, %v535
  %537 = vmatmul.f32.gmra.mxu0 %v33
  %v538 = vpop.f32.mrf.mxu0
  %v539 = vadd.f32 %v498, %v538
  %540 = vmatmul.f32.gmra.mxu0 %v37
  %v541 = vpop.f32.mrf.mxu0
  %v542 = vadd.f32 %v501, %v541
  %543 = vmatmul.f32.gmra.mxu0 %v41
  %v544 = vpop.f32.mrf.mxu0
  %v545 = vadd.f32 %v504, %v544
  %546 = vmatmul.f32.gmra.mxu0 %v45
  %v547 = vpop.f32.mrf.mxu0
  %v548 = vadd.f32 %v507, %v547
  %549 = vdwg.mxu0
  %550 = vst [vmem:[%s3] sm:$0xff] %v363
  %vm551 = vcmask 130048
  %552 = vst.msk [vmem:[%s3 + $0x8] sm:$0xff] %vm551, %v527
  %553 = vst [vmem:[%s3 + $0x10] sm:$0xff] %v366
  %554 = vst.msk [vmem:[%s3 + $0x18] sm:$0xff] %vm551, %v530
  %555 = vst [vmem:[%s3 + $0x20] sm:$0xff] %v369
  %556 = vst.msk [vmem:[%s3 + $0x28] sm:$0xff] %vm551, %v533
  %557 = vst [vmem:[%s3 + $0x30] sm:$0xff] %v372
  %558 = vst.msk [vmem:[%s3 + $0x38] sm:$0xff] %vm551, %v536
  %559 = vst [vmem:[%s3 + $0x40] sm:$0xff] %v375
  %560 = vst.msk [vmem:[%s3 + $0x48] sm:$0xff] %vm551, %v539
  %561 = vst [vmem:[%s3 + $0x50] sm:$0xff] %v378
  %562 = vst.msk [vmem:[%s3 + $0x58] sm:$0xff] %vm551, %v542
  %563 = vst [vmem:[%s3 + $0x60] sm:$0xff] %v381
  %564 = vst.msk [vmem:[%s3 + $0x68] sm:$0xff] %vm551, %v545
  %565 = vst [vmem:[%s3 + $0x70] sm:$0xff] %v384
  %566 = vst.msk [vmem:[%s3 + $0x78] sm:$0xff] %vm551, %v548
  // Predicated region
  $region14: #{drqnv1_forward.4} parent=0 // pred_check
    _
  $region15: #{drqnv1_forward.4} parent=0 // pred_check_branch
    %568 = sbr.rel (0) target = $region17
  $region16: #{drqnv1_forward.4} parent=0 // pred_region
    _
  $region17: #{drqnv1_forward.4} parent=0 // pred_fallthru
    _
  // Predicated region
  $region18: #{drqnv1_forward.4} parent=0 // pred_check
    _
  $region19: #{drqnv1_forward.4} parent=0 // pred_check_branch
    %570 = sbr.rel (0) target = $region21
  $region20: #{drqnv1_forward.4} parent=0 // pred_region
    _
  $region21: #{drqnv1_forward.4} parent=0 // pred_fallthru
    _

// kernel: drqnv1_forward.5
$region0: #{drqnv1_forward.5}
  #allocation0 [shape = 'u32[]', space=smem, size = 0x4, offset = 0x4, fixed_abs, tag = 'smem constant byte address 0x4 - core index']
  #allocation1 [shape = 'u32[72,128]{1,0:T(1,128)}', space=vmem, size = 0x9000, scoped, tag = 'internal scratch']
  #allocation2 [shape = 'f32[2,512]{1,0:T(2,128)}', space=vmem, size = 0x1000, scoped, tag = 'scratch operand']
  #allocation3 [shape = 'f32[2,16]{1,0:T(2,128)}', space=vmem, size = 0x400, scoped, tag = 'scratch operand']
  %s0 = inlined_call_operand.vmem [shape: f32[2,4608], index: 0, kind: input, shape index: {}]
  %s1 = inlined_call_operand.vmem [shape: f32[512,4608], index: 1, kind: input, shape index: {}]
  %s2 = inlined_call_operand.vmem [shape: f32[16,4608], index: 2, kind: input, shape index: {}]
  %s3 = inlined_call_operand.vmem [shape: f32[1,512], index: 3, kind: input, shape index: {}]
  %s4 = inlined_call_operand.vmem [shape: f32[8,512], index: 4, kind: input, shape index: {}]
  %s5 = inlined_call_operand.vmem [shape: f32[1,8], index: 5, kind: input, shape index: {}]
  %s6 = inlined_call_operand.vmem [shape: f32[1,16], index: 6, kind: input, shape index: {}]
  %s7 = inlined_call_operand.vmem [shape: f32[16,4], index: 7, kind: input, shape index: {}]
  %s8 = inlined_call_operand.hbm [shape: f32[2,8], index: 8, kind: output, shape index: {0}]
  %s9 = inlined_call_operand.hbm [shape: f32[2,4], index: 9, kind: output, shape index: {1}]
  %10 = xla_tuple %s8, %s9
  %s11 = sld [smem:[#allocation0]]
  $region127: #{drqnv1_forward.5} parent=0
    _
  %s13 = ssub.s32 1, %s11
  %s14 = scalar_select 0, %s13, %s11
  $region1: #{drqnv1_forward.5} parent=0
    #allocation4 [shape = 'u8[4718592]{0}', space=vmem, size = 0x480000, scoped, tag = 'input window, operand 1']
    #allocation5 [shape = 'u8[147456]{0}', space=vmem, size = 0x24000, scoped, tag = 'input window, operand 2']
    #allocation6 [shape = 'u8[1024]{0}', space=vmem, size = 0x400, scoped, tag = 'output window, operand 0, single buffered']
    #allocation7 [shape = 's32[2]{0}', space=sflag, size = 0x8, scoped, tag = 'scoped memory for drqnv1_forward.5']
    #allocation8 [shape = 'u8[1024]{0}', space=vmem, size = 0x400, scoped, tag = 'output window, operand 1, single buffered']
    #allocation9 [shape = 's32[1]{0}', space=sflag, size = 0x4, scoped, tag = 'scoped memory for drqnv1_forward.5']
    %15 = vsyncpa [#allocation7], 0
    %16 = vsyncpa [#allocation9], 0
    loop: start=0, step=1, limit=6
    $region2: #{drqnv1_forward.5} parent=1 // loop_pre_header
      _
    $region3: #{drqnv1_forward.5} parent=1 // loop_header
      %s18 = sphi 0, %s22
      %p19 = scmp.ge.s32.totalorder %s18, 6
      %s28 = sphi 0, %s30
      %s31 = sphi 0, %s28
      %s32 = sphi 0, %s31
      %s48 = sphi 0, %s32
      %s54 = sphi 0, %s56
      %s57 = sphi 0, %s54
      %s58 = sphi 0, %s57
      %s74 = sphi 0, %s58
      %s80 = sphi 0, %s82
      %s83 = sphi 0, %s80
      %s84 = sphi 0, %s83
      %s100 = sphi 0, %s84
      %s104 = sphi 0, %s104
      %s106 = sphi 0, %s104
      %s107 = sphi 0, %s106
      %s121 = sphi 0, %s107
      %s125 = sphi 0, %s125
      %s127 = sphi 0, %s125
      %s128 = sphi 0, %s127
      %s142 = sphi 0, %s128
      %s146 = sphi 0, %s146
      %s148 = sphi 0, %s146
      %s149 = sphi 0, %s148
      %s163 = sphi 0, %s149
      %s167 = sphi 0, %s167
      %s169 = sphi 0, %s167
      %s170 = sphi 0, %s169
      %s184 = sphi 0, %s170
      %s188 = sphi 0, %s188
      %s190 = sphi 0, %s188
      %s191 = sphi 0, %s190
      %s205 = sphi 0, %s191
      %s209 = sphi 0, %s209
      %s211 = sphi 0, %s209
      %s212 = sphi 0, %s211
      %s226 = sphi 0, %s212
      %s230 = sphi 0, %s230
      %s232 = sphi 0, %s230
      %s233 = sphi 0, %s232
      %s247 = sphi 0, %s233
    $region4: #{drqnv1_forward.5} parent=1 // loop_header_branch
      %21 = sbr.rel (%p19) target = $region8
    $region5: #{drqnv1_forward.5} parent=1 // loop_body
      %s23 = ssub.s32 %s18, 1
      %s24 = ssub.s32 %s18, 2
      %s25 = sadd.s32 %s18, 1
      %s26 = ssub.s32 %s18, %s25
      %p27 = scmp.eq.s32.totalorder %s26, 0
      %s29 = sadd.s32 %s28, 1
      %s30 = scalar_select %p27, %s28, %s29
      %p33 = pneg %p27
      %p34 = scmp.eq.s32.totalorder %s18, 3
      %p35 = por %p33, %p34
      %p36 = scmp.ne.s32.totalorder %s28, %s31
      %p37 = scmp.eq.s32.totalorder %s18, 0
      %p38 = por %p36, %p37
      %p39 = scmp.ne.s32.totalorder %s28, %s31
      %p40 = scmp.eq.s32.totalorder %s23, 3
      %p41 = por %p39, %p40
      %p42 = scmp.ne.s32.totalorder %s31, %s32
      %p43 = scmp.eq.s32.totalorder %s23, 0
      %p44 = por %p42, %p43
      %p45 = scmp.ne.s32.totalorder %s31, %s32
      %p46 = scmp.eq.s32.totalorder %s24, 3
      %p47 = por %p45, %p46
      %p49 = scmp.ne.s32.totalorder %s32, %s48
      %p50 = scmp.eq.s32.totalorder %s24, 0
      %p51 = por %p49, %p50
      %s52 = ssub.s32 %s18, %s25
      %p53 = scmp.eq.s32.totalorder %s52, 0
      %s55 = sadd.s32 %s54, 1
      %s56 = scalar_select %p53, %s54, %s55
      %p59 = pneg %p53
      %p60 = scmp.eq.s32.totalorder %s18, 3
      %p61 = por %p59, %p60
      %p62 = scmp.ne.s32.totalorder %s54, %s57
      %p63 = scmp.eq.s32.totalorder %s18, 0
      %p64 = por %p62, %p63
      %p65 = scmp.ne.s32.totalorder %s54, %s57
      %p66 = scmp.eq.s32.totalorder %s23, 3
      %p67 = por %p65, %p66
      %p68 = scmp.ne.s32.totalorder %s57, %s58
      %p69 = scmp.eq.s32.totalorder %s23, 0
      %p70 = por %p68, %p69
      %p71 = scmp.ne.s32.totalorder %s57, %s58
      %p72 = scmp.eq.s32.totalorder %s24, 3
      %p73 = por %p71, %p72
      %p75 = scmp.ne.s32.totalorder %s58, %s74
      %p76 = scmp.eq.s32.totalorder %s24, 0
      %p77 = por %p75, %p76
      %s78 = ssub.s32 %s18, %s25
      %p79 = scmp.eq.s32.totalorder %s78, 0
      %s81 = sadd.s32 %s80, 1
      %s82 = scalar_select %p79, %s80, %s81
      %p85 = pneg %p79
      %p86 = scmp.eq.s32.totalorder %s18, 3
      %p87 = por %p85, %p86
      %p88 = scmp.ne.s32.totalorder %s80, %s83
      %p89 = scmp.eq.s32.totalorder %s18, 0
      %p90 = por %p88, %p89
      %p91 = scmp.ne.s32.totalorder %s80, %s83
      %p92 = scmp.eq.s32.totalorder %s23, 3
      %p93 = por %p91, %p92
      %p94 = scmp.ne.s32.totalorder %s83, %s84
      %p95 = scmp.eq.s32.totalorder %s23, 0
      %p96 = por %p94, %p95
      %p97 = scmp.ne.s32.totalorder %s83, %s84
      %p98 = scmp.eq.s32.totalorder %s24, 3
      %p99 = por %p97, %p98
      %p101 = scmp.ne.s32.totalorder %s84, %s100
      %p102 = scmp.eq.s32.totalorder %s24, 0
      %p103 = por %p101, %p102
      %s105 = sadd.s32 %s104, 1
      %p108 = scmp.eq.s32.totalorder %s18, 3
      %p109 = scmp.ne.s32.totalorder %s104, %s106
      %p110 = scmp.eq.s32.totalorder %s18, 0
      %p111 = por %p109, %p110
      %p112 = scmp.ne.s32.totalorder %s104, %s106
      %p113 = scmp.eq.s32.totalorder %s23, 3
      %p114 = por %p112, %p113
      %p115 = scmp.ne.s32.totalorder %s106, %s107
      %p116 = scmp.eq.s32.totalorder %s23, 0
      %p117 = por %p115, %p116
      %p118 = scmp.ne.s32.totalorder %s106, %s107
      %p119 = scmp.eq.s32.totalorder %s24, 3
      %p120 = por %p118, %p119
      %p122 = scmp.ne.s32.totalorder %s107, %s121
      %p123 = scmp.eq.s32.totalorder %s24, 0
      %p124 = por %p122, %p123
      %s126 = sadd.s32 %s125, 1
      %p129 = scmp.eq.s32.totalorder %s18, 3
      %p130 = scmp.ne.s32.totalorder %s125, %s127
      %p131 = scmp.eq.s32.totalorder %s18, 0
      %p132 = por %p130, %p131
      %p133 = scmp.ne.s32.totalorder %s125, %s127
      %p134 = scmp.eq.s32.totalorder %s23, 3
      %p135 = por %p133, %p134
      %p136 = scmp.ne.s32.totalorder %s127, %s128
      %p137 = scmp.eq.s32.totalorder %s23, 0
      %p138 = por %p136, %p137
      %p139 = scmp.ne.s32.totalorder %s127, %s128
      %p140 = scmp.eq.s32.totalorder %s24, 3
      %p141 = por %p139, %p140
      %p143 = scmp.ne.s32.totalorder %s128, %s142
      %p144 = scmp.eq.s32.totalorder %s24, 0
      %p145 = por %p143, %p144
      %s147 = sadd.s32 %s146, 1
      %p150 = scmp.eq.s32.totalorder %s18, 3
      %p151 = scmp.ne.s32.totalorder %s146, %s148
      %p152 = scmp.eq.s32.totalorder %s18, 0
      %p153 = por %p151, %p152
      %p154 = scmp.ne.s32.totalorder %s146, %s148
      %p155 = scmp.eq.s32.totalorder %s23, 3
      %p156 = por %p154, %p155
      %p157 = scmp.ne.s32.totalorder %s148, %s149
      %p158 = scmp.eq.s32.totalorder %s23, 0
      %p159 = por %p157, %p158
      %p160 = scmp.ne.s32.totalorder %s148, %s149
      %p161 = scmp.eq.s32.totalorder %s24, 3
      %p162 = por %p160, %p161
      %p164 = scmp.ne.s32.totalorder %s149, %s163
      %p165 = scmp.eq.s32.totalorder %s24, 0
      %p166 = por %p164, %p165
      %s168 = sadd.s32 %s167, 1
      %p171 = scmp.eq.s32.totalorder %s18, 3
      %p172 = scmp.ne.s32.totalorder %s167, %s169
      %p173 = scmp.eq.s32.totalorder %s18, 0
      %p174 = por %p172, %p173
      %p175 = scmp.ne.s32.totalorder %s167, %s169
      %p176 = scmp.eq.s32.totalorder %s23, 3
      %p177 = por %p175, %p176
      %p178 = scmp.ne.s32.totalorder %s169, %s170
      %p179 = scmp.eq.s32.totalorder %s23, 0
      %p180 = por %p178, %p179
      %p181 = scmp.ne.s32.totalorder %s169, %s170
      %p182 = scmp.eq.s32.totalorder %s24, 3
      %p183 = por %p181, %p182
      %p185 = scmp.ne.s32.totalorder %s170, %s184
      %p186 = scmp.eq.s32.totalorder %s24, 0
      %p187 = por %p185, %p186
      %s189 = sadd.s32 %s188, 1
      %p192 = scmp.eq.s32.totalorder %s18, 3
      %p193 = scmp.ne.s32.totalorder %s188, %s190
      %p194 = scmp.eq.s32.totalorder %s18, 0
      %p195 = por %p193, %p194
      %p196 = scmp.ne.s32.totalorder %s188, %s190
      %p197 = scmp.eq.s32.totalorder %s23, 3
      %p198 = por %p196, %p197
      %p199 = scmp.ne.s32.totalorder %s190, %s191
      %p200 = scmp.eq.s32.totalorder %s23, 0
      %p201 = por %p199, %p200
      %p202 = scmp.ne.s32.totalorder %s190, %s191
      %p203 = scmp.eq.s32.totalorder %s24, 3
      %p204 = por %p202, %p203
      %p206 = scmp.ne.s32.totalorder %s191, %s205
      %p207 = scmp.eq.s32.totalorder %s24, 0
      %p208 = por %p206, %p207
      %s210 = sadd.s32 %s209, 1
      %p213 = scmp.eq.s32.totalorder %s18, 3
      %p214 = scmp.ne.s32.totalorder %s209, %s211
      %p215 = scmp.eq.s32.totalorder %s18, 0
      %p216 = por %p214, %p215
      %p217 = scmp.ne.s32.totalorder %s209, %s211
      %p218 = scmp.eq.s32.totalorder %s23, 3
      %p219 = por %p217, %p218
      %p220 = scmp.ne.s32.totalorder %s211, %s212
      %p221 = scmp.eq.s32.totalorder %s23, 0
      %p222 = por %p220, %p221
      %p223 = scmp.ne.s32.totalorder %s211, %s212
      %p224 = scmp.eq.s32.totalorder %s24, 3
      %p225 = por %p223, %p224
      %p227 = scmp.ne.s32.totalorder %s212, %s226
      %p228 = scmp.eq.s32.totalorder %s24, 0
      %p229 = por %p227, %p228
      %s231 = sadd.s32 %s230, 1
      %p234 = scmp.eq.s32.totalorder %s18, 3
      %p235 = scmp.ne.s32.totalorder %s230, %s232
      %p236 = scmp.eq.s32.totalorder %s18, 0
      %p237 = por %p235, %p236
      %p238 = scmp.ne.s32.totalorder %s230, %s232
      %p239 = scmp.eq.s32.totalorder %s23, 3
      %p240 = por %p238, %p239
      %p241 = scmp.ne.s32.totalorder %s232, %s233
      %p242 = scmp.eq.s32.totalorder %s23, 0
      %p243 = por %p241, %p242
      %p244 = scmp.ne.s32.totalorder %s232, %s233
      %p245 = scmp.eq.s32.totalorder %s24, 3
      %p246 = por %p244, %p245
      %p248 = scmp.ne.s32.totalorder %s233, %s247
      %p249 = scmp.eq.s32.totalorder %s24, 0
      %p250 = por %p248, %p249
      %p251 = scmp.le.s32.totalorder 1, %s18
      %p252 = scmp.lt.s32.totalorder %s18, 5
      %p253 = pnand %p251, %p252
      %p254 = pneg %p253
      // Predicated region
      $region9: #{drqnv1_forward.5} parent=5 // pred_check
        _
      $region10: #{drqnv1_forward.5} parent=5 // pred_check_branch
        %256 = sbr.rel (%p253) target = $region12
      $region11: #{drqnv1_forward.5} parent=5 // pred_region
        %s257 = ssub.s32 %s18, 1
        // Predicated region
        $region13: #{drqnv1_forward.5} parent=11 // pred_check
          %p258 = pneg %p117
        $region14: #{drqnv1_forward.5} parent=11 // pred_check_branch
          %260 = sbr.rel (%p258) target = $region16
        $region15: #{drqnv1_forward.5} parent=11 // pred_region
          _
        $region16: #{drqnv1_forward.5} parent=11 // pred_fallthru
          _
        // Predicated region
        $region17: #{drqnv1_forward.5} parent=11 // pred_check
          %p261 = pneg %p138
        $region18: #{drqnv1_forward.5} parent=11 // pred_check_branch
          %263 = sbr.rel (%p261) target = $region20
        $region19: #{drqnv1_forward.5} parent=11 // pred_region
          _
        $region20: #{drqnv1_forward.5} parent=11 // pred_fallthru
          _
        // Predicated region
        $region21: #{drqnv1_forward.5} parent=11 // pred_check
          %p264 = pneg %p159
        $region22: #{drqnv1_forward.5} parent=11 // pred_check_branch
          %266 = sbr.rel (%p264) target = $region24
        $region23: #{drqnv1_forward.5} parent=11 // pred_region
          _
        $region24: #{drqnv1_forward.5} parent=11 // pred_fallthru
          _
        // Predicated region
        $region25: #{drqnv1_forward.5} parent=11 // pred_check
          %p267 = pneg %p180
        $region26: #{drqnv1_forward.5} parent=11 // pred_check_branch
          %269 = sbr.rel (%p267) target = $region28
        $region27: #{drqnv1_forward.5} parent=11 // pred_region
          _
        $region28: #{drqnv1_forward.5} parent=11 // pred_fallthru
          _
        // Predicated region
        $region29: #{drqnv1_forward.5} parent=11 // pred_check
          %p270 = pneg %p201
        $region30: #{drqnv1_forward.5} parent=11 // pred_check_branch
          %272 = sbr.rel (%p270) target = $region32
        $region31: #{drqnv1_forward.5} parent=11 // pred_region
          _
        $region32: #{drqnv1_forward.5} parent=11 // pred_fallthru
          _
      $region12: #{drqnv1_forward.5} parent=5 // pred_fallthru
        _
      %p273 = scmp.lt.s32.totalorder %s18, 4
      // Predicated region
      $region33: #{drqnv1_forward.5} parent=5 // pred_check
        %p274 = pneg %p273
      $region34: #{drqnv1_forward.5} parent=5 // pred_check_branch
        %276 = sbr.rel (%p274) target = $region36
      $region35: #{drqnv1_forward.5} parent=5 // pred_region
        // Predicated region
        $region37: #{drqnv1_forward.5} parent=35 // pred_check
          %p277 = pneg %p38
        $region38: #{drqnv1_forward.5} parent=35 // pred_check_branch
          %279 = sbr.rel (%p277) target = $region40
        $region39: #{drqnv1_forward.5} parent=35 // pred_region
          %s280 = smul.u32 9, %s18
          %p281 = scmp.lt.s32.totalorder %s280, 35
          %s282 = scalar_select %p281, %s280, 35
          %s283 = smul.addr %s282, 2
          %s284 = scalar_lea.vmem %s0, %s283
          %s285 = smul.u32 9, %s18
        $region40: #{drqnv1_forward.5} parent=35 // pred_fallthru
          _
        // Predicated region
        $region41: #{drqnv1_forward.5} parent=35 // pred_check
          %p286 = pneg %p64
        $region42: #{drqnv1_forward.5} parent=35 // pred_check_branch
          %288 = sbr.rel (%p286) target = $region44
        $region43: #{drqnv1_forward.5} parent=35 // pred_region
          %s289 = sand.u32 %s54, 1
          %s290 = sand.u32 %s54, 1
          %s291 = smul.addr %s290, 4608
          %s292 = scalar_lea.vmem [#allocation4], %s291
          %s293 = smul.u32 9, %s18
          %s294 = smul.addr %s293, 8
          %s295 = scalar_lea.vmem %s1, %s294
          // Predicated region
          $region45: #{drqnv1_forward.5} parent=43 // pred_check
            _
          $region46: #{drqnv1_forward.5} parent=43 // pred_check_branch
            %297 = sbr.rel (0) target = $region48
          $region47: #{drqnv1_forward.5} parent=43 // pred_region
            // Predicated region
            $region49: #{drqnv1_forward.5} parent=47 // pred_check
              _
            $region50: #{drqnv1_forward.5} parent=47 // pred_check_branch
              %299 = sbr.rel (0) target = $region52
            $region51: #{drqnv1_forward.5} parent=47 // pred_region
              loop: start=0, step=1, limit=1
              $region53: #{drqnv1_forward.5} parent=51 // loop_pre_header
                _
              $region54: #{drqnv1_forward.5} parent=51 // loop_header
                %s301 = sphi 0, %s305
                %p302 = scmp.ge.s32.totalorder %s301, 1
                %s306 = sphi %s295, %s295
                %s307 = sphi %s292, %s292
              $region55: #{drqnv1_forward.5} parent=51 // loop_header_branch
                %304 = sbr.rel (%p302) target = $region59
              $region56: #{drqnv1_forward.5} parent=51 // loop_body
                %v308 = vld [vmem:[%s306] sm:$0xff]
                %309 = vst [vmem:[%s307] sm:$0xff] %v308
                %v310 = vld [vmem:[%s306 + $0x8] sm:$0xff]
                %311 = vst [vmem:[%s307 + $0x8] sm:$0xff] %v310
                %v312 = vld [vmem:[%s306 + $0x10] sm:$0xff]
                %313 = vst [vmem:[%s307 + $0x10] sm:$0xff] %v312
                %v314 = vld [vmem:[%s306 + $0x18] sm:$0xff]
                %315 = vst [vmem:[%s307 + $0x18] sm:$0xff] %v314
                %v316 = vld [vmem:[%s306 + $0x20] sm:$0xff]
                %317 = vst [vmem:[%s307 + $0x20] sm:$0xff] %v316
                %v318 = vld [vmem:[%s306 + $0x28] sm:$0xff]
                %319 = vst [vmem:[%s307 + $0x28] sm:$0xff] %v318
                %v320 = vld [vmem:[%s306 + $0x30] sm:$0xff]
                %321 = vst [vmem:[%s307 + $0x30] sm:$0xff] %v320
                %v322 = vld [vmem:[%s306 + $0x38] sm:$0xff]
                %323 = vst [vmem:[%s307 + $0x38] sm:$0xff] %v322
                %v324 = vld [vmem:[%s306 + $0x40] sm:$0xff]
                %325 = vst [vmem:[%s307 + $0x40] sm:$0xff] %v324
                %v326 = vld [vmem:[%s306 + $0x120] sm:$0xff]
                %327 = vst [vmem:[%s307 + $0x48] sm:$0xff] %v326
                %v328 = vld [vmem:[%s306 + $0x128] sm:$0xff]
                %329 = vst [vmem:[%s307 + $0x50] sm:$0xff] %v328
                %v330 = vld [vmem:[%s306 + $0x130] sm:$0xff]
                %331 = vst [vmem:[%s307 + $0x58] sm:$0xff] %v330
                %v332 = vld [vmem:[%s306 + $0x138] sm:$0xff]
                %333 = vst [vmem:[%s307 + $0x60] sm:$0xff] %v332
                %v334 = vld [vmem:[%s306 + $0x140] sm:$0xff]
                %335 = vst [vmem:[%s307 + $0x68] sm:$0xff] %v334
                %v336 = vld [vmem:[%s306 + $0x148] sm:$0xff]
                %337 = vst [vmem:[%s307 + $0x70] sm:$0xff] %v336
                %v338 = vld [vmem:[%s306 + $0x150] sm:$0xff]
                %339 = vst [vmem:[%s307 + $0x78] sm:$0xff] %v338
                %v340 = vld [vmem:[%s306 + $0x158] sm:$0xff]
                %341 = vst [vmem:[%s307 + $0x80] sm:$0xff] %v340
                %v342 = vld [vmem:[%s306 + $0x160] sm:$0xff]
                %343 = vst [vmem:[%s307 + $0x88] sm:$0xff] %v342
                %v344 = vld [vmem:[%s306 + $0x240] sm:$0xff]
                %345 = vst [vmem:[%s307 + $0x90] sm:$0xff] %v344
                %v346 = vld [vmem:[%s306 + $0x248] sm:$0xff]
                %347 = vst [vmem:[%s307 + $0x98] sm:$0xff] %v346
                %v348 = vld [vmem:[%s306 + $0x250] sm:$0xff]
                %349 = vst [vmem:[%s307 + $0xa0] sm:$0xff] %v348
                %v350 = vld [vmem:[%s306 + $0x258] sm:$0xff]
                %351 = vst [vmem:[%s307 + $0xa8] sm:$0xff] %v350
                %v352 = vld [vmem:[%s306 + $0x260] sm:$0xff]
                %353 = vst [vmem:[%s307 + $0xb0] sm:$0xff] %v352
                %v354 = vld [vmem:[%s306 + $0x268] sm:$0xff]
                %355 = vst [vmem:[%s307 + $0xb8] sm:$0xff] %v354
                %v356 = vld [vmem:[%s306 + $0x270] sm:$0xff]
                %357 = vst [vmem:[%s307 + $0xc0] sm:$0xff] %v356
                %v358 = vld [vmem:[%s306 + $0x278] sm:$0xff]
                %359 = vst [vmem:[%s307 + $0xc8] sm:$0xff] %v358
                %v360 = vld [vmem:[%s306 + $0x280] sm:$0xff]
                %361 = vst [vmem:[%s307 + $0xd0] sm:$0xff] %v360
                %v362 = vld [vmem:[%s306 + $0x360] sm:$0xff]
                %363 = vst [vmem:[%s307 + $0xd8] sm:$0xff] %v362
                %v364 = vld [vmem:[%s306 + $0x368] sm:$0xff]
                %365 = vst [vmem:[%s307 + $0xe0] sm:$0xff] %v364
                %v366 = vld [vmem:[%s306 + $0x370] sm:$0xff]
                %367 = vst [vmem:[%s307 + $0xe8] sm:$0xff] %v366
                %v368 = vld [vmem:[%s306 + $0x378] sm:$0xff]
                %369 = vst [vmem:[%s307 + $0xf0] sm:$0xff] %v368
                %v370 = vld [vmem:[%s306 + $0x380] sm:$0xff]
                %371 = vst [vmem:[%s307 + $0xf8] sm:$0xff] %v370
                %v372 = vld [vmem:[%s306 + $0x388] sm:$0xff]
                %373 = vst [vmem:[%s307 + $0x100] sm:$0xff] %v372
                %v374 = vld [vmem:[%s306 + $0x390] sm:$0xff]
                %375 = vst [vmem:[%s307 + $0x108] sm:$0xff] %v374
                %v376 = vld [vmem:[%s306 + $0x398] sm:$0xff]
                %377 = vst [vmem:[%s307 + $0x110] sm:$0xff] %v376
                %v378 = vld [vmem:[%s306 + $0x3a0] sm:$0xff]
                %379 = vst [vmem:[%s307 + $0x118] sm:$0xff] %v378
                %v380 = vld [vmem:[%s306 + $0x480] sm:$0xff]
                %381 = vst [vmem:[%s307 + $0x120] sm:$0xff] %v380
                %v382 = vld [vmem:[%s306 + $0x488] sm:$0xff]
                %383 = vst [vmem:[%s307 + $0x128] sm:$0xff] %v382
                %v384 = vld [vmem:[%s306 + $0x490] sm:$0xff]
                %385 = vst [vmem:[%s307 + $0x130] sm:$0xff] %v384
                %v386 = vld [vmem:[%s306 + $0x498] sm:$0xff]
                %387 = vst [vmem:[%s307 + $0x138] sm:$0xff] %v386
                %v388 = vld [vmem:[%s306 + $0x4a0] sm:$0xff]
                %389 = vst [vmem:[%s307 + $0x140] sm:$0xff] %v388
                %v390 = vld [vmem:[%s306 + $0x4a8] sm:$0xff]
                %391 = vst [vmem:[%s307 + $0x148] sm:$0xff] %v390
                %v392 = vld [vmem:[%s306 + $0x4b0] sm:$0xff]
                %393 = vst [vmem:[%s307 + $0x150] sm:$0xff] %v392
                %v394 = vld [vmem:[%s306 + $0x4b8] sm:$0xff]
                %395 = vst [vmem:[%s307 + $0x158] sm:$0xff] %v394
                %v396 = vld [vmem:[%s306 + $0x4c0] sm:$0xff]
                %397 = vst [vmem:[%s307 + $0x160] sm:$0xff] %v396
                %v398 = vld [vmem:[%s306 + $0x5a0] sm:$0xff]
                %399 = vst [vmem:[%s307 + $0x168] sm:$0xff] %v398
                %v400 = vld [vmem:[%s306 + $0x5a8] sm:$0xff]
                %401 = vst [vmem:[%s307 + $0x170] sm:$0xff] %v400
                %v402 = vld [vmem:[%s306 + $0x5b0] sm:$0xff]
                %403 = vst [vmem:[%s307 + $0x178] sm:$0xff] %v402
                %v404 = vld [vmem:[%s306 + $0x5b8] sm:$0xff]
                %405 = vst [vmem:[%s307 + $0x180] sm:$0xff] %v404
                %v406 = vld [vmem:[%s306 + $0x5c0] sm:$0xff]
                %407 = vst [vmem:[%s307 + $0x188] sm:$0xff] %v406
                %v408 = vld [vmem:[%s306 + $0x5c8] sm:$0xff]
                %409 = vst [vmem:[%s307 + $0x190] sm:$0xff] %v408
                %v410 = vld [vmem:[%s306 + $0x5d0] sm:$0xff]
                %411 = vst [vmem:[%s307 + $0x198] sm:$0xff] %v410
                %v412 = vld [vmem:[%s306 + $0x5d8] sm:$0xff]
                %413 = vst [vmem:[%s307 + $0x1a0] sm:$0xff] %v412
                %v414 = vld [vmem:[%s306 + $0x5e0] sm:$0xff]
                %415 = vst [vmem:[%s307 + $0x1a8] sm:$0xff] %v414
                %v416 = vld [vmem:[%s306 + $0x6c0] sm:$0xff]
                %417 = vst [vmem:[%s307 + $0x1b0] sm:$0xff] %v416
                %v418 = vld [vmem:[%s306 + $0x6c8] sm:$0xff]
                %419 = vst [vmem:[%s307 + $0x1b8] sm:$0xff] %v418
                %v420 = vld [vmem:[%s306 + $0x6d0] sm:$0xff]
                %421 = vst [vmem:[%s307 + $0x1c0] sm:$0xff] %v420
                %v422 = vld [vmem:[%s306 + $0x6d8] sm:$0xff]
                %423 = vst [vmem:[%s307 + $0x1c8] sm:$0xff] %v422
                %v424 = vld [vmem:[%s306 + $0x6e0] sm:$0xff]
                %425 = vst [vmem:[%s307 + $0x1d0] sm:$0xff] %v424
                %v426 = vld [vmem:[%s306 + $0x6e8] sm:$0xff]
                %427 = vst [vmem:[%s307 + $0x1d8] sm:$0xff] %v426
                %v428 = vld [vmem:[%s306 + $0x6f0] sm:$0xff]
                %429 = vst [vmem:[%s307 + $0x1e0] sm:$0xff] %v428
                %v430 = vld [vmem:[%s306 + $0x6f8] sm:$0xff]
                %431 = vst [vmem:[%s307 + $0x1e8] sm:$0xff] %v430
                %v432 = vld [vmem:[%s306 + $0x700] sm:$0xff]
                %433 = vst [vmem:[%s307 + $0x1f0] sm:$0xff] %v432
                %v434 = vld [vmem:[%s306 + $0x7e0] sm:$0xff]
                %435 = vst [vmem:[%s307 + $0x1f8] sm:$0xff] %v434
                %v436 = vld [vmem:[%s306 + $0x7e8] sm:$0xff]
                %437 = vst [vmem:[%s307 + $0x200] sm:$0xff] %v436
                %v438 = vld [vmem:[%s306 + $0x7f0] sm:$0xff]
                %439 = vst [vmem:[%s307 + $0x208] sm:$0xff] %v438
                %v440 = vld [vmem:[%s306 + $0x7f8] sm:$0xff]
                %441 = vst [vmem:[%s307 + $0x210] sm:$0xff] %v440
                %v442 = vld [vmem:[%s306 + $0x800] sm:$0xff]
                %443 = vst [vmem:[%s307 + $0x218] sm:$0xff] %v442
                %v444 = vld [vmem:[%s306 + $0x808] sm:$0xff]
                %445 = vst [vmem:[%s307 + $0x220] sm:$0xff] %v444
                %v446 = vld [vmem:[%s306 + $0x810] sm:$0xff]
                %447 = vst [vmem:[%s307 + $0x228] sm:$0xff] %v446
                %v448 = vld [vmem:[%s306 + $0x818] sm:$0xff]
                %449 = vst [vmem:[%s307 + $0x230] sm:$0xff] %v448
                %v450 = vld [vmem:[%s306 + $0x820] sm:$0xff]
                %451 = vst [vmem:[%s307 + $0x238] sm:$0xff] %v450
                %v452 = vld [vmem:[%s306 + $0x900] sm:$0xff]
                %453 = vst [vmem:[%s307 + $0x240] sm:$0xff] %v452
                %v454 = vld [vmem:[%s306 + $0x908] sm:$0xff]
                %455 = vst [vmem:[%s307 + $0x248] sm:$0xff] %v454
                %v456 = vld [vmem:[%s306 + $0x910] sm:$0xff]
                %457 = vst [vmem:[%s307 + $0x250] sm:$0xff] %v456
                %v458 = vld [vmem:[%s306 + $0x918] sm:$0xff]
                %459 = vst [vmem:[%s307 + $0x258] sm:$0xff] %v458
                %v460 = vld [vmem:[%s306 + $0x920] sm:$0xff]
                %461 = vst [vmem:[%s307 + $0x260] sm:$0xff] %v460
                %v462 = vld [vmem:[%s306 + $0x928] sm:$0xff]
                %463 = vst [vmem:[%s307 + $0x268] sm:$0xff] %v462
                %v464 = vld [vmem:[%s306 + $0x930] sm:$0xff]
                %465 = vst [vmem:[%s307 + $0x270] sm:$0xff] %v464
                %v466 = vld [vmem:[%s306 + $0x938] sm:$0xff]
                %467 = vst [vmem:[%s307 + $0x278] sm:$0xff] %v466
                %v468 = vld [vmem:[%s306 + $0x940] sm:$0xff]
                %469 = vst [vmem:[%s307 + $0x280] sm:$0xff] %v468
                %v470 = vld [vmem:[%s306 + $0xa20] sm:$0xff]
                %471 = vst [vmem:[%s307 + $0x288] sm:$0xff] %v470
                %v472 = vld [vmem:[%s306 + $0xa28] sm:$0xff]
                %473 = vst [vmem:[%s307 + $0x290] sm:$0xff] %v472
                %v474 = vld [vmem:[%s306 + $0xa30] sm:$0xff]
                %475 = vst [vmem:[%s307 + $0x298] sm:$0xff] %v474
                %v476 = vld [vmem:[%s306 + $0xa38] sm:$0xff]
                %477 = vst [vmem:[%s307 + $0x2a0] sm:$0xff] %v476
                %v478 = vld [vmem:[%s306 + $0xa40] sm:$0xff]
                %479 = vst [vmem:[%s307 + $0x2a8] sm:$0xff] %v478
                %v480 = vld [vmem:[%s306 + $0xa48] sm:$0xff]
                %481 = vst [vmem:[%s307 + $0x2b0] sm:$0xff] %v480
                %v482 = vld [vmem:[%s306 + $0xa50] sm:$0xff]
                %483 = vst [vmem:[%s307 + $0x2b8] sm:$0xff] %v482
                %v484 = vld [vmem:[%s306 + $0xa58] sm:$0xff]
                %485 = vst [vmem:[%s307 + $0x2c0] sm:$0xff] %v484
                %v486 = vld [vmem:[%s306 + $0xa60] sm:$0xff]
                %487 = vst [vmem:[%s307 + $0x2c8] sm:$0xff] %v486
                %v488 = vld [vmem:[%s306 + $0xb40] sm:$0xff]
                %489 = vst [vmem:[%s307 + $0x2d0] sm:$0xff] %v488
                %v490 = vld [vmem:[%s306 + $0xb48] sm:$0xff]
                %491 = vst [vmem:[%s307 + $0x2d8] sm:$0xff] %v490
                %v492 = vld [vmem:[%s306 + $0xb50] sm:$0xff]
                %493 = vst [vmem:[%s307 + $0x2e0] sm:$0xff] %v492
                %v494 = vld [vmem:[%s306 + $0xb58] sm:$0xff]
                %495 = vst [vmem:[%s307 + $0x2e8] sm:$0xff] %v494
                %v496 = vld [vmem:[%s306 + $0xb60] sm:$0xff]
                %497 = vst [vmem:[%s307 + $0x2f0] sm:$0xff] %v496
                %v498 = vld [vmem:[%s306 + $0xb68] sm:$0xff]
                %499 = vst [vmem:[%s307 + $0x2f8] sm:$0xff] %v498
                %v500 = vld [vmem:[%s306 + $0xb70] sm:$0xff]
                %501 = vst [vmem:[%s307 + $0x300] sm:$0xff] %v500
                %v502 = vld [vmem:[%s306 + $0xb78] sm:$0xff]
                %503 = vst [vmem:[%s307 + $0x308] sm:$0xff] %v502
                %v504 = vld [vmem:[%s306 + $0xb80] sm:$0xff]
                %505 = vst [vmem:[%s307 + $0x310] sm:$0xff] %v504
                %v506 = vld [vmem:[%s306 + $0xc60] sm:$0xff]
                %507 = vst [vmem:[%s307 + $0x318] sm:$0xff] %v506
                %v508 = vld [vmem:[%s306 + $0xc68] sm:$0xff]
                %509 = vst [vmem:[%s307 + $0x320] sm:$0xff] %v508
                %v510 = vld [vmem:[%s306 + $0xc70] sm:$0xff]
                %511 = vst [vmem:[%s307 + $0x328] sm:$0xff] %v510
                %v512 = vld [vmem:[%s306 + $0xc78] sm:$0xff]
                %513 = vst [vmem:[%s307 + $0x330] sm:$0xff] %v512
                %v514 = vld [vmem:[%s306 + $0xc80] sm:$0xff]
                %515 = vst [vmem:[%s307 + $0x338] sm:$0xff] %v514
                %v516 = vld [vmem:[%s306 + $0xc88] sm:$0xff]
                %517 = vst [vmem:[%s307 + $0x340] sm:$0xff] %v516
                %v518 = vld [vmem:[%s306 + $0xc90] sm:$0xff]
                %519 = vst [vmem:[%s307 + $0x348] sm:$0xff] %v518
                %v520 = vld [vmem:[%s306 + $0xc98] sm:$0xff]
                %521 = vst [vmem:[%s307 + $0x350] sm:$0xff] %v520
                %v522 = vld [vmem:[%s306 + $0xca0] sm:$0xff]
                %523 = vst [vmem:[%s307 + $0x358] sm:$0xff] %v522
                %v524 = vld [vmem:[%s306 + $0xd80] sm:$0xff]
                %525 = vst [vmem:[%s307 + $0x360] sm:$0xff] %v524
                %v526 = vld [vmem:[%s306 + $0xd88] sm:$0xff]
                %527 = vst [vmem:[%s307 + $0x368] sm:$0xff] %v526
                %v528 = vld [vmem:[%s306 + $0xd90] sm:$0xff]
                %529 = vst [vmem:[%s307 + $0x370] sm:$0xff] %v528
                %v530 = vld [vmem:[%s306 + $0xd98] sm:$0xff]
                %531 = vst [vmem:[%s307 + $0x378] sm:$0xff] %v530
                %v532 = vld [vmem:[%s306 + $0xda0] sm:$0xff]
                %533 = vst [vmem:[%s307 + $0x380] sm:$0xff] %v532
                %v534 = vld [vmem:[%s306 + $0xda8] sm:$0xff]
                %535 = vst [vmem:[%s307 + $0x388] sm:$0xff] %v534
                %v536 = vld [vmem:[%s306 + $0xdb0] sm:$0xff]
                %537 = vst [vmem:[%s307 + $0x390] sm:$0xff] %v536
                %v538 = vld [vmem:[%s306 + $0xdb8] sm:$0xff]
                %539 = vst [vmem:[%s307 + $0x398] sm:$0xff] %v538
                %v540 = vld [vmem:[%s306 + $0xdc0] sm:$0xff]
                %541 = vst [vmem:[%s307 + $0x3a0] sm:$0xff] %v540
                %v542 = vld [vmem:[%s306 + $0xea0] sm:$0xff]
                %543 = vst [vmem:[%s307 + $0x3a8] sm:$0xff] %v542
                %v544 = vld [vmem:[%s306 + $0xea8] sm:$0xff]
                %545 = vst [vmem:[%s307 + $0x3b0] sm:$0xff] %v544
                %v546 = vld [vmem:[%s306 + $0xeb0] sm:$0xff]
                %547 = vst [vmem:[%s307 + $0x3b8] sm:$0xff] %v546
                %v548 = vld [vmem:[%s306 + $0xeb8] sm:$0xff]
                %549 = vst [vmem:[%s307 + $0x3c0] sm:$0xff] %v548
                %v550 = vld [vmem:[%s306 + $0xec0] sm:$0xff]
                %551 = vst [vmem:[%s307 + $0x3c8] sm:$0xff] %v550
                %v552 = vld [vmem:[%s306 + $0xec8] sm:$0xff]
                %553 = vst [vmem:[%s307 + $0x3d0] sm:$0xff] %v552
                %v554 = vld [vmem:[%s306 + $0xed0] sm:$0xff]
                %555 = vst [vmem:[%s307 + $0x3d8] sm:$0xff] %v554
                %v556 = vld [vmem:[%s306 + $0xed8] sm:$0xff]
                %557 = vst [vmem:[%s307 + $0x3e0] sm:$0xff] %v556
                %v558 = vld [vmem:[%s306 + $0xee0] sm:$0xff]
                %559 = vst [vmem:[%s307 + $0x3e8] sm:$0xff] %v558
                %v560 = vld [vmem:[%s306 + $0xfc0] sm:$0xff]
                %561 = vst [vmem:[%s307 + $0x3f0] sm:$0xff] %v560
                %v562 = vld [vmem:[%s306 + $0xfc8] sm:$0xff]
                %563 = vst [vmem:[%s307 + $0x3f8] sm:$0xff] %v562
                %v564 = vld [vmem:[%s306 + $0xfd0] sm:$0xff]
                %565 = vst [vmem:[%s307 + $0x400] sm:$0xff] %v564
                %v566 = vld [vmem:[%s306 + $0xfd8] sm:$0xff]
                %567 = vst [vmem:[%s307 + $0x408] sm:$0xff] %v566
                %v568 = vld [vmem:[%s306 + $0xfe0] sm:$0xff]
                %569 = vst [vmem:[%s307 + $0x410] sm:$0xff] %v568
                %v570 = vld [vmem:[%s306 + $0xfe8] sm:$0xff]
                %571 = vst [vmem:[%s307 + $0x418] sm:$0xff] %v570
                %v572 = vld [vmem:[%s306 + $0xff0] sm:$0xff]
                %573 = vst [vmem:[%s307 + $0x420] sm:$0xff] %v572
                %v574 = vld [vmem:[%s306 + $0xff8] sm:$0xff]
                %575 = vst [vmem:[%s307 + $0x428] sm:$0xff] %v574
                %v576 = vld [vmem:[%s306 + $0x1000] sm:$0xff]
                %577 = vst [vmem:[%s307 + $0x430] sm:$0xff] %v576
                %v578 = vld [vmem:[%s306 + $0x10e0] sm:$0xff]
                %579 = vst [vmem:[%s307 + $0x438] sm:$0xff] %v578
                %v580 = vld [vmem:[%s306 + $0x10e8] sm:$0xff]
                %581 = vst [vmem:[%s307 + $0x440] sm:$0xff] %v580
                %v582 = vld [vmem:[%s306 + $0x10f0] sm:$0xff]
                %583 = vst [vmem:[%s307 + $0x448] sm:$0xff] %v582
                %v584 = vld [vmem:[%s306 + $0x10f8] sm:$0xff]
                %585 = vst [vmem:[%s307 + $0x450] sm:$0xff] %v584
                %v586 = vld [vmem:[%s306 + $0x1100] sm:$0xff]
                %587 = vst [vmem:[%s307 + $0x458] sm:$0xff] %v586
                %v588 = vld [vmem:[%s306 + $0x1108] sm:$0xff]
                %589 = vst [vmem:[%s307 + $0x460] sm:$0xff] %v588
                %v590 = vld [vmem:[%s306 + $0x1110] sm:$0xff]
                %591 = vst [vmem:[%s307 + $0x468] sm:$0xff] %v590
                %v592 = vld [vmem:[%s306 + $0x1118] sm:$0xff]
                %593 = vst [vmem:[%s307 + $0x470] sm:$0xff] %v592
                %v594 = vld [vmem:[%s306 + $0x1120] sm:$0xff]
                %595 = vst [vmem:[%s307 + $0x478] sm:$0xff] %v594
                %v596 = vld [vmem:[%s306 + $0x1200] sm:$0xff]
                %597 = vst [vmem:[%s307 + $0x480] sm:$0xff] %v596
                %v598 = vld [vmem:[%s306 + $0x1208] sm:$0xff]
                %599 = vst [vmem:[%s307 + $0x488] sm:$0xff] %v598
                %v600 = vld [vmem:[%s306 + $0x1210] sm:$0xff]
                %601 = vst [vmem:[%s307 + $0x490] sm:$0xff] %v600
                %v602 = vld [vmem:[%s306 + $0x1218] sm:$0xff]
                %603 = vst [vmem:[%s307 + $0x498] sm:$0xff] %v602
                %v604 = vld [vmem:[%s306 + $0x1220] sm:$0xff]
                %605 = vst [vmem:[%s307 + $0x4a0] sm:$0xff] %v604
                %v606 = vld [vmem:[%s306 + $0x1228] sm:$0xff]
                %607 = vst [vmem:[%s307 + $0x4a8] sm:$0xff] %v606
                %v608 = vld [vmem:[%s306 + $0x1230] sm:$0xff]
                %609 = vst [vmem:[%s307 + $0x4b0] sm:$0xff] %v608
                %v610 = vld [vmem:[%s306 + $0x1238] sm:$0xff]
                %611 = vst [vmem:[%s307 + $0x4b8] sm:$0xff] %v610
                %v612 = vld [vmem:[%s306 + $0x1240] sm:$0xff]
                %613 = vst [vmem:[%s307 + $0x4c0] sm:$0xff] %v612
                %v614 = vld [vmem:[%s306 + $0x1320] sm:$0xff]
                %615 = vst [vmem:[%s307 + $0x4c8] sm:$0xff] %v614
                %v616 = vld [vmem:[%s306 + $0x1328] sm:$0xff]
                %617 = vst [vmem:[%s307 + $0x4d0] sm:$0xff] %v616
                %v618 = vld [vmem:[%s306 + $0x1330] sm:$0xff]
                %619 = vst [vmem:[%s307 + $0x4d8] sm:$0xff] %v618
                %v620 = vld [vmem:[%s306 + $0x1338] sm:$0xff]
                %621 = vst [vmem:[%s307 + $0x4e0] sm:$0xff] %v620
                %v622 = vld [vmem:[%s306 + $0x1340] sm:$0xff]
                %623 = vst [vmem:[%s307 + $0x4e8] sm:$0xff] %v622
                %v624 = vld [vmem:[%s306 + $0x1348] sm:$0xff]
                %625 = vst [vmem:[%s307 + $0x4f0] sm:$0xff] %v624
                %v626 = vld [vmem:[%s306 + $0x1350] sm:$0xff]
                %627 = vst [vmem:[%s307 + $0x4f8] sm:$0xff] %v626
                %v628 = vld [vmem:[%s306 + $0x1358] sm:$0xff]
                %629 = vst [vmem:[%s307 + $0x500] sm:$0xff] %v628
                %v630 = vld [vmem:[%s306 + $0x1360] sm:$0xff]
                %631 = vst [vmem:[%s307 + $0x508] sm:$0xff] %v630
                %v632 = vld [vmem:[%s306 + $0x1440] sm:$0xff]
                %633 = vst [vmem:[%s307 + $0x510] sm:$0xff] %v632
                %v634 = vld [vmem:[%s306 + $0x1448] sm:$0xff]
                %635 = vst [vmem:[%s307 + $0x518] sm:$0xff] %v634
                %v636 = vld [vmem:[%s306 + $0x1450] sm:$0xff]
                %637 = vst [vmem:[%s307 + $0x520] sm:$0xff] %v636
                %v638 = vld [vmem:[%s306 + $0x1458] sm:$0xff]
                %639 = vst [vmem:[%s307 + $0x528] sm:$0xff] %v638
                %v640 = vld [vmem:[%s306 + $0x1460] sm:$0xff]
                %641 = vst [vmem:[%s307 + $0x530] sm:$0xff] %v640
                %v642 = vld [vmem:[%s306 + $0x1468] sm:$0xff]
                %643 = vst [vmem:[%s307 + $0x538] sm:$0xff] %v642
                %v644 = vld [vmem:[%s306 + $0x1470] sm:$0xff]
                %645 = vst [vmem:[%s307 + $0x540] sm:$0xff] %v644
                %v646 = vld [vmem:[%s306 + $0x1478] sm:$0xff]
                %647 = vst [vmem:[%s307 + $0x548] sm:$0xff] %v646
                %v648 = vld [vmem:[%s306 + $0x1480] sm:$0xff]
                %649 = vst [vmem:[%s307 + $0x550] sm:$0xff] %v648
                %v650 = vld [vmem:[%s306 + $0x1560] sm:$0xff]
                %651 = vst [vmem:[%s307 + $0x558] sm:$0xff] %v650
                %v652 = vld [vmem:[%s306 + $0x1568] sm:$0xff]
                %653 = vst [vmem:[%s307 + $0x560] sm:$0xff] %v652
                %v654 = vld [vmem:[%s306 + $0x1570] sm:$0xff]
                %655 = vst [vmem:[%s307 + $0x568] sm:$0xff] %v654
                %v656 = vld [vmem:[%s306 + $0x1578] sm:$0xff]
                %657 = vst [vmem:[%s307 + $0x570] sm:$0xff] %v656
                %v658 = vld [vmem:[%s306 + $0x1580] sm:$0xff]
                %659 = vst [vmem:[%s307 + $0x578] sm:$0xff] %v658
                %v660 = vld [vmem:[%s306 + $0x1588] sm:$0xff]
                %661 = vst [vmem:[%s307 + $0x580] sm:$0xff] %v660
                %v662 = vld [vmem:[%s306 + $0x1590] sm:$0xff]
                %663 = vst [vmem:[%s307 + $0x588] sm:$0xff] %v662
                %v664 = vld [vmem:[%s306 + $0x1598] sm:$0xff]
                %665 = vst [vmem:[%s307 + $0x590] sm:$0xff] %v664
                %v666 = vld [vmem:[%s306 + $0x15a0] sm:$0xff]
                %667 = vst [vmem:[%s307 + $0x598] sm:$0xff] %v666
                %v668 = vld [vmem:[%s306 + $0x1680] sm:$0xff]
                %669 = vst [vmem:[%s307 + $0x5a0] sm:$0xff] %v668
                %v670 = vld [vmem:[%s306 + $0x1688] sm:$0xff]
                %671 = vst [vmem:[%s307 + $0x5a8] sm:$0xff] %v670
                %v672 = vld [vmem:[%s306 + $0x1690] sm:$0xff]
                %673 = vst [vmem:[%s307 + $0x5b0] sm:$0xff] %v672
                %v674 = vld [vmem:[%s306 + $0x1698] sm:$0xff]
                %675 = vst [vmem:[%s307 + $0x5b8] sm:$0xff] %v674
                %v676 = vld [vmem:[%s306 + $0x16a0] sm:$0xff]
                %677 = vst [vmem:[%s307 + $0x5c0] sm:$0xff] %v676
                %v678 = vld [vmem:[%s306 + $0x16a8] sm:$0xff]
                %679 = vst [vmem:[%s307 + $0x5c8] sm:$0xff] %v678
                %v680 = vld [vmem:[%s306 + $0x16b0] sm:$0xff]
                %681 = vst [vmem:[%s307 + $0x5d0] sm:$0xff] %v680
                %v682 = vld [vmem:[%s306 + $0x16b8] sm:$0xff]
                %683 = vst [vmem:[%s307 + $0x5d8] sm:$0xff] %v682
                %v684 = vld [vmem:[%s306 + $0x16c0] sm:$0xff]
                %685 = vst [vmem:[%s307 + $0x5e0] sm:$0xff] %v684
                %v686 = vld [vmem:[%s306 + $0x17a0] sm:$0xff]
                %687 = vst [vmem:[%s307 + $0x5e8] sm:$0xff] %v686
                %v688 = vld [vmem:[%s306 + $0x17a8] sm:$0xff]
                %689 = vst [vmem:[%s307 + $0x5f0] sm:$0xff] %v688
                %v690 = vld [vmem:[%s306 + $0x17b0] sm:$0xff]
                %691 = vst [vmem:[%s307 + $0x5f8] sm:$0xff] %v690
                %v692 = vld [vmem:[%s306 + $0x17b8] sm:$0xff]
                %693 = vst [vmem:[%s307 + $0x600] sm:$0xff] %v692
                %v694 = vld [vmem:[%s306 + $0x17c0] sm:$0xff]
                %695 = vst [vmem:[%s307 + $0x608] sm:$0xff] %v694
                %v696 = vld [vmem:[%s306 + $0x17c8] sm:$0xff]
                %697 = vst [vmem:[%s307 + $0x610] sm:$0xff] %v696
                %v698 = vld [vmem:[%s306 + $0x17d0] sm:$0xff]
                %699 = vst [vmem:[%s307 + $0x618] sm:$0xff] %v698
                %v700 = vld [vmem:[%s306 + $0x17d8] sm:$0xff]
                %701 = vst [vmem:[%s307 + $0x620] sm:$0xff] %v700
                %v702 = vld [vmem:[%s306 + $0x17e0] sm:$0xff]
                %703 = vst [vmem:[%s307 + $0x628] sm:$0xff] %v702
                %v704 = vld [vmem:[%s306 + $0x18c0] sm:$0xff]
                %705 = vst [vmem:[%s307 + $0x630] sm:$0xff] %v704
                %v706 = vld [vmem:[%s306 + $0x18c8] sm:$0xff]
                %707 = vst [vmem:[%s307 + $0x638] sm:$0xff] %v706
                %v708 = vld [vmem:[%s306 + $0x18d0] sm:$0xff]
                %709 = vst [vmem:[%s307 + $0x640] sm:$0xff] %v708
                %v710 = vld [vmem:[%s306 + $0x18d8] sm:$0xff]
                %711 = vst [vmem:[%s307 + $0x648] sm:$0xff] %v710
                %v712 = vld [vmem:[%s306 + $0x18e0] sm:$0xff]
                %713 = vst [vmem:[%s307 + $0x650] sm:$0xff] %v712
                %v714 = vld [vmem:[%s306 + $0x18e8] sm:$0xff]
                %715 = vst [vmem:[%s307 + $0x658] sm:$0xff] %v714
                %v716 = vld [vmem:[%s306 + $0x18f0] sm:$0xff]
                %717 = vst [vmem:[%s307 + $0x660] sm:$0xff] %v716
                %v718 = vld [vmem:[%s306 + $0x18f8] sm:$0xff]
                %719 = vst [vmem:[%s307 + $0x668] sm:$0xff] %v718
                %v720 = vld [vmem:[%s306 + $0x1900] sm:$0xff]
                %721 = vst [vmem:[%s307 + $0x670] sm:$0xff] %v720
                %v722 = vld [vmem:[%s306 + $0x19e0] sm:$0xff]
                %723 = vst [vmem:[%s307 + $0x678] sm:$0xff] %v722
                %v724 = vld [vmem:[%s306 + $0x19e8] sm:$0xff]
                %725 = vst [vmem:[%s307 + $0x680] sm:$0xff] %v724
                %v726 = vld [vmem:[%s306 + $0x19f0] sm:$0xff]
                %727 = vst [vmem:[%s307 + $0x688] sm:$0xff] %v726
                %v728 = vld [vmem:[%s306 + $0x19f8] sm:$0xff]
                %729 = vst [vmem:[%s307 + $0x690] sm:$0xff] %v728
                %v730 = vld [vmem:[%s306 + $0x1a00] sm:$0xff]
                %731 = vst [vmem:[%s307 + $0x698] sm:$0xff] %v730
                %v732 = vld [vmem:[%s306 + $0x1a08] sm:$0xff]
                %733 = vst [vmem:[%s307 + $0x6a0] sm:$0xff] %v732
                %v734 = vld [vmem:[%s306 + $0x1a10] sm:$0xff]
                %735 = vst [vmem:[%s307 + $0x6a8] sm:$0xff] %v734
                %v736 = vld [vmem:[%s306 + $0x1a18] sm:$0xff]
                %737 = vst [vmem:[%s307 + $0x6b0] sm:$0xff] %v736
                %v738 = vld [vmem:[%s306 + $0x1a20] sm:$0xff]
                %739 = vst [vmem:[%s307 + $0x6b8] sm:$0xff] %v738
                %v740 = vld [vmem:[%s306 + $0x1b00] sm:$0xff]
                %741 = vst [vmem:[%s307 + $0x6c0] sm:$0xff] %v740
                %v742 = vld [vmem:[%s306 + $0x1b08] sm:$0xff]
                %743 = vst [vmem:[%s307 + $0x6c8] sm:$0xff] %v742
                %v744 = vld [vmem:[%s306 + $0x1b10] sm:$0xff]
                %745 = vst [vmem:[%s307 + $0x6d0] sm:$0xff] %v744
                %v746 = vld [vmem:[%s306 + $0x1b18] sm:$0xff]
                %747 = vst [vmem:[%s307 + $0x6d8] sm:$0xff] %v746
                %v748 = vld [vmem:[%s306 + $0x1b20] sm:$0xff]
                %749 = vst [vmem:[%s307 + $0x6e0] sm:$0xff] %v748
                %v750 = vld [vmem:[%s306 + $0x1b28] sm:$0xff]
                %751 = vst [vmem:[%s307 + $0x6e8] sm:$0xff] %v750
                %v752 = vld [vmem:[%s306 + $0x1b30] sm:$0xff]
                %753 = vst [vmem:[%s307 + $0x6f0] sm:$0xff] %v752
                %v754 = vld [vmem:[%s306 + $0x1b38] sm:$0xff]
                %755 = vst [vmem:[%s307 + $0x6f8] sm:$0xff] %v754
                %v756 = vld [vmem:[%s306 + $0x1b40] sm:$0xff]
                %757 = vst [vmem:[%s307 + $0x700] sm:$0xff] %v756
                %v758 = vld [vmem:[%s306 + $0x1c20] sm:$0xff]
                %759 = vst [vmem:[%s307 + $0x708] sm:$0xff] %v758
                %v760 = vld [vmem:[%s306 + $0x1c28] sm:$0xff]
                %761 = vst [vmem:[%s307 + $0x710] sm:$0xff] %v760
                %v762 = vld [vmem:[%s306 + $0x1c30] sm:$0xff]
                %763 = vst [vmem:[%s307 + $0x718] sm:$0xff] %v762
                %v764 = vld [vmem:[%s306 + $0x1c38] sm:$0xff]
                %765 = vst [vmem:[%s307 + $0x720] sm:$0xff] %v764
                %v766 = vld [vmem:[%s306 + $0x1c40] sm:$0xff]
                %767 = vst [vmem:[%s307 + $0x728] sm:$0xff] %v766
                %v768 = vld [vmem:[%s306 + $0x1c48] sm:$0xff]
                %769 = vst [vmem:[%s307 + $0x730] sm:$0xff] %v768
                %v770 = vld [vmem:[%s306 + $0x1c50] sm:$0xff]
                %771 = vst [vmem:[%s307 + $0x738] sm:$0xff] %v770
                %v772 = vld [vmem:[%s306 + $0x1c58] sm:$0xff]
                %773 = vst [vmem:[%s307 + $0x740] sm:$0xff] %v772
                %v774 = vld [vmem:[%s306 + $0x1c60] sm:$0xff]
                %775 = vst [vmem:[%s307 + $0x748] sm:$0xff] %v774
                %v776 = vld [vmem:[%s306 + $0x1d40] sm:$0xff]
                %777 = vst [vmem:[%s307 + $0x750] sm:$0xff] %v776
                %v778 = vld [vmem:[%s306 + $0x1d48] sm:$0xff]
                %779 = vst [vmem:[%s307 + $0x758] sm:$0xff] %v778
                %v780 = vld [vmem:[%s306 + $0x1d50] sm:$0xff]
                %781 = vst [vmem:[%s307 + $0x760] sm:$0xff] %v780
                %v782 = vld [vmem:[%s306 + $0x1d58] sm:$0xff]
                %783 = vst [vmem:[%s307 + $0x768] sm:$0xff] %v782
                %v784 = vld [vmem:[%s306 + $0x1d60] sm:$0xff]
                %785 = vst [vmem:[%s307 + $0x770] sm:$0xff] %v784
                %v786 = vld [vmem:[%s306 + $0x1d68] sm:$0xff]
                %787 = vst [vmem:[%s307 + $0x778] sm:$0xff] %v786
                %v788 = vld [vmem:[%s306 + $0x1d70] sm:$0xff]
                %789 = vst [vmem:[%s307 + $0x780] sm:$0xff] %v788
                %v790 = vld [vmem:[%s306 + $0x1d78] sm:$0xff]
                %791 = vst [vmem:[%s307 + $0x788] sm:$0xff] %v790
                %v792 = vld [vmem:[%s306 + $0x1d80] sm:$0xff]
                %793 = vst [vmem:[%s307 + $0x790] sm:$0xff] %v792
                %v794 = vld [vmem:[%s306 + $0x1e60] sm:$0xff]
                %795 = vst [vmem:[%s307 + $0x798] sm:$0xff] %v794
                %v796 = vld [vmem:[%s306 + $0x1e68] sm:$0xff]
                %797 = vst [vmem:[%s307 + $0x7a0] sm:$0xff] %v796
                %v798 = vld [vmem:[%s306 + $0x1e70] sm:$0xff]
                %799 = vst [vmem:[%s307 + $0x7a8] sm:$0xff] %v798
                %v800 = vld [vmem:[%s306 + $0x1e78] sm:$0xff]
                %801 = vst [vmem:[%s307 + $0x7b0] sm:$0xff] %v800
                %v802 = vld [vmem:[%s306 + $0x1e80] sm:$0xff]
                %803 = vst [vmem:[%s307 + $0x7b8] sm:$0xff] %v802
                %v804 = vld [vmem:[%s306 + $0x1e88] sm:$0xff]
                %805 = vst [vmem:[%s307 + $0x7c0] sm:$0xff] %v804
                %v806 = vld [vmem:[%s306 + $0x1e90] sm:$0xff]
                %807 = vst [vmem:[%s307 + $0x7c8] sm:$0xff] %v806
                %v808 = vld [vmem:[%s306 + $0x1e98] sm:$0xff]
                %809 = vst [vmem:[%s307 + $0x7d0] sm:$0xff] %v808
                %v810 = vld [vmem:[%s306 + $0x1ea0] sm:$0xff]
                %811 = vst [vmem:[%s307 + $0x7d8] sm:$0xff] %v810
                %v812 = vld [vmem:[%s306 + $0x1f80] sm:$0xff]
                %813 = vst [vmem:[%s307 + $0x7e0] sm:$0xff] %v812
                %v814 = vld [vmem:[%s306 + $0x1f88] sm:$0xff]
                %815 = vst [vmem:[%s307 + $0x7e8] sm:$0xff] %v814
                %v816 = vld [vmem:[%s306 + $0x1f90] sm:$0xff]
                %817 = vst [vmem:[%s307 + $0x7f0] sm:$0xff] %v816
                %v818 = vld [vmem:[%s306 + $0x1f98] sm:$0xff]
                %819 = vst [vmem:[%s307 + $0x7f8] sm:$0xff] %v818
                %v820 = vld [vmem:[%s306 + $0x1fa0] sm:$0xff]
                %821 = vst [vmem:[%s307 + $0x800] sm:$0xff] %v820
                %v822 = vld [vmem:[%s306 + $0x1fa8] sm:$0xff]
                %823 = vst [vmem:[%s307 + $0x808] sm:$0xff] %v822
                %v824 = vld [vmem:[%s306 + $0x1fb0] sm:$0xff]
                %825 = vst [vmem:[%s307 + $0x810] sm:$0xff] %v824
                %v826 = vld [vmem:[%s306 + $0x1fb8] sm:$0xff]
                %827 = vst [vmem:[%s307 + $0x818] sm:$0xff] %v826
                %v828 = vld [vmem:[%s306 + $0x1fc0] sm:$0xff]
                %829 = vst [vmem:[%s307 + $0x820] sm:$0xff] %v828
                %v830 = vld [vmem:[%s306 + $0x20a0] sm:$0xff]
                %831 = vst [vmem:[%s307 + $0x828] sm:$0xff] %v830
                %v832 = vld [vmem:[%s306 + $0x20a8] sm:$0xff]
                %833 = vst [vmem:[%s307 + $0x830] sm:$0xff] %v832
                %v834 = vld [vmem:[%s306 + $0x20b0] sm:$0xff]
                %835 = vst [vmem:[%s307 + $0x838] sm:$0xff] %v834
                %v836 = vld [vmem:[%s306 + $0x20b8] sm:$0xff]
                %837 = vst [vmem:[%s307 + $0x840] sm:$0xff] %v836
                %v838 = vld [vmem:[%s306 + $0x20c0] sm:$0xff]
                %839 = vst [vmem:[%s307 + $0x848] sm:$0xff] %v838
                %v840 = vld [vmem:[%s306 + $0x20c8] sm:$0xff]
                %841 = vst [vmem:[%s307 + $0x850] sm:$0xff] %v840
                %v842 = vld [vmem:[%s306 + $0x20d0] sm:$0xff]
                %843 = vst [vmem:[%s307 + $0x858] sm:$0xff] %v842
                %v844 = vld [vmem:[%s306 + $0x20d8] sm:$0xff]
                %845 = vst [vmem:[%s307 + $0x860] sm:$0xff] %v844
                %v846 = vld [vmem:[%s306 + $0x20e0] sm:$0xff]
                %847 = vst [vmem:[%s307 + $0x868] sm:$0xff] %v846
                %v848 = vld [vmem:[%s306 + $0x21c0] sm:$0xff]
                %849 = vst [vmem:[%s307 + $0x870] sm:$0xff] %v848
                %v850 = vld [vmem:[%s306 + $0x21c8] sm:$0xff]
                %851 = vst [vmem:[%s307 + $0x878] sm:$0xff] %v850
                %v852 = vld [vmem:[%s306 + $0x21d0] sm:$0xff]
                %853 = vst [vmem:[%s307 + $0x880] sm:$0xff] %v852
                %v854 = vld [vmem:[%s306 + $0x21d8] sm:$0xff]
                %855 = vst [vmem:[%s307 + $0x888] sm:$0xff] %v854
                %v856 = vld [vmem:[%s306 + $0x21e0] sm:$0xff]
                %857 = vst [vmem:[%s307 + $0x890] sm:$0xff] %v856
                %v858 = vld [vmem:[%s306 + $0x21e8] sm:$0xff]
                %859 = vst [vmem:[%s307 + $0x898] sm:$0xff] %v858
                %v860 = vld [vmem:[%s306 + $0x21f0] sm:$0xff]
                %861 = vst [vmem:[%s307 + $0x8a0] sm:$0xff] %v860
                %v862 = vld [vmem:[%s306 + $0x21f8] sm:$0xff]
                %863 = vst [vmem:[%s307 + $0x8a8] sm:$0xff] %v862
                %v864 = vld [vmem:[%s306 + $0x2200] sm:$0xff]
                %865 = vst [vmem:[%s307 + $0x8b0] sm:$0xff] %v864
                %v866 = vld [vmem:[%s306 + $0x22e0] sm:$0xff]
                %867 = vst [vmem:[%s307 + $0x8b8] sm:$0xff] %v866
                %v868 = vld [vmem:[%s306 + $0x22e8] sm:$0xff]
                %869 = vst [vmem:[%s307 + $0x8c0] sm:$0xff] %v868
                %v870 = vld [vmem:[%s306 + $0x22f0] sm:$0xff]
                %871 = vst [vmem:[%s307 + $0x8c8] sm:$0xff] %v870
                %v872 = vld [vmem:[%s306 + $0x22f8] sm:$0xff]
                %873 = vst [vmem:[%s307 + $0x8d0] sm:$0xff] %v872
                %v874 = vld [vmem:[%s306 + $0x2300] sm:$0xff]
                %875 = vst [vmem:[%s307 + $0x8d8] sm:$0xff] %v874
                %v876 = vld [vmem:[%s306 + $0x2308] sm:$0xff]
                %877 = vst [vmem:[%s307 + $0x8e0] sm:$0xff] %v876
                %v878 = vld [vmem:[%s306 + $0x2310] sm:$0xff]
                %879 = vst [vmem:[%s307 + $0x8e8] sm:$0xff] %v878
                %v880 = vld [vmem:[%s306 + $0x2318] sm:$0xff]
                %881 = vst [vmem:[%s307 + $0x8f0] sm:$0xff] %v880
                %v882 = vld [vmem:[%s306 + $0x2320] sm:$0xff]
                %883 = vst [vmem:[%s307 + $0x8f8] sm:$0xff] %v882
                %v884 = vld [vmem:[%s306 + $0x2400] sm:$0xff]
                %885 = vst [vmem:[%s307 + $0x900] sm:$0xff] %v884
                %v886 = vld [vmem:[%s306 + $0x2408] sm:$0xff]
                %887 = vst [vmem:[%s307 + $0x908] sm:$0xff] %v886
                %v888 = vld [vmem:[%s306 + $0x2410] sm:$0xff]
                %889 = vst [vmem:[%s307 + $0x910] sm:$0xff] %v888
                %v890 = vld [vmem:[%s306 + $0x2418] sm:$0xff]
                %891 = vst [vmem:[%s307 + $0x918] sm:$0xff] %v890
                %v892 = vld [vmem:[%s306 + $0x2420] sm:$0xff]
                %893 = vst [vmem:[%s307 + $0x920] sm:$0xff] %v892
                %v894 = vld [vmem:[%s306 + $0x2428] sm:$0xff]
                %895 = vst [vmem:[%s307 + $0x928] sm:$0xff] %v894
                %v896 = vld [vmem:[%s306 + $0x2430] sm:$0xff]
                %897 = vst [vmem:[%s307 + $0x930] sm:$0xff] %v896
                %v898 = vld [vmem:[%s306 + $0x2438] sm:$0xff]
                %899 = vst [vmem:[%s307 + $0x938] sm:$0xff] %v898
                %v900 = vld [vmem:[%s306 + $0x2440] sm:$0xff]
                %901 = vst [vmem:[%s307 + $0x940] sm:$0xff] %v900
                %v902 = vld [vmem:[%s306 + $0x2520] sm:$0xff]
                %903 = vst [vmem:[%s307 + $0x948] sm:$0xff] %v902
                %v904 = vld [vmem:[%s306 + $0x2528] sm:$0xff]
                %905 = vst [vmem:[%s307 + $0x950] sm:$0xff] %v904
                %v906 = vld [vmem:[%s306 + $0x2530] sm:$0xff]
                %907 = vst [vmem:[%s307 + $0x958] sm:$0xff] %v906
                %v908 = vld [vmem:[%s306 + $0x2538] sm:$0xff]
                %909 = vst [vmem:[%s307 + $0x960] sm:$0xff] %v908
                %v910 = vld [vmem:[%s306 + $0x2540] sm:$0xff]
                %911 = vst [vmem:[%s307 + $0x968] sm:$0xff] %v910
                %v912 = vld [vmem:[%s306 + $0x2548] sm:$0xff]
                %913 = vst [vmem:[%s307 + $0x970] sm:$0xff] %v912
                %v914 = vld [vmem:[%s306 + $0x2550] sm:$0xff]
                %915 = vst [vmem:[%s307 + $0x978] sm:$0xff] %v914
                %v916 = vld [vmem:[%s306 + $0x2558] sm:$0xff]
                %917 = vst [vmem:[%s307 + $0x980] sm:$0xff] %v916
                %v918 = vld [vmem:[%s306 + $0x2560] sm:$0xff]
                %919 = vst [vmem:[%s307 + $0x988] sm:$0xff] %v918
                %v920 = vld [vmem:[%s306 + $0x2640] sm:$0xff]
                %921 = vst [vmem:[%s307 + $0x990] sm:$0xff] %v920
                %v922 = vld [vmem:[%s306 + $0x2648] sm:$0xff]
                %923 = vst [vmem:[%s307 + $0x998] sm:$0xff] %v922
                %v924 = vld [vmem:[%s306 + $0x2650] sm:$0xff]
                %925 = vst [vmem:[%s307 + $0x9a0] sm:$0xff] %v924
                %v926 = vld [vmem:[%s306 + $0x2658] sm:$0xff]
                %927 = vst [vmem:[%s307 + $0x9a8] sm:$0xff] %v926
                %v928 = vld [vmem:[%s306 + $0x2660] sm:$0xff]
                %929 = vst [vmem:[%s307 + $0x9b0] sm:$0xff] %v928
                %v930 = vld [vmem:[%s306 + $0x2668] sm:$0xff]
                %931 = vst [vmem:[%s307 + $0x9b8] sm:$0xff] %v930
                %v932 = vld [vmem:[%s306 + $0x2670] sm:$0xff]
                %933 = vst [vmem:[%s307 + $0x9c0] sm:$0xff] %v932
                %v934 = vld [vmem:[%s306 + $0x2678] sm:$0xff]
                %935 = vst [vmem:[%s307 + $0x9c8] sm:$0xff] %v934
                %v936 = vld [vmem:[%s306 + $0x2680] sm:$0xff]
                %937 = vst [vmem:[%s307 + $0x9d0] sm:$0xff] %v936
                %v938 = vld [vmem:[%s306 + $0x2760] sm:$0xff]
                %939 = vst [vmem:[%s307 + $0x9d8] sm:$0xff] %v938
                %v940 = vld [vmem:[%s306 + $0x2768] sm:$0xff]
                %941 = vst [vmem:[%s307 + $0x9e0] sm:$0xff] %v940
                %v942 = vld [vmem:[%s306 + $0x2770] sm:$0xff]
                %943 = vst [vmem:[%s307 + $0x9e8] sm:$0xff] %v942
                %v944 = vld [vmem:[%s306 + $0x2778] sm:$0xff]
                %945 = vst [vmem:[%s307 + $0x9f0] sm:$0xff] %v944
                %v946 = vld [vmem:[%s306 + $0x2780] sm:$0xff]
                %947 = vst [vmem:[%s307 + $0x9f8] sm:$0xff] %v946
                %v948 = vld [vmem:[%s306 + $0x2788] sm:$0xff]
                %949 = vst [vmem:[%s307 + $0xa00] sm:$0xff] %v948
                %v950 = vld [vmem:[%s306 + $0x2790] sm:$0xff]
                %951 = vst [vmem:[%s307 + $0xa08] sm:$0xff] %v950
                %v952 = vld [vmem:[%s306 + $0x2798] sm:$0xff]
                %953 = vst [vmem:[%s307 + $0xa10] sm:$0xff] %v952
                %v954 = vld [vmem:[%s306 + $0x27a0] sm:$0xff]
                %955 = vst [vmem:[%s307 + $0xa18] sm:$0xff] %v954
                %v956 = vld [vmem:[%s306 + $0x2880] sm:$0xff]
                %957 = vst [vmem:[%s307 + $0xa20] sm:$0xff] %v956
                %v958 = vld [vmem:[%s306 + $0x2888] sm:$0xff]
                %959 = vst [vmem:[%s307 + $0xa28] sm:$0xff] %v958
                %v960 = vld [vmem:[%s306 + $0x2890] sm:$0xff]
                %961 = vst [vmem:[%s307 + $0xa30] sm:$0xff] %v960
                %v962 = vld [vmem:[%s306 + $0x2898] sm:$0xff]
                %963 = vst [vmem:[%s307 + $0xa38] sm:$0xff] %v962
                %v964 = vld [vmem:[%s306 + $0x28a0] sm:$0xff]
                %965 = vst [vmem:[%s307 + $0xa40] sm:$0xff] %v964
                %v966 = vld [vmem:[%s306 + $0x28a8] sm:$0xff]
                %967 = vst [vmem:[%s307 + $0xa48] sm:$0xff] %v966
                %v968 = vld [vmem:[%s306 + $0x28b0] sm:$0xff]
                %969 = vst [vmem:[%s307 + $0xa50] sm:$0xff] %v968
                %v970 = vld [vmem:[%s306 + $0x28b8] sm:$0xff]
                %971 = vst [vmem:[%s307 + $0xa58] sm:$0xff] %v970
                %v972 = vld [vmem:[%s306 + $0x28c0] sm:$0xff]
                %973 = vst [vmem:[%s307 + $0xa60] sm:$0xff] %v972
                %v974 = vld [vmem:[%s306 + $0x29a0] sm:$0xff]
                %975 = vst [vmem:[%s307 + $0xa68] sm:$0xff] %v974
                %v976 = vld [vmem:[%s306 + $0x29a8] sm:$0xff]
                %977 = vst [vmem:[%s307 + $0xa70] sm:$0xff] %v976
                %v978 = vld [vmem:[%s306 + $0x29b0] sm:$0xff]
                %979 = vst [vmem:[%s307 + $0xa78] sm:$0xff] %v978
                %v980 = vld [vmem:[%s306 + $0x29b8] sm:$0xff]
                %981 = vst [vmem:[%s307 + $0xa80] sm:$0xff] %v980
                %v982 = vld [vmem:[%s306 + $0x29c0] sm:$0xff]
                %983 = vst [vmem:[%s307 + $0xa88] sm:$0xff] %v982
                %v984 = vld [vmem:[%s306 + $0x29c8] sm:$0xff]
                %985 = vst [vmem:[%s307 + $0xa90] sm:$0xff] %v984
                %v986 = vld [vmem:[%s306 + $0x29d0] sm:$0xff]
                %987 = vst [vmem:[%s307 + $0xa98] sm:$0xff] %v986
                %v988 = vld [vmem:[%s306 + $0x29d8] sm:$0xff]
                %989 = vst [vmem:[%s307 + $0xaa0] sm:$0xff] %v988
                %v990 = vld [vmem:[%s306 + $0x29e0] sm:$0xff]
                %991 = vst [vmem:[%s307 + $0xaa8] sm:$0xff] %v990
                %v992 = vld [vmem:[%s306 + $0x2ac0] sm:$0xff]
                %993 = vst [vmem:[%s307 + $0xab0] sm:$0xff] %v992
                %v994 = vld [vmem:[%s306 + $0x2ac8] sm:$0xff]
                %995 = vst [vmem:[%s307 + $0xab8] sm:$0xff] %v994
                %v996 = vld [vmem:[%s306 + $0x2ad0] sm:$0xff]
                %997 = vst [vmem:[%s307 + $0xac0] sm:$0xff] %v996
                %v998 = vld [vmem:[%s306 + $0x2ad8] sm:$0xff]
                %999 = vst [vmem:[%s307 + $0xac8] sm:$0xff] %v998
                %v1000 = vld [vmem:[%s306 + $0x2ae0] sm:$0xff]
                %1001 = vst [vmem:[%s307 + $0xad0] sm:$0xff] %v1000
                %v1002 = vld [vmem:[%s306 + $0x2ae8] sm:$0xff]
                %1003 = vst [vmem:[%s307 + $0xad8] sm:$0xff] %v1002
                %v1004 = vld [vmem:[%s306 + $0x2af0] sm:$0xff]
                %1005 = vst [vmem:[%s307 + $0xae0] sm:$0xff] %v1004
                %v1006 = vld [vmem:[%s306 + $0x2af8] sm:$0xff]
                %1007 = vst [vmem:[%s307 + $0xae8] sm:$0xff] %v1006
                %v1008 = vld [vmem:[%s306 + $0x2b00] sm:$0xff]
                %1009 = vst [vmem:[%s307 + $0xaf0] sm:$0xff] %v1008
                %v1010 = vld [vmem:[%s306 + $0x2be0] sm:$0xff]
                %1011 = vst [vmem:[%s307 + $0xaf8] sm:$0xff] %v1010
                %v1012 = vld [vmem:[%s306 + $0x2be8] sm:$0xff]
                %1013 = vst [vmem:[%s307 + $0xb00] sm:$0xff] %v1012
                %v1014 = vld [vmem:[%s306 + $0x2bf0] sm:$0xff]
                %1015 = vst [vmem:[%s307 + $0xb08] sm:$0xff] %v1014
                %v1016 = vld [vmem:[%s306 + $0x2bf8] sm:$0xff]
                %1017 = vst [vmem:[%s307 + $0xb10] sm:$0xff] %v1016
                %v1018 = vld [vmem:[%s306 + $0x2c00] sm:$0xff]
                %1019 = vst [vmem:[%s307 + $0xb18] sm:$0xff] %v1018
                %v1020 = vld [vmem:[%s306 + $0x2c08] sm:$0xff]
                %1021 = vst [vmem:[%s307 + $0xb20] sm:$0xff] %v1020
                %v1022 = vld [vmem:[%s306 + $0x2c10] sm:$0xff]
                %1023 = vst [vmem:[%s307 + $0xb28] sm:$0xff] %v1022
                %v1024 = vld [vmem:[%s306 + $0x2c18] sm:$0xff]
                %1025 = vst [vmem:[%s307 + $0xb30] sm:$0xff] %v1024
                %v1026 = vld [vmem:[%s306 + $0x2c20] sm:$0xff]
                %1027 = vst [vmem:[%s307 + $0xb38] sm:$0xff] %v1026
                %v1028 = vld [vmem:[%s306 + $0x2d00] sm:$0xff]
                %1029 = vst [vmem:[%s307 + $0xb40] sm:$0xff] %v1028
                %v1030 = vld [vmem:[%s306 + $0x2d08] sm:$0xff]
                %1031 = vst [vmem:[%s307 + $0xb48] sm:$0xff] %v1030
                %v1032 = vld [vmem:[%s306 + $0x2d10] sm:$0xff]
                %1033 = vst [vmem:[%s307 + $0xb50] sm:$0xff] %v1032
                %v1034 = vld [vmem:[%s306 + $0x2d18] sm:$0xff]
                %1035 = vst [vmem:[%s307 + $0xb58] sm:$0xff] %v1034
                %v1036 = vld [vmem:[%s306 + $0x2d20] sm:$0xff]
                %1037 = vst [vmem:[%s307 + $0xb60] sm:$0xff] %v1036
                %v1038 = vld [vmem:[%s306 + $0x2d28] sm:$0xff]
                %1039 = vst [vmem:[%s307 + $0xb68] sm:$0xff] %v1038
                %v1040 = vld [vmem:[%s306 + $0x2d30] sm:$0xff]
                %1041 = vst [vmem:[%s307 + $0xb70] sm:$0xff] %v1040
                %v1042 = vld [vmem:[%s306 + $0x2d38] sm:$0xff]
                %1043 = vst [vmem:[%s307 + $0xb78] sm:$0xff] %v1042
                %v1044 = vld [vmem:[%s306 + $0x2d40] sm:$0xff]
                %1045 = vst [vmem:[%s307 + $0xb80] sm:$0xff] %v1044
                %v1046 = vld [vmem:[%s306 + $0x2e20] sm:$0xff]
                %1047 = vst [vmem:[%s307 + $0xb88] sm:$0xff] %v1046
                %v1048 = vld [vmem:[%s306 + $0x2e28] sm:$0xff]
                %1049 = vst [vmem:[%s307 + $0xb90] sm:$0xff] %v1048
                %v1050 = vld [vmem:[%s306 + $0x2e30] sm:$0xff]
                %1051 = vst [vmem:[%s307 + $0xb98] sm:$0xff] %v1050
                %v1052 = vld [vmem:[%s306 + $0x2e38] sm:$0xff]
                %1053 = vst [vmem:[%s307 + $0xba0] sm:$0xff] %v1052
                %v1054 = vld [vmem:[%s306 + $0x2e40] sm:$0xff]
                %1055 = vst [vmem:[%s307 + $0xba8] sm:$0xff] %v1054
                %v1056 = vld [vmem:[%s306 + $0x2e48] sm:$0xff]
                %1057 = vst [vmem:[%s307 + $0xbb0] sm:$0xff] %v1056
                %v1058 = vld [vmem:[%s306 + $0x2e50] sm:$0xff]
                %1059 = vst [vmem:[%s307 + $0xbb8] sm:$0xff] %v1058
                %v1060 = vld [vmem:[%s306 + $0x2e58] sm:$0xff]
                %1061 = vst [vmem:[%s307 + $0xbc0] sm:$0xff] %v1060
                %v1062 = vld [vmem:[%s306 + $0x2e60] sm:$0xff]
                %1063 = vst [vmem:[%s307 + $0xbc8] sm:$0xff] %v1062
                %v1064 = vld [vmem:[%s306 + $0x2f40] sm:$0xff]
                %1065 = vst [vmem:[%s307 + $0xbd0] sm:$0xff] %v1064
                %v1066 = vld [vmem:[%s306 + $0x2f48] sm:$0xff]
                %1067 = vst [vmem:[%s307 + $0xbd8] sm:$0xff] %v1066
                %v1068 = vld [vmem:[%s306 + $0x2f50] sm:$0xff]
                %1069 = vst [vmem:[%s307 + $0xbe0] sm:$0xff] %v1068
                %v1070 = vld [vmem:[%s306 + $0x2f58] sm:$0xff]
                %1071 = vst [vmem:[%s307 + $0xbe8] sm:$0xff] %v1070
                %v1072 = vld [vmem:[%s306 + $0x2f60] sm:$0xff]
                %1073 = vst [vmem:[%s307 + $0xbf0] sm:$0xff] %v1072
                %v1074 = vld [vmem:[%s306 + $0x2f68] sm:$0xff]
                %1075 = vst [vmem:[%s307 + $0xbf8] sm:$0xff] %v1074
                %v1076 = vld [vmem:[%s306 + $0x2f70] sm:$0xff]
                %1077 = vst [vmem:[%s307 + $0xc00] sm:$0xff] %v1076
                %v1078 = vld [vmem:[%s306 + $0x2f78] sm:$0xff]
                %1079 = vst [vmem:[%s307 + $0xc08] sm:$0xff] %v1078
                %v1080 = vld [vmem:[%s306 + $0x2f80] sm:$0xff]
                %1081 = vst [vmem:[%s307 + $0xc10] sm:$0xff] %v1080
                %v1082 = vld [vmem:[%s306 + $0x3060] sm:$0xff]
                %1083 = vst [vmem:[%s307 + $0xc18] sm:$0xff] %v1082
                %v1084 = vld [vmem:[%s306 + $0x3068] sm:$0xff]
                %1085 = vst [vmem:[%s307 + $0xc20] sm:$0xff] %v1084
                %v1086 = vld [vmem:[%s306 + $0x3070] sm:$0xff]
                %1087 = vst [vmem:[%s307 + $0xc28] sm:$0xff] %v1086
                %v1088 = vld [vmem:[%s306 + $0x3078] sm:$0xff]
                %1089 = vst [vmem:[%s307 + $0xc30] sm:$0xff] %v1088
                %v1090 = vld [vmem:[%s306 + $0x3080] sm:$0xff]
                %1091 = vst [vmem:[%s307 + $0xc38] sm:$0xff] %v1090
                %v1092 = vld [vmem:[%s306 + $0x3088] sm:$0xff]
                %1093 = vst [vmem:[%s307 + $0xc40] sm:$0xff] %v1092
                %v1094 = vld [vmem:[%s306 + $0x3090] sm:$0xff]
                %1095 = vst [vmem:[%s307 + $0xc48] sm:$0xff] %v1094
                %v1096 = vld [vmem:[%s306 + $0x3098] sm:$0xff]
                %1097 = vst [vmem:[%s307 + $0xc50] sm:$0xff] %v1096
                %v1098 = vld [vmem:[%s306 + $0x30a0] sm:$0xff]
                %1099 = vst [vmem:[%s307 + $0xc58] sm:$0xff] %v1098
                %v1100 = vld [vmem:[%s306 + $0x3180] sm:$0xff]
                %1101 = vst [vmem:[%s307 + $0xc60] sm:$0xff] %v1100
                %v1102 = vld [vmem:[%s306 + $0x3188] sm:$0xff]
                %1103 = vst [vmem:[%s307 + $0xc68] sm:$0xff] %v1102
                %v1104 = vld [vmem:[%s306 + $0x3190] sm:$0xff]
                %1105 = vst [vmem:[%s307 + $0xc70] sm:$0xff] %v1104
                %v1106 = vld [vmem:[%s306 + $0x3198] sm:$0xff]
                %1107 = vst [vmem:[%s307 + $0xc78] sm:$0xff] %v1106
                %v1108 = vld [vmem:[%s306 + $0x31a0] sm:$0xff]
                %1109 = vst [vmem:[%s307 + $0xc80] sm:$0xff] %v1108
                %v1110 = vld [vmem:[%s306 + $0x31a8] sm:$0xff]
                %1111 = vst [vmem:[%s307 + $0xc88] sm:$0xff] %v1110
                %v1112 = vld [vmem:[%s306 + $0x31b0] sm:$0xff]
                %1113 = vst [vmem:[%s307 + $0xc90] sm:$0xff] %v1112
                %v1114 = vld [vmem:[%s306 + $0x31b8] sm:$0xff]
                %1115 = vst [vmem:[%s307 + $0xc98] sm:$0xff] %v1114
                %v1116 = vld [vmem:[%s306 + $0x31c0] sm:$0xff]
                %1117 = vst [vmem:[%s307 + $0xca0] sm:$0xff] %v1116
                %v1118 = vld [vmem:[%s306 + $0x32a0] sm:$0xff]
                %1119 = vst [vmem:[%s307 + $0xca8] sm:$0xff] %v1118
                %v1120 = vld [vmem:[%s306 + $0x32a8] sm:$0xff]
                %1121 = vst [vmem:[%s307 + $0xcb0] sm:$0xff] %v1120
                %v1122 = vld [vmem:[%s306 + $0x32b0] sm:$0xff]
                %1123 = vst [vmem:[%s307 + $0xcb8] sm:$0xff] %v1122
                %v1124 = vld [vmem:[%s306 + $0x32b8] sm:$0xff]
                %1125 = vst [vmem:[%s307 + $0xcc0] sm:$0xff] %v1124
                %v1126 = vld [vmem:[%s306 + $0x32c0] sm:$0xff]
                %1127 = vst [vmem:[%s307 + $0xcc8] sm:$0xff] %v1126
                %v1128 = vld [vmem:[%s306 + $0x32c8] sm:$0xff]
                %1129 = vst [vmem:[%s307 + $0xcd0] sm:$0xff] %v1128
                %v1130 = vld [vmem:[%s306 + $0x32d0] sm:$0xff]
                %1131 = vst [vmem:[%s307 + $0xcd8] sm:$0xff] %v1130
                %v1132 = vld [vmem:[%s306 + $0x32d8] sm:$0xff]
                %1133 = vst [vmem:[%s307 + $0xce0] sm:$0xff] %v1132
                %v1134 = vld [vmem:[%s306 + $0x32e0] sm:$0xff]
                %1135 = vst [vmem:[%s307 + $0xce8] sm:$0xff] %v1134
                %v1136 = vld [vmem:[%s306 + $0x33c0] sm:$0xff]
                %1137 = vst [vmem:[%s307 + $0xcf0] sm:$0xff] %v1136
                %v1138 = vld [vmem:[%s306 + $0x33c8] sm:$0xff]
                %1139 = vst [vmem:[%s307 + $0xcf8] sm:$0xff] %v1138
                %v1140 = vld [vmem:[%s306 + $0x33d0] sm:$0xff]
                %1141 = vst [vmem:[%s307 + $0xd00] sm:$0xff] %v1140
                %v1142 = vld [vmem:[%s306 + $0x33d8] sm:$0xff]
                %1143 = vst [vmem:[%s307 + $0xd08] sm:$0xff] %v1142
                %v1144 = vld [vmem:[%s306 + $0x33e0] sm:$0xff]
                %1145 = vst [vmem:[%s307 + $0xd10] sm:$0xff] %v1144
                %v1146 = vld [vmem:[%s306 + $0x33e8] sm:$0xff]
                %1147 = vst [vmem:[%s307 + $0xd18] sm:$0xff] %v1146
                %v1148 = vld [vmem:[%s306 + $0x33f0] sm:$0xff]
                %1149 = vst [vmem:[%s307 + $0xd20] sm:$0xff] %v1148
                %v1150 = vld [vmem:[%s306 + $0x33f8] sm:$0xff]
                %1151 = vst [vmem:[%s307 + $0xd28] sm:$0xff] %v1150
                %v1152 = vld [vmem:[%s306 + $0x3400] sm:$0xff]
                %1153 = vst [vmem:[%s307 + $0xd30] sm:$0xff] %v1152
                %v1154 = vld [vmem:[%s306 + $0x34e0] sm:$0xff]
                %1155 = vst [vmem:[%s307 + $0xd38] sm:$0xff] %v1154
                %v1156 = vld [vmem:[%s306 + $0x34e8] sm:$0xff]
                %1157 = vst [vmem:[%s307 + $0xd40] sm:$0xff] %v1156
                %v1158 = vld [vmem:[%s306 + $0x34f0] sm:$0xff]
                %1159 = vst [vmem:[%s307 + $0xd48] sm:$0xff] %v1158
                %v1160 = vld [vmem:[%s306 + $0x34f8] sm:$0xff]
                %1161 = vst [vmem:[%s307 + $0xd50] sm:$0xff] %v1160
                %v1162 = vld [vmem:[%s306 + $0x3500] sm:$0xff]
                %1163 = vst [vmem:[%s307 + $0xd58] sm:$0xff] %v1162
                %v1164 = vld [vmem:[%s306 + $0x3508] sm:$0xff]
                %1165 = vst [vmem:[%s307 + $0xd60] sm:$0xff] %v1164
                %v1166 = vld [vmem:[%s306 + $0x3510] sm:$0xff]
                %1167 = vst [vmem:[%s307 + $0xd68] sm:$0xff] %v1166
                %v1168 = vld [vmem:[%s306 + $0x3518] sm:$0xff]
                %1169 = vst [vmem:[%s307 + $0xd70] sm:$0xff] %v1168
                %v1170 = vld [vmem:[%s306 + $0x3520] sm:$0xff]
                %1171 = vst [vmem:[%s307 + $0xd78] sm:$0xff] %v1170
                %v1172 = vld [vmem:[%s306 + $0x3600] sm:$0xff]
                %1173 = vst [vmem:[%s307 + $0xd80] sm:$0xff] %v1172
                %v1174 = vld [vmem:[%s306 + $0x3608] sm:$0xff]
                %1175 = vst [vmem:[%s307 + $0xd88] sm:$0xff] %v1174
                %v1176 = vld [vmem:[%s306 + $0x3610] sm:$0xff]
                %1177 = vst [vmem:[%s307 + $0xd90] sm:$0xff] %v1176
                %v1178 = vld [vmem:[%s306 + $0x3618] sm:$0xff]
                %1179 = vst [vmem:[%s307 + $0xd98] sm:$0xff] %v1178
                %v1180 = vld [vmem:[%s306 + $0x3620] sm:$0xff]
                %1181 = vst [vmem:[%s307 + $0xda0] sm:$0xff] %v1180
                %v1182 = vld [vmem:[%s306 + $0x3628] sm:$0xff]
                %1183 = vst [vmem:[%s307 + $0xda8] sm:$0xff] %v1182
                %v1184 = vld [vmem:[%s306 + $0x3630] sm:$0xff]
                %1185 = vst [vmem:[%s307 + $0xdb0] sm:$0xff] %v1184
                %v1186 = vld [vmem:[%s306 + $0x3638] sm:$0xff]
                %1187 = vst [vmem:[%s307 + $0xdb8] sm:$0xff] %v1186
                %v1188 = vld [vmem:[%s306 + $0x3640] sm:$0xff]
                %1189 = vst [vmem:[%s307 + $0xdc0] sm:$0xff] %v1188
                %v1190 = vld [vmem:[%s306 + $0x3720] sm:$0xff]
                %1191 = vst [vmem:[%s307 + $0xdc8] sm:$0xff] %v1190
                %v1192 = vld [vmem:[%s306 + $0x3728] sm:$0xff]
                %1193 = vst [vmem:[%s307 + $0xdd0] sm:$0xff] %v1192
                %v1194 = vld [vmem:[%s306 + $0x3730] sm:$0xff]
                %1195 = vst [vmem:[%s307 + $0xdd8] sm:$0xff] %v1194
                %v1196 = vld [vmem:[%s306 + $0x3738] sm:$0xff]
                %1197 = vst [vmem:[%s307 + $0xde0] sm:$0xff] %v1196
                %v1198 = vld [vmem:[%s306 + $0x3740] sm:$0xff]
                %1199 = vst [vmem:[%s307 + $0xde8] sm:$0xff] %v1198
                %v1200 = vld [vmem:[%s306 + $0x3748] sm:$0xff]
                %1201 = vst [vmem:[%s307 + $0xdf0] sm:$0xff] %v1200
                %v1202 = vld [vmem:[%s306 + $0x3750] sm:$0xff]
                %1203 = vst [vmem:[%s307 + $0xdf8] sm:$0xff] %v1202
                %v1204 = vld [vmem:[%s306 + $0x3758] sm:$0xff]
                %1205 = vst [vmem:[%s307 + $0xe00] sm:$0xff] %v1204
                %v1206 = vld [vmem:[%s306 + $0x3760] sm:$0xff]
                %1207 = vst [vmem:[%s307 + $0xe08] sm:$0xff] %v1206
                %v1208 = vld [vmem:[%s306 + $0x3840] sm:$0xff]
                %1209 = vst [vmem:[%s307 + $0xe10] sm:$0xff] %v1208
                %v1210 = vld [vmem:[%s306 + $0x3848] sm:$0xff]
                %1211 = vst [vmem:[%s307 + $0xe18] sm:$0xff] %v1210
                %v1212 = vld [vmem:[%s306 + $0x3850] sm:$0xff]
                %1213 = vst [vmem:[%s307 + $0xe20] sm:$0xff] %v1212
                %v1214 = vld [vmem:[%s306 + $0x3858] sm:$0xff]
                %1215 = vst [vmem:[%s307 + $0xe28] sm:$0xff] %v1214
                %v1216 = vld [vmem:[%s306 + $0x3860] sm:$0xff]
                %1217 = vst [vmem:[%s307 + $0xe30] sm:$0xff] %v1216
                %v1218 = vld [vmem:[%s306 + $0x3868] sm:$0xff]
                %1219 = vst [vmem:[%s307 + $0xe38] sm:$0xff] %v1218
                %v1220 = vld [vmem:[%s306 + $0x3870] sm:$0xff]
                %1221 = vst [vmem:[%s307 + $0xe40] sm:$0xff] %v1220
                %v1222 = vld [vmem:[%s306 + $0x3878] sm:$0xff]
                %1223 = vst [vmem:[%s307 + $0xe48] sm:$0xff] %v1222
                %v1224 = vld [vmem:[%s306 + $0x3880] sm:$0xff]
                %1225 = vst [vmem:[%s307 + $0xe50] sm:$0xff] %v1224
                %v1226 = vld [vmem:[%s306 + $0x3960] sm:$0xff]
                %1227 = vst [vmem:[%s307 + $0xe58] sm:$0xff] %v1226
                %v1228 = vld [vmem:[%s306 + $0x3968] sm:$0xff]
                %1229 = vst [vmem:[%s307 + $0xe60] sm:$0xff] %v1228
                %v1230 = vld [vmem:[%s306 + $0x3970] sm:$0xff]
                %1231 = vst [vmem:[%s307 + $0xe68] sm:$0xff] %v1230
                %v1232 = vld [vmem:[%s306 + $0x3978] sm:$0xff]
                %1233 = vst [vmem:[%s307 + $0xe70] sm:$0xff] %v1232
                %v1234 = vld [vmem:[%s306 + $0x3980] sm:$0xff]
                %1235 = vst [vmem:[%s307 + $0xe78] sm:$0xff] %v1234
                %v1236 = vld [vmem:[%s306 + $0x3988] sm:$0xff]
                %1237 = vst [vmem:[%s307 + $0xe80] sm:$0xff] %v1236
                %v1238 = vld [vmem:[%s306 + $0x3990] sm:$0xff]
                %1239 = vst [vmem:[%s307 + $0xe88] sm:$0xff] %v1238
                %v1240 = vld [vmem:[%s306 + $0x3998] sm:$0xff]
                %1241 = vst [vmem:[%s307 + $0xe90] sm:$0xff] %v1240
                %v1242 = vld [vmem:[%s306 + $0x39a0] sm:$0xff]
                %1243 = vst [vmem:[%s307 + $0xe98] sm:$0xff] %v1242
                %v1244 = vld [vmem:[%s306 + $0x3a80] sm:$0xff]
                %1245 = vst [vmem:[%s307 + $0xea0] sm:$0xff] %v1244
                %v1246 = vld [vmem:[%s306 + $0x3a88] sm:$0xff]
                %1247 = vst [vmem:[%s307 + $0xea8] sm:$0xff] %v1246
                %v1248 = vld [vmem:[%s306 + $0x3a90] sm:$0xff]
                %1249 = vst [vmem:[%s307 + $0xeb0] sm:$0xff] %v1248
                %v1250 = vld [vmem:[%s306 + $0x3a98] sm:$0xff]
                %1251 = vst [vmem:[%s307 + $0xeb8] sm:$0xff] %v1250
                %v1252 = vld [vmem:[%s306 + $0x3aa0] sm:$0xff]
                %1253 = vst [vmem:[%s307 + $0xec0] sm:$0xff] %v1252
                %v1254 = vld [vmem:[%s306 + $0x3aa8] sm:$0xff]
                %1255 = vst [vmem:[%s307 + $0xec8] sm:$0xff] %v1254
                %v1256 = vld [vmem:[%s306 + $0x3ab0] sm:$0xff]
                %1257 = vst [vmem:[%s307 + $0xed0] sm:$0xff] %v1256
                %v1258 = vld [vmem:[%s306 + $0x3ab8] sm:$0xff]
                %1259 = vst [vmem:[%s307 + $0xed8] sm:$0xff] %v1258
                %v1260 = vld [vmem:[%s306 + $0x3ac0] sm:$0xff]
                %1261 = vst [vmem:[%s307 + $0xee0] sm:$0xff] %v1260
                %v1262 = vld [vmem:[%s306 + $0x3ba0] sm:$0xff]
                %1263 = vst [vmem:[%s307 + $0xee8] sm:$0xff] %v1262
                %v1264 = vld [vmem:[%s306 + $0x3ba8] sm:$0xff]
                %1265 = vst [vmem:[%s307 + $0xef0] sm:$0xff] %v1264
                %v1266 = vld [vmem:[%s306 + $0x3bb0] sm:$0xff]
                %1267 = vst [vmem:[%s307 + $0xef8] sm:$0xff] %v1266
                %v1268 = vld [vmem:[%s306 + $0x3bb8] sm:$0xff]
                %1269 = vst [vmem:[%s307 + $0xf00] sm:$0xff] %v1268
                %v1270 = vld [vmem:[%s306 + $0x3bc0] sm:$0xff]
                %1271 = vst [vmem:[%s307 + $0xf08] sm:$0xff] %v1270
                %v1272 = vld [vmem:[%s306 + $0x3bc8] sm:$0xff]
                %1273 = vst [vmem:[%s307 + $0xf10] sm:$0xff] %v1272
                %v1274 = vld [vmem:[%s306 + $0x3bd0] sm:$0xff]
                %1275 = vst [vmem:[%s307 + $0xf18] sm:$0xff] %v1274
                %v1276 = vld [vmem:[%s306 + $0x3bd8] sm:$0xff]
                %1277 = vst [vmem:[%s307 + $0xf20] sm:$0xff] %v1276
                %v1278 = vld [vmem:[%s306 + $0x3be0] sm:$0xff]
                %1279 = vst [vmem:[%s307 + $0xf28] sm:$0xff] %v1278
                %v1280 = vld [vmem:[%s306 + $0x3cc0] sm:$0xff]
                %1281 = vst [vmem:[%s307 + $0xf30] sm:$0xff] %v1280
                %v1282 = vld [vmem:[%s306 + $0x3cc8] sm:$0xff]
                %1283 = vst [vmem:[%s307 + $0xf38] sm:$0xff] %v1282
                %v1284 = vld [vmem:[%s306 + $0x3cd0] sm:$0xff]
                %1285 = vst [vmem:[%s307 + $0xf40] sm:$0xff] %v1284
                %v1286 = vld [vmem:[%s306 + $0x3cd8] sm:$0xff]
                %1287 = vst [vmem:[%s307 + $0xf48] sm:$0xff] %v1286
                %v1288 = vld [vmem:[%s306 + $0x3ce0] sm:$0xff]
                %1289 = vst [vmem:[%s307 + $0xf50] sm:$0xff] %v1288
                %v1290 = vld [vmem:[%s306 + $0x3ce8] sm:$0xff]
                %1291 = vst [vmem:[%s307 + $0xf58] sm:$0xff] %v1290
                %v1292 = vld [vmem:[%s306 + $0x3cf0] sm:$0xff]
                %1293 = vst [vmem:[%s307 + $0xf60] sm:$0xff] %v1292
                %v1294 = vld [vmem:[%s306 + $0x3cf8] sm:$0xff]
                %1295 = vst [vmem:[%s307 + $0xf68] sm:$0xff] %v1294
                %v1296 = vld [vmem:[%s306 + $0x3d00] sm:$0xff]
                %1297 = vst [vmem:[%s307 + $0xf70] sm:$0xff] %v1296
                %v1298 = vld [vmem:[%s306 + $0x3de0] sm:$0xff]
                %1299 = vst [vmem:[%s307 + $0xf78] sm:$0xff] %v1298
                %v1300 = vld [vmem:[%s306 + $0x3de8] sm:$0xff]
                %1301 = vst [vmem:[%s307 + $0xf80] sm:$0xff] %v1300
                %v1302 = vld [vmem:[%s306 + $0x3df0] sm:$0xff]
                %1303 = vst [vmem:[%s307 + $0xf88] sm:$0xff] %v1302
                %v1304 = vld [vmem:[%s306 + $0x3df8] sm:$0xff]
                %1305 = vst [vmem:[%s307 + $0xf90] sm:$0xff] %v1304
                %v1306 = vld [vmem:[%s306 + $0x3e00] sm:$0xff]
                %1307 = vst [vmem:[%s307 + $0xf98] sm:$0xff] %v1306
                %v1308 = vld [vmem:[%s306 + $0x3e08] sm:$0xff]
                %1309 = vst [vmem:[%s307 + $0xfa0] sm:$0xff] %v1308
                %v1310 = vld [vmem:[%s306 + $0x3e10] sm:$0xff]
                %1311 = vst [vmem:[%s307 + $0xfa8] sm:$0xff] %v1310
                %v1312 = vld [vmem:[%s306 + $0x3e18] sm:$0xff]
                %1313 = vst [vmem:[%s307 + $0xfb0] sm:$0xff] %v1312
                %v1314 = vld [vmem:[%s306 + $0x3e20] sm:$0xff]
                %1315 = vst [vmem:[%s307 + $0xfb8] sm:$0xff] %v1314
                %v1316 = vld [vmem:[%s306 + $0x3f00] sm:$0xff]
                %1317 = vst [vmem:[%s307 + $0xfc0] sm:$0xff] %v1316
                %v1318 = vld [vmem:[%s306 + $0x3f08] sm:$0xff]
                %1319 = vst [vmem:[%s307 + $0xfc8] sm:$0xff] %v1318
                %v1320 = vld [vmem:[%s306 + $0x3f10] sm:$0xff]
                %1321 = vst [vmem:[%s307 + $0xfd0] sm:$0xff] %v1320
                %v1322 = vld [vmem:[%s306 + $0x3f18] sm:$0xff]
                %1323 = vst [vmem:[%s307 + $0xfd8] sm:$0xff] %v1322
                %v1324 = vld [vmem:[%s306 + $0x3f20] sm:$0xff]
                %1325 = vst [vmem:[%s307 + $0xfe0] sm:$0xff] %v1324
                %v1326 = vld [vmem:[%s306 + $0x3f28] sm:$0xff]
                %1327 = vst [vmem:[%s307 + $0xfe8] sm:$0xff] %v1326
                %v1328 = vld [vmem:[%s306 + $0x3f30] sm:$0xff]
                %1329 = vst [vmem:[%s307 + $0xff0] sm:$0xff] %v1328
                %v1330 = vld [vmem:[%s306 + $0x3f38] sm:$0xff]
                %1331 = vst [vmem:[%s307 + $0xff8] sm:$0xff] %v1330
                %v1332 = vld [vmem:[%s306 + $0x3f40] sm:$0xff]
                %1333 = vst [vmem:[%s307 + $0x1000] sm:$0xff] %v1332
                %v1334 = vld [vmem:[%s306 + $0x4020] sm:$0xff]
                %1335 = vst [vmem:[%s307 + $0x1008] sm:$0xff] %v1334
                %v1336 = vld [vmem:[%s306 + $0x4028] sm:$0xff]
                %1337 = vst [vmem:[%s307 + $0x1010] sm:$0xff] %v1336
                %v1338 = vld [vmem:[%s306 + $0x4030] sm:$0xff]
                %1339 = vst [vmem:[%s307 + $0x1018] sm:$0xff] %v1338
                %v1340 = vld [vmem:[%s306 + $0x4038] sm:$0xff]
                %1341 = vst [vmem:[%s307 + $0x1020] sm:$0xff] %v1340
                %v1342 = vld [vmem:[%s306 + $0x4040] sm:$0xff]
                %1343 = vst [vmem:[%s307 + $0x1028] sm:$0xff] %v1342
                %v1344 = vld [vmem:[%s306 + $0x4048] sm:$0xff]
                %1345 = vst [vmem:[%s307 + $0x1030] sm:$0xff] %v1344
                %v1346 = vld [vmem:[%s306 + $0x4050] sm:$0xff]
                %1347 = vst [vmem:[%s307 + $0x1038] sm:$0xff] %v1346
                %v1348 = vld [vmem:[%s306 + $0x4058] sm:$0xff]
                %1349 = vst [vmem:[%s307 + $0x1040] sm:$0xff] %v1348
                %v1350 = vld [vmem:[%s306 + $0x4060] sm:$0xff]
                %1351 = vst [vmem:[%s307 + $0x1048] sm:$0xff] %v1350
                %v1352 = vld [vmem:[%s306 + $0x4140] sm:$0xff]
                %1353 = vst [vmem:[%s307 + $0x1050] sm:$0xff] %v1352
                %v1354 = vld [vmem:[%s306 + $0x4148] sm:$0xff]
                %1355 = vst [vmem:[%s307 + $0x1058] sm:$0xff] %v1354
                %v1356 = vld [vmem:[%s306 + $0x4150] sm:$0xff]
                %1357 = vst [vmem:[%s307 + $0x1060] sm:$0xff] %v1356
                %v1358 = vld [vmem:[%s306 + $0x4158] sm:$0xff]
                %1359 = vst [vmem:[%s307 + $0x1068] sm:$0xff] %v1358
                %v1360 = vld [vmem:[%s306 + $0x4160] sm:$0xff]
                %1361 = vst [vmem:[%s307 + $0x1070] sm:$0xff] %v1360
                %v1362 = vld [vmem:[%s306 + $0x4168] sm:$0xff]
                %1363 = vst [vmem:[%s307 + $0x1078] sm:$0xff] %v1362
                %v1364 = vld [vmem:[%s306 + $0x4170] sm:$0xff]
                %1365 = vst [vmem:[%s307 + $0x1080] sm:$0xff] %v1364
                %v1366 = vld [vmem:[%s306 + $0x4178] sm:$0xff]
                %1367 = vst [vmem:[%s307 + $0x1088] sm:$0xff] %v1366
                %v1368 = vld [vmem:[%s306 + $0x4180] sm:$0xff]
                %1369 = vst [vmem:[%s307 + $0x1090] sm:$0xff] %v1368
                %v1370 = vld [vmem:[%s306 + $0x4260] sm:$0xff]
                %1371 = vst [vmem:[%s307 + $0x1098] sm:$0xff] %v1370
                %v1372 = vld [vmem:[%s306 + $0x4268] sm:$0xff]
                %1373 = vst [vmem:[%s307 + $0x10a0] sm:$0xff] %v1372
                %v1374 = vld [vmem:[%s306 + $0x4270] sm:$0xff]
                %1375 = vst [vmem:[%s307 + $0x10a8] sm:$0xff] %v1374
                %v1376 = vld [vmem:[%s306 + $0x4278] sm:$0xff]
                %1377 = vst [vmem:[%s307 + $0x10b0] sm:$0xff] %v1376
                %v1378 = vld [vmem:[%s306 + $0x4280] sm:$0xff]
                %1379 = vst [vmem:[%s307 + $0x10b8] sm:$0xff] %v1378
                %v1380 = vld [vmem:[%s306 + $0x4288] sm:$0xff]
                %1381 = vst [vmem:[%s307 + $0x10c0] sm:$0xff] %v1380
                %v1382 = vld [vmem:[%s306 + $0x4290] sm:$0xff]
                %1383 = vst [vmem:[%s307 + $0x10c8] sm:$0xff] %v1382
                %v1384 = vld [vmem:[%s306 + $0x4298] sm:$0xff]
                %1385 = vst [vmem:[%s307 + $0x10d0] sm:$0xff] %v1384
                %v1386 = vld [vmem:[%s306 + $0x42a0] sm:$0xff]
                %1387 = vst [vmem:[%s307 + $0x10d8] sm:$0xff] %v1386
                %v1388 = vld [vmem:[%s306 + $0x4380] sm:$0xff]
                %1389 = vst [vmem:[%s307 + $0x10e0] sm:$0xff] %v1388
                %v1390 = vld [vmem:[%s306 + $0x4388] sm:$0xff]
                %1391 = vst [vmem:[%s307 + $0x10e8] sm:$0xff] %v1390
                %v1392 = vld [vmem:[%s306 + $0x4390] sm:$0xff]
                %1393 = vst [vmem:[%s307 + $0x10f0] sm:$0xff] %v1392
                %v1394 = vld [vmem:[%s306 + $0x4398] sm:$0xff]
                %1395 = vst [vmem:[%s307 + $0x10f8] sm:$0xff] %v1394
                %v1396 = vld [vmem:[%s306 + $0x43a0] sm:$0xff]
                %1397 = vst [vmem:[%s307 + $0x1100] sm:$0xff] %v1396
                %v1398 = vld [vmem:[%s306 + $0x43a8] sm:$0xff]
                %1399 = vst [vmem:[%s307 + $0x1108] sm:$0xff] %v1398
                %v1400 = vld [vmem:[%s306 + $0x43b0] sm:$0xff]
                %1401 = vst [vmem:[%s307 + $0x1110] sm:$0xff] %v1400
                %v1402 = vld [vmem:[%s306 + $0x43b8] sm:$0xff]
                %1403 = vst [vmem:[%s307 + $0x1118] sm:$0xff] %v1402
                %v1404 = vld [vmem:[%s306 + $0x43c0] sm:$0xff]
                %1405 = vst [vmem:[%s307 + $0x1120] sm:$0xff] %v1404
                %v1406 = vld [vmem:[%s306 + $0x44a0] sm:$0xff]
                %1407 = vst [vmem:[%s307 + $0x1128] sm:$0xff] %v1406
                %v1408 = vld [vmem:[%s306 + $0x44a8] sm:$0xff]
                %1409 = vst [vmem:[%s307 + $0x1130] sm:$0xff] %v1408
                %v1410 = vld [vmem:[%s306 + $0x44b0] sm:$0xff]
                %1411 = vst [vmem:[%s307 + $0x1138] sm:$0xff] %v1410
                %v1412 = vld [vmem:[%s306 + $0x44b8] sm:$0xff]
                %1413 = vst [vmem:[%s307 + $0x1140] sm:$0xff] %v1412
                %v1414 = vld [vmem:[%s306 + $0x44c0] sm:$0xff]
                %1415 = vst [vmem:[%s307 + $0x1148] sm:$0xff] %v1414
                %v1416 = vld [vmem:[%s306 + $0x44c8] sm:$0xff]
                %1417 = vst [vmem:[%s307 + $0x1150] sm:$0xff] %v1416
                %v1418 = vld [vmem:[%s306 + $0x44d0] sm:$0xff]
                %1419 = vst [vmem:[%s307 + $0x1158] sm:$0xff] %v1418
                %v1420 = vld [vmem:[%s306 + $0x44d8] sm:$0xff]
                %1421 = vst [vmem:[%s307 + $0x1160] sm:$0xff] %v1420
                %v1422 = vld [vmem:[%s306 + $0x44e0] sm:$0xff]
                %1423 = vst [vmem:[%s307 + $0x1168] sm:$0xff] %v1422
                %v1424 = vld [vmem:[%s306 + $0x45c0] sm:$0xff]
                %1425 = vst [vmem:[%s307 + $0x1170] sm:$0xff] %v1424
                %v1426 = vld [vmem:[%s306 + $0x45c8] sm:$0xff]
                %1427 = vst [vmem:[%s307 + $0x1178] sm:$0xff] %v1426
                %v1428 = vld [vmem:[%s306 + $0x45d0] sm:$0xff]
                %1429 = vst [vmem:[%s307 + $0x1180] sm:$0xff] %v1428
                %v1430 = vld [vmem:[%s306 + $0x45d8] sm:$0xff]
                %1431 = vst [vmem:[%s307 + $0x1188] sm:$0xff] %v1430
                %v1432 = vld [vmem:[%s306 + $0x45e0] sm:$0xff]
                %1433 = vst [vmem:[%s307 + $0x1190] sm:$0xff] %v1432
                %v1434 = vld [vmem:[%s306 + $0x45e8] sm:$0xff]
                %1435 = vst [vmem:[%s307 + $0x1198] sm:$0xff] %v1434
                %v1436 = vld [vmem:[%s306 + $0x45f0] sm:$0xff]
                %1437 = vst [vmem:[%s307 + $0x11a0] sm:$0xff] %v1436
                %v1438 = vld [vmem:[%s306 + $0x45f8] sm:$0xff]
                %1439 = vst [vmem:[%s307 + $0x11a8] sm:$0xff] %v1438
                %v1440 = vld [vmem:[%s306 + $0x4600] sm:$0xff]
                %1441 = vst [vmem:[%s307 + $0x11b0] sm:$0xff] %v1440
                %v1442 = vld [vmem:[%s306 + $0x46e0] sm:$0xff]
                %1443 = vst [vmem:[%s307 + $0x11b8] sm:$0xff] %v1442
                %v1444 = vld [vmem:[%s306 + $0x46e8] sm:$0xff]
                %1445 = vst [vmem:[%s307 + $0x11c0] sm:$0xff] %v1444
                %v1446 = vld [vmem:[%s306 + $0x46f0] sm:$0xff]
                %1447 = vst [vmem:[%s307 + $0x11c8] sm:$0xff] %v1446
                %v1448 = vld [vmem:[%s306 + $0x46f8] sm:$0xff]
                %1449 = vst [vmem:[%s307 + $0x11d0] sm:$0xff] %v1448
                %v1450 = vld [vmem:[%s306 + $0x4700] sm:$0xff]
                %1451 = vst [vmem:[%s307 + $0x11d8] sm:$0xff] %v1450
                %v1452 = vld [vmem:[%s306 + $0x4708] sm:$0xff]
                %1453 = vst [vmem:[%s307 + $0x11e0] sm:$0xff] %v1452
                %v1454 = vld [vmem:[%s306 + $0x4710] sm:$0xff]
                %1455 = vst [vmem:[%s307 + $0x11e8] sm:$0xff] %v1454
                %v1456 = vld [vmem:[%s306 + $0x4718] sm:$0xff]
                %1457 = vst [vmem:[%s307 + $0x11f0] sm:$0xff] %v1456
                %v1458 = vld [vmem:[%s306 + $0x4720] sm:$0xff]
                %1459 = vst [vmem:[%s307 + $0x11f8] sm:$0xff] %v1458
              $region57: #{drqnv1_forward.5} parent=51 // loop_footer
                %s305 = sadd.s32 1, %s301
              $region58: #{drqnv1_forward.5} parent=51 // loop_footer_branch
                %300 = sbr.rel target = $region54
              $region59: #{drqnv1_forward.5} parent=51 // loop_exit
                _
            $region52: #{drqnv1_forward.5} parent=47 // pred_fallthru
              _
            // Predicated region
            $region60: #{drqnv1_forward.5} parent=47 // pred_check
              _
            $region61: #{drqnv1_forward.5} parent=47 // pred_check_branch
              %1461 = sbr.rel target = $region63
            $region62: #{drqnv1_forward.5} parent=47 // pred_region
              _
            $region63: #{drqnv1_forward.5} parent=47 // pred_fallthru
              _
          $region48: #{drqnv1_forward.5} parent=43 // pred_fallthru
            _
          %1462 = vnop
        $region44: #{drqnv1_forward.5} parent=35 // pred_fallthru
          _
        // Predicated region
        $region64: #{drqnv1_forward.5} parent=35 // pred_check
          %p1463 = pneg %p90
        $region65: #{drqnv1_forward.5} parent=35 // pred_check_branch
          %1465 = sbr.rel (%p1463) target = $region67
        $region66: #{drqnv1_forward.5} parent=35 // pred_region
          %s1466 = sand.u32 %s80, 1
          %s1467 = sand.u32 %s80, 1
          %s1468 = smul.addr %s1467, 144
          %s1469 = scalar_lea.vmem [#allocation5], %s1468
          %s1470 = smul.u32 9, %s18
          %s1471 = smul.addr %s1470, 8
          %s1472 = scalar_lea.vmem %s2, %s1471
          // Predicated region
          $region68: #{drqnv1_forward.5} parent=66 // pred_check
            _
          $region69: #{drqnv1_forward.5} parent=66 // pred_check_branch
            %1474 = sbr.rel (0) target = $region71
          $region70: #{drqnv1_forward.5} parent=66 // pred_region
            // Predicated region
            $region72: #{drqnv1_forward.5} parent=70 // pred_check
              _
            $region73: #{drqnv1_forward.5} parent=70 // pred_check_branch
              %1476 = sbr.rel (0) target = $region75
            $region74: #{drqnv1_forward.5} parent=70 // pred_region
              loop: start=0, step=1, limit=1
              $region76: #{drqnv1_forward.5} parent=74 // loop_pre_header
                _
              $region77: #{drqnv1_forward.5} parent=74 // loop_header
                %s1478 = sphi 0, %s1482
                %p1479 = scmp.ge.s32.totalorder %s1478, 1
                %s1483 = sphi %s1472, %s1472
                %s1484 = sphi %s1469, %s1469
              $region78: #{drqnv1_forward.5} parent=74 // loop_header_branch
                %1481 = sbr.rel (%p1479) target = $region82
              $region79: #{drqnv1_forward.5} parent=74 // loop_body
                %v1485 = vld [vmem:[%s1483] sm:$0xff]
                %1486 = vst [vmem:[%s1484] sm:$0xff] %v1485
                %v1487 = vld [vmem:[%s1483 + $0x8] sm:$0xff]
                %1488 = vst [vmem:[%s1484 + $0x8] sm:$0xff] %v1487
                %v1489 = vld [vmem:[%s1483 + $0x10] sm:$0xff]
                %1490 = vst [vmem:[%s1484 + $0x10] sm:$0xff] %v1489
                %v1491 = vld [vmem:[%s1483 + $0x18] sm:$0xff]
                %1492 = vst [vmem:[%s1484 + $0x18] sm:$0xff] %v1491
                %v1493 = vld [vmem:[%s1483 + $0x20] sm:$0xff]
                %1494 = vst [vmem:[%s1484 + $0x20] sm:$0xff] %v1493
                %v1495 = vld [vmem:[%s1483 + $0x28] sm:$0xff]
                %1496 = vst [vmem:[%s1484 + $0x28] sm:$0xff] %v1495
                %v1497 = vld [vmem:[%s1483 + $0x30] sm:$0xff]
                %1498 = vst [vmem:[%s1484 + $0x30] sm:$0xff] %v1497
                %v1499 = vld [vmem:[%s1483 + $0x38] sm:$0xff]
                %1500 = vst [vmem:[%s1484 + $0x38] sm:$0xff] %v1499
                %v1501 = vld [vmem:[%s1483 + $0x40] sm:$0xff]
                %1502 = vst [vmem:[%s1484 + $0x40] sm:$0xff] %v1501
                %v1503 = vld [vmem:[%s1483 + $0x120] sm:$0xff]
                %1504 = vst [vmem:[%s1484 + $0x48] sm:$0xff] %v1503
                %v1505 = vld [vmem:[%s1483 + $0x128] sm:$0xff]
                %1506 = vst [vmem:[%s1484 + $0x50] sm:$0xff] %v1505
                %v1507 = vld [vmem:[%s1483 + $0x130] sm:$0xff]
                %1508 = vst [vmem:[%s1484 + $0x58] sm:$0xff] %v1507
                %v1509 = vld [vmem:[%s1483 + $0x138] sm:$0xff]
                %1510 = vst [vmem:[%s1484 + $0x60] sm:$0xff] %v1509
                %v1511 = vld [vmem:[%s1483 + $0x140] sm:$0xff]
                %1512 = vst [vmem:[%s1484 + $0x68] sm:$0xff] %v1511
                %v1513 = vld [vmem:[%s1483 + $0x148] sm:$0xff]
                %1514 = vst [vmem:[%s1484 + $0x70] sm:$0xff] %v1513
                %v1515 = vld [vmem:[%s1483 + $0x150] sm:$0xff]
                %1516 = vst [vmem:[%s1484 + $0x78] sm:$0xff] %v1515
                %v1517 = vld [vmem:[%s1483 + $0x158] sm:$0xff]
                %1518 = vst [vmem:[%s1484 + $0x80] sm:$0xff] %v1517
                %v1519 = vld [vmem:[%s1483 + $0x160] sm:$0xff]
                %1520 = vst [vmem:[%s1484 + $0x88] sm:$0xff] %v1519
              $region80: #{drqnv1_forward.5} parent=74 // loop_footer
                %s1482 = sadd.s32 1, %s1478
              $region81: #{drqnv1_forward.5} parent=74 // loop_footer_branch
                %1477 = sbr.rel target = $region77
              $region82: #{drqnv1_forward.5} parent=74 // loop_exit
                _
            $region75: #{drqnv1_forward.5} parent=70 // pred_fallthru
              _
            // Predicated region
            $region83: #{drqnv1_forward.5} parent=70 // pred_check
              _
            $region84: #{drqnv1_forward.5} parent=70 // pred_check_branch
              %1522 = sbr.rel target = $region86
            $region85: #{drqnv1_forward.5} parent=70 // pred_region
              _
            $region86: #{drqnv1_forward.5} parent=70 // pred_fallthru
              _
          $region71: #{drqnv1_forward.5} parent=66 // pred_fallthru
            _
          %1523 = vnop
        $region67: #{drqnv1_forward.5} parent=35 // pred_fallthru
          _
      $region36: #{drqnv1_forward.5} parent=5 // pred_fallthru
        _
      %p1524 = scmp.le.s32.totalorder 1, %s18
      %p1525 = scmp.lt.s32.totalorder %s18, 5
      %p1526 = pnand %p1524, %p1525
      %p1527 = pneg %p1526
      // Predicated region
      $region87: #{drqnv1_forward.5} parent=5 // pred_check
        _
      $region88: #{drqnv1_forward.5} parent=5 // pred_check_branch
        %1529 = sbr.rel (%p1526) target = $region90
      $region89: #{drqnv1_forward.5} parent=5 // pred_region
        %s1530 = ssub.s32 %s18, 1
        %s1531 = sand.u32 %s57, 1
        %s1532 = sand.u32 %s57, 1
        %s1533 = smul.addr %s1532, 4608
        %s1534 = scalar_lea.vmem [#allocation4], %s1533
        // Predicated region
        $region91: #{drqnv1_forward.5} parent=89 // pred_check
          %p1535 = pneg %p70
        $region92: #{drqnv1_forward.5} parent=89 // pred_check_branch
          %1537 = sbr.rel (%p1535) target = $region94
        $region93: #{drqnv1_forward.5} parent=89 // pred_region
          _
        $region94: #{drqnv1_forward.5} parent=89 // pred_fallthru
          _
        %s1538 = sand.u32 %s83, 1
        %s1539 = sand.u32 %s83, 1
        %s1540 = smul.addr %s1539, 144
        %s1541 = scalar_lea.vmem [#allocation5], %s1540
        // Predicated region
        $region95: #{drqnv1_forward.5} parent=89 // pred_check
          %p1542 = pneg %p96
        $region96: #{drqnv1_forward.5} parent=89 // pred_check_branch
          %1544 = sbr.rel (%p1542) target = $region98
        $region97: #{drqnv1_forward.5} parent=89 // pred_region
          _
        $region98: #{drqnv1_forward.5} parent=89 // pred_fallthru
          _
        %s1545 = smul.u32 9, %s23
        %p1546 = scmp.lt.s32.totalorder %s1545, 35
        %s1547 = scalar_select %p1546, %s1545, 35
        %s1548 = smul.addr %s1547, 2
        %s1549 = scalar_lea.vmem %s0, %s1548
        %p1550 = pneg %p44
        %p1551 = pneg %p41
        %s1552 = sand.u32 %s57, 1
        %s1553 = sand.u32 %s57, 1
        %s1554 = smul.addr %s1553, 4608
        %s1555 = scalar_lea.vmem [#allocation4], %s1554
        %p1556 = pneg %p70
        %p1557 = pneg %p67
        %s1558 = sand.u32 %s83, 1
        %s1559 = sand.u32 %s83, 1
        %s1560 = smul.addr %s1559, 144
        %s1561 = scalar_lea.vmem [#allocation5], %s1560
        %p1562 = pneg %p96
        %p1563 = pneg %p93
        %p1564 = pneg %p117
        %p1565 = pneg %p114
        %p1566 = pneg %p138
        %p1567 = pneg %p135
        %p1568 = pneg %p159
        %p1569 = pneg %p156
        %p1570 = pneg %p180
        %p1571 = pneg %p177
        %p1572 = pneg %p201
        %p1573 = pneg %p198
        %p1574 = pneg %p222
        %p1575 = pneg %p219
        %p1576 = pneg %p243
        %p1577 = pneg %p240
        %s1578 = smul.u32 9, %s23
        %p1579 = scmp.lt.s32.totalorder %s1578, 35
        %s1580 = scalar_select %p1579, %s1578, 35
        %s1581 = smul.addr %s1580, 2
        %s1582 = scalar_lea.vmem %s0, %s1581
        %s1583 = smul.u32 9, %s23
        %s1584 = smul.u32 9, %s23
        %s1585 = smul.u32 9, %s23
        %p1586 = scmp.eq.s32.totalorder %s23, 0
        // Predicated region
        $region99: #{drqnv1_forward.5} parent=89 // pred_check
          %p1587 = pneg %p1586
        $region100: #{drqnv1_forward.5} parent=89 // pred_check_branch
          %1589 = sbr.rel (%p1587) target = $region102
        $region101: #{drqnv1_forward.5} parent=89 // pred_region
          %1590 = vst [vmem:[#allocation2] sm:$0xff] 0.0
          %vm1591 = vcmask 123904
          %1592 = vst.msk [vmem:[#allocation3] sm:$0x3] %vm1591, 0.0
        $region102: #{drqnv1_forward.5} parent=89 // pred_fallthru
          _
        %v1593 = vld [vmem:[%s1582] sm:$0xff]
        %v1594 = vld [vmem:[%s1582 + $0x8] sm:$0xff]
        %v1595 = vld [vmem:[%s1582 + $0x10] sm:$0x3]
        %v1596 = vld [vmem:[#allocation2] sm:$0xff]
        %v1597 = vld [vmem:[%s1534] sm:$0xff]
        %v1598 = vld [vmem:[%s1534 + $0x8] sm:$0xff]
        %v1599 = vld [vmem:[%s1534 + $0x10] sm:$0xff]
        %v1600 = vld [vmem:[%s1534 + $0x18] sm:$0xff]
        %v1601 = vld [vmem:[%s1534 + $0x20] sm:$0xff]
        %v1602 = vld [vmem:[%s1534 + $0x28] sm:$0xff]
        %v1603 = vld [vmem:[%s1534 + $0x30] sm:$0xff]
        %v1604 = vld [vmem:[%s1534 + $0x38] sm:$0xff]
        %v1605 = vld [vmem:[%s1534 + $0x40] sm:$0xff]
        %v1606 = vld [vmem:[%s1534 + $0x48] sm:$0xff]
        %v1607 = vld [vmem:[%s1534 + $0x50] sm:$0xff]
        %v1608 = vld [vmem:[%s1534 + $0x58] sm:$0xff]
        %v1609 = vld [vmem:[%s1534 + $0x60] sm:$0xff]
        %v1610 = vld [vmem:[%s1534 + $0x68] sm:$0xff]
        %v1611 = vld [vmem:[%s1534 + $0x70] sm:$0xff]
        %v1612 = vld [vmem:[%s1534 + $0x78] sm:$0xff]
        %v1613 = vld [vmem:[%s1534 + $0x80] sm:$0xff]
        %v1614 = vld [vmem:[%s1534 + $0x88] sm:$0xff]
        %v1615 = vld [vmem:[%s1534 + $0x90] sm:$0xff]
        %v1616 = vld [vmem:[%s1534 + $0x98] sm:$0xff]
        %v1617 = vld [vmem:[%s1534 + $0xa0] sm:$0xff]
        %v1618 = vld [vmem:[%s1534 + $0xa8] sm:$0xff]
        %v1619 = vld [vmem:[%s1534 + $0xb0] sm:$0xff]
        %v1620 = vld [vmem:[%s1534 + $0xb8] sm:$0xff]
        %v1621 = vld [vmem:[%s1534 + $0xc0] sm:$0xff]
        %v1622 = vld [vmem:[%s1534 + $0xc8] sm:$0xff]
        %v1623 = vld [vmem:[%s1534 + $0xd0] sm:$0xff]
        %v1624 = vld [vmem:[%s1534 + $0xd8] sm:$0xff]
        %v1625 = vld [vmem:[%s1534 + $0xe0] sm:$0xff]
        %v1626 = vld [vmem:[%s1534 + $0xe8] sm:$0xff]
        %v1627 = vld [vmem:[%s1534 + $0xf0] sm:$0xff]
        %v1628 = vld [vmem:[%s1534 + $0xf8] sm:$0xff]
        %v1629 = vld [vmem:[%s1534 + $0x100] sm:$0xff]
        %v1630 = vld [vmem:[%s1534 + $0x108] sm:$0xff]
        %v1631 = vld [vmem:[%s1534 + $0x110] sm:$0xff]
        %v1632 = vld [vmem:[%s1534 + $0x118] sm:$0xff]
        %v1633 = vld [vmem:[%s1534 + $0x120] sm:$0xff]
        %v1634 = vld [vmem:[%s1534 + $0x128] sm:$0xff]
        %v1635 = vld [vmem:[%s1534 + $0x130] sm:$0xff]
        %v1636 = vld [vmem:[%s1534 + $0x138] sm:$0xff]
        %v1637 = vld [vmem:[%s1534 + $0x140] sm:$0xff]
        %v1638 = vld [vmem:[%s1534 + $0x148] sm:$0xff]
        %v1639 = vld [vmem:[%s1534 + $0x150] sm:$0xff]
        %v1640 = vld [vmem:[%s1534 + $0x158] sm:$0xff]
        %v1641 = vld [vmem:[%s1534 + $0x160] sm:$0xff]
        %v1642 = vld [vmem:[%s1534 + $0x168] sm:$0xff]
        %v1643 = vld [vmem:[%s1534 + $0x170] sm:$0xff]
        %v1644 = vld [vmem:[%s1534 + $0x178] sm:$0xff]
        %v1645 = vld [vmem:[%s1534 + $0x180] sm:$0xff]
        %v1646 = vld [vmem:[%s1534 + $0x188] sm:$0xff]
        %v1647 = vld [vmem:[%s1534 + $0x190] sm:$0xff]
        %v1648 = vld [vmem:[%s1534 + $0x198] sm:$0xff]
        %v1649 = vld [vmem:[%s1534 + $0x1a0] sm:$0xff]
        %v1650 = vld [vmem:[%s1534 + $0x1a8] sm:$0xff]
        %v1651 = vld [vmem:[%s1534 + $0x1b0] sm:$0xff]
        %v1652 = vld [vmem:[%s1534 + $0x1b8] sm:$0xff]
        %v1653 = vld [vmem:[%s1534 + $0x1c0] sm:$0xff]
        %v1654 = vld [vmem:[%s1534 + $0x1c8] sm:$0xff]
        %v1655 = vld [vmem:[%s1534 + $0x1d0] sm:$0xff]
        %v1656 = vld [vmem:[%s1534 + $0x1d8] sm:$0xff]
        %v1657 = vld [vmem:[%s1534 + $0x1e0] sm:$0xff]
        %v1658 = vld [vmem:[%s1534 + $0x1e8] sm:$0xff]
        %v1659 = vld [vmem:[%s1534 + $0x1f0] sm:$0xff]
        %v1660 = vld [vmem:[%s1534 + $0x1f8] sm:$0xff]
        %v1661 = vld [vmem:[%s1534 + $0x200] sm:$0xff]
        %v1662 = vld [vmem:[%s1534 + $0x208] sm:$0xff]
        %v1663 = vld [vmem:[%s1534 + $0x210] sm:$0xff]
        %v1664 = vld [vmem:[%s1534 + $0x218] sm:$0xff]
        %v1665 = vld [vmem:[%s1534 + $0x220] sm:$0xff]
        %v1666 = vld [vmem:[%s1534 + $0x228] sm:$0xff]
        %v1667 = vld [vmem:[%s1534 + $0x230] sm:$0xff]
        %v1668 = vld [vmem:[%s1534 + $0x238] sm:$0xff]
        %v1669 = vld [vmem:[%s1534 + $0x240] sm:$0xff]
        %v1670 = vld [vmem:[%s1534 + $0x248] sm:$0xff]
        %v1671 = vld [vmem:[%s1534 + $0x250] sm:$0xff]
        %v1672 = vld [vmem:[%s1534 + $0x258] sm:$0xff]
        %v1673 = vld [vmem:[%s1534 + $0x260] sm:$0xff]
        %v1674 = vld [vmem:[%s1534 + $0x268] sm:$0xff]
        %v1675 = vld [vmem:[%s1534 + $0x270] sm:$0xff]
        %v1676 = vld [vmem:[%s1534 + $0x278] sm:$0xff]
        %v1677 = vld [vmem:[%s1534 + $0x280] sm:$0xff]
        %v1678 = vld [vmem:[%s1534 + $0x288] sm:$0xff]
        %v1679 = vld [vmem:[%s1534 + $0x290] sm:$0xff]
        %v1680 = vld [vmem:[%s1534 + $0x298] sm:$0xff]
        %v1681 = vld [vmem:[%s1534 + $0x2a0] sm:$0xff]
        %v1682 = vld [vmem:[%s1534 + $0x2a8] sm:$0xff]
        %v1683 = vld [vmem:[%s1534 + $0x2b0] sm:$0xff]
        %v1684 = vld [vmem:[%s1534 + $0x2b8] sm:$0xff]
        %v1685 = vld [vmem:[%s1534 + $0x2c0] sm:$0xff]
        %v1686 = vld [vmem:[%s1534 + $0x2c8] sm:$0xff]
        %v1687 = vld [vmem:[%s1534 + $0x2d0] sm:$0xff]
        %v1688 = vld [vmem:[%s1534 + $0x2d8] sm:$0xff]
        %v1689 = vld [vmem:[%s1534 + $0x2e0] sm:$0xff]
        %v1690 = vld [vmem:[%s1534 + $0x2e8] sm:$0xff]
        %v1691 = vld [vmem:[%s1534 + $0x2f0] sm:$0xff]
        %v1692 = vld [vmem:[%s1534 + $0x2f8] sm:$0xff]
        %v1693 = vld [vmem:[%s1534 + $0x300] sm:$0xff]
        %v1694 = vld [vmem:[%s1534 + $0x308] sm:$0xff]
        %v1695 = vld [vmem:[%s1534 + $0x310] sm:$0xff]
        %v1696 = vld [vmem:[%s1534 + $0x318] sm:$0xff]
        %v1697 = vld [vmem:[%s1534 + $0x320] sm:$0xff]
        %v1698 = vld [vmem:[%s1534 + $0x328] sm:$0xff]
        %v1699 = vld [vmem:[%s1534 + $0x330] sm:$0xff]
        %v1700 = vld [vmem:[%s1534 + $0x338] sm:$0xff]
        %v1701 = vld [vmem:[%s1534 + $0x340] sm:$0xff]
        %v1702 = vld [vmem:[%s1534 + $0x348] sm:$0xff]
        %v1703 = vld [vmem:[%s1534 + $0x350] sm:$0xff]
        %v1704 = vld [vmem:[%s1534 + $0x358] sm:$0xff]
        %v1705 = vld [vmem:[%s1534 + $0x360] sm:$0xff]
        %v1706 = vld [vmem:[%s1534 + $0x368] sm:$0xff]
        %v1707 = vld [vmem:[%s1534 + $0x370] sm:$0xff]
        %v1708 = vld [vmem:[%s1534 + $0x378] sm:$0xff]
        %v1709 = vld [vmem:[%s1534 + $0x380] sm:$0xff]
        %v1710 = vld [vmem:[%s1534 + $0x388] sm:$0xff]
        %v1711 = vld [vmem:[%s1534 + $0x390] sm:$0xff]
        %v1712 = vld [vmem:[%s1534 + $0x398] sm:$0xff]
        %v1713 = vld [vmem:[%s1534 + $0x3a0] sm:$0xff]
        %v1714 = vld [vmem:[%s1534 + $0x3a8] sm:$0xff]
        %v1715 = vld [vmem:[%s1534 + $0x3b0] sm:$0xff]
        %v1716 = vld [vmem:[%s1534 + $0x3b8] sm:$0xff]
        %v1717 = vld [vmem:[%s1534 + $0x3c0] sm:$0xff]
        %v1718 = vld [vmem:[%s1534 + $0x3c8] sm:$0xff]
        %v1719 = vld [vmem:[%s1534 + $0x3d0] sm:$0xff]
        %v1720 = vld [vmem:[%s1534 + $0x3d8] sm:$0xff]
        %v1721 = vld [vmem:[%s1534 + $0x3e0] sm:$0xff]
        %v1722 = vld [vmem:[%s1534 + $0x3e8] sm:$0xff]
        %v1723 = vld [vmem:[%s1534 + $0x3f0] sm:$0xff]
        %v1724 = vld [vmem:[%s1534 + $0x3f8] sm:$0xff]
        %v1725 = vld [vmem:[%s1534 + $0x400] sm:$0xff]
        %v1726 = vld [vmem:[%s1534 + $0x408] sm:$0xff]
        %v1727 = vld [vmem:[%s1534 + $0x410] sm:$0xff]
        %v1728 = vld [vmem:[%s1534 + $0x418] sm:$0xff]
        %v1729 = vld [vmem:[%s1534 + $0x420] sm:$0xff]
        %v1730 = vld [vmem:[%s1534 + $0x428] sm:$0xff]
        %v1731 = vld [vmem:[%s1534 + $0x430] sm:$0xff]
        %v1732 = vld [vmem:[%s1534 + $0x438] sm:$0xff]
        %v1733 = vld [vmem:[%s1534 + $0x440] sm:$0xff]
        %v1734 = vld [vmem:[%s1534 + $0x448] sm:$0xff]
        %v1735 = vld [vmem:[%s1534 + $0x450] sm:$0xff]
        %v1736 = vld [vmem:[%s1534 + $0x458] sm:$0xff]
        %v1737 = vld [vmem:[%s1534 + $0x460] sm:$0xff]
        %v1738 = vld [vmem:[%s1534 + $0x468] sm:$0xff]
        %v1739 = vld [vmem:[%s1534 + $0x470] sm:$0xff]
        %v1740 = vld [vmem:[%s1534 + $0x478] sm:$0xff]
        %v1741 = vld [vmem:[%s1534 + $0x480] sm:$0xff]
        %v1742 = vld [vmem:[%s1534 + $0x488] sm:$0xff]
        %v1743 = vld [vmem:[%s1534 + $0x490] sm:$0xff]
        %v1744 = vld [vmem:[%s1534 + $0x498] sm:$0xff]
        %v1745 = vld [vmem:[%s1534 + $0x4a0] sm:$0xff]
        %v1746 = vld [vmem:[%s1534 + $0x4a8] sm:$0xff]
        %v1747 = vld [vmem:[%s1534 + $0x4b0] sm:$0xff]
        %v1748 = vld [vmem:[%s1534 + $0x4b8] sm:$0xff]
        %v1749 = vld [vmem:[%s1534 + $0x4c0] sm:$0xff]
        %v1750 = vld [vmem:[%s1534 + $0x4c8] sm:$0xff]
        %v1751 = vld [vmem:[%s1534 + $0x4d0] sm:$0xff]
        %v1752 = vld [vmem:[%s1534 + $0x4d8] sm:$0xff]
        %v1753 = vld [vmem:[%s1534 + $0x4e0] sm:$0xff]
        %v1754 = vld [vmem:[%s1534 + $0x4e8] sm:$0xff]
        %v1755 = vld [vmem:[%s1534 + $0x4f0] sm:$0xff]
        %v1756 = vld [vmem:[%s1534 + $0x4f8] sm:$0xff]
        %v1757 = vld [vmem:[%s1534 + $0x500] sm:$0xff]
        %v1758 = vld [vmem:[%s1534 + $0x508] sm:$0xff]
        %v1759 = vld [vmem:[%s1534 + $0x510] sm:$0xff]
        %v1760 = vld [vmem:[%s1534 + $0x518] sm:$0xff]
        %v1761 = vld [vmem:[%s1534 + $0x520] sm:$0xff]
        %v1762 = vld [vmem:[%s1534 + $0x528] sm:$0xff]
        %v1763 = vld [vmem:[%s1534 + $0x530] sm:$0xff]
        %v1764 = vld [vmem:[%s1534 + $0x538] sm:$0xff]
        %v1765 = vld [vmem:[%s1534 + $0x540] sm:$0xff]
        %v1766 = vld [vmem:[%s1534 + $0x548] sm:$0xff]
        %v1767 = vld [vmem:[%s1534 + $0x550] sm:$0xff]
        %v1768 = vld [vmem:[%s1534 + $0x558] sm:$0xff]
        %v1769 = vld [vmem:[%s1534 + $0x560] sm:$0xff]
        %v1770 = vld [vmem:[%s1534 + $0x568] sm:$0xff]
        %v1771 = vld [vmem:[%s1534 + $0x570] sm:$0xff]
        %v1772 = vld [vmem:[%s1534 + $0x578] sm:$0xff]
        %v1773 = vld [vmem:[%s1534 + $0x580] sm:$0xff]
        %v1774 = vld [vmem:[%s1534 + $0x588] sm:$0xff]
        %v1775 = vld [vmem:[%s1534 + $0x590] sm:$0xff]
        %v1776 = vld [vmem:[%s1534 + $0x598] sm:$0xff]
        %v1777 = vld [vmem:[%s1534 + $0x5a0] sm:$0xff]
        %v1778 = vld [vmem:[%s1534 + $0x5a8] sm:$0xff]
        %v1779 = vld [vmem:[%s1534 + $0x5b0] sm:$0xff]
        %v1780 = vld [vmem:[%s1534 + $0x5b8] sm:$0xff]
        %v1781 = vld [vmem:[%s1534 + $0x5c0] sm:$0xff]
        %v1782 = vld [vmem:[%s1534 + $0x5c8] sm:$0xff]
        %v1783 = vld [vmem:[%s1534 + $0x5d0] sm:$0xff]
        %v1784 = vld [vmem:[%s1534 + $0x5d8] sm:$0xff]
        %v1785 = vld [vmem:[%s1534 + $0x5e0] sm:$0xff]
        %v1786 = vld [vmem:[%s1534 + $0x5e8] sm:$0xff]
        %v1787 = vld [vmem:[%s1534 + $0x5f0] sm:$0xff]
        %v1788 = vld [vmem:[%s1534 + $0x5f8] sm:$0xff]
        %v1789 = vld [vmem:[%s1534 + $0x600] sm:$0xff]
        %v1790 = vld [vmem:[%s1534 + $0x608] sm:$0xff]
        %v1791 = vld [vmem:[%s1534 + $0x610] sm:$0xff]
        %v1792 = vld [vmem:[%s1534 + $0x618] sm:$0xff]
        %v1793 = vld [vmem:[%s1534 + $0x620] sm:$0xff]
        %v1794 = vld [vmem:[%s1534 + $0x628] sm:$0xff]
        %v1795 = vld [vmem:[%s1534 + $0x630] sm:$0xff]
        %v1796 = vld [vmem:[%s1534 + $0x638] sm:$0xff]
        %v1797 = vld [vmem:[%s1534 + $0x640] sm:$0xff]
        %v1798 = vld [vmem:[%s1534 + $0x648] sm:$0xff]
        %v1799 = vld [vmem:[%s1534 + $0x650] sm:$0xff]
        %v1800 = vld [vmem:[%s1534 + $0x658] sm:$0xff]
        %v1801 = vld [vmem:[%s1534 + $0x660] sm:$0xff]
        %v1802 = vld [vmem:[%s1534 + $0x668] sm:$0xff]
        %v1803 = vld [vmem:[%s1534 + $0x670] sm:$0xff]
        %v1804 = vld [vmem:[%s1534 + $0x678] sm:$0xff]
        %v1805 = vld [vmem:[%s1534 + $0x680] sm:$0xff]
        %v1806 = vld [vmem:[%s1534 + $0x688] sm:$0xff]
        %v1807 = vld [vmem:[%s1534 + $0x690] sm:$0xff]
        %v1808 = vld [vmem:[%s1534 + $0x698] sm:$0xff]
        %v1809 = vld [vmem:[%s1534 + $0x6a0] sm:$0xff]
        %v1810 = vld [vmem:[%s1534 + $0x6a8] sm:$0xff]
        %v1811 = vld [vmem:[%s1534 + $0x6b0] sm:$0xff]
        %v1812 = vld [vmem:[%s1534 + $0x6b8] sm:$0xff]
        %v1813 = vld [vmem:[%s1534 + $0x6c0] sm:$0xff]
        %v1814 = vld [vmem:[%s1534 + $0x6c8] sm:$0xff]
        %v1815 = vld [vmem:[%s1534 + $0x6d0] sm:$0xff]
        %v1816 = vld [vmem:[%s1534 + $0x6d8] sm:$0xff]
        %v1817 = vld [vmem:[%s1534 + $0x6e0] sm:$0xff]
        %v1818 = vld [vmem:[%s1534 + $0x6e8] sm:$0xff]
        %v1819 = vld [vmem:[%s1534 + $0x6f0] sm:$0xff]
        %v1820 = vld [vmem:[%s1534 + $0x6f8] sm:$0xff]
        %v1821 = vld [vmem:[%s1534 + $0x700] sm:$0xff]
        %v1822 = vld [vmem:[%s1534 + $0x708] sm:$0xff]
        %v1823 = vld [vmem:[%s1534 + $0x710] sm:$0xff]
        %v1824 = vld [vmem:[%s1534 + $0x718] sm:$0xff]
        %v1825 = vld [vmem:[%s1534 + $0x720] sm:$0xff]
        %v1826 = vld [vmem:[%s1534 + $0x728] sm:$0xff]
        %v1827 = vld [vmem:[%s1534 + $0x730] sm:$0xff]
        %v1828 = vld [vmem:[%s1534 + $0x738] sm:$0xff]
        %v1829 = vld [vmem:[%s1534 + $0x740] sm:$0xff]
        %v1830 = vld [vmem:[%s1534 + $0x748] sm:$0xff]
        %v1831 = vld [vmem:[%s1534 + $0x750] sm:$0xff]
        %v1832 = vld [vmem:[%s1534 + $0x758] sm:$0xff]
        %v1833 = vld [vmem:[%s1534 + $0x760] sm:$0xff]
        %v1834 = vld [vmem:[%s1534 + $0x768] sm:$0xff]
        %v1835 = vld [vmem:[%s1534 + $0x770] sm:$0xff]
        %v1836 = vld [vmem:[%s1534 + $0x778] sm:$0xff]
        %v1837 = vld [vmem:[%s1534 + $0x780] sm:$0xff]
        %v1838 = vld [vmem:[%s1534 + $0x788] sm:$0xff]
        %v1839 = vld [vmem:[%s1534 + $0x790] sm:$0xff]
        %v1840 = vld [vmem:[%s1534 + $0x798] sm:$0xff]
        %v1841 = vld [vmem:[%s1534 + $0x7a0] sm:$0xff]
        %v1842 = vld [vmem:[%s1534 + $0x7a8] sm:$0xff]
        %v1843 = vld [vmem:[%s1534 + $0x7b0] sm:$0xff]
        %v1844 = vld [vmem:[%s1534 + $0x7b8] sm:$0xff]
        %v1845 = vld [vmem:[%s1534 + $0x7c0] sm:$0xff]
        %v1846 = vld [vmem:[%s1534 + $0x7c8] sm:$0xff]
        %v1847 = vld [vmem:[%s1534 + $0x7d0] sm:$0xff]
        %v1848 = vld [vmem:[%s1534 + $0x7d8] sm:$0xff]
        %v1849 = vld [vmem:[%s1534 + $0x7e0] sm:$0xff]
        %v1850 = vld [vmem:[%s1534 + $0x7e8] sm:$0xff]
        %v1851 = vld [vmem:[%s1534 + $0x7f0] sm:$0xff]
        %v1852 = vld [vmem:[%s1534 + $0x7f8] sm:$0xff]
        %v1853 = vld [vmem:[%s1534 + $0x800] sm:$0xff]
        %v1854 = vld [vmem:[%s1534 + $0x808] sm:$0xff]
        %v1855 = vld [vmem:[%s1534 + $0x810] sm:$0xff]
        %v1856 = vld [vmem:[%s1534 + $0x818] sm:$0xff]
        %v1857 = vld [vmem:[%s1534 + $0x820] sm:$0xff]
        %v1858 = vld [vmem:[%s1534 + $0x828] sm:$0xff]
        %v1859 = vld [vmem:[%s1534 + $0x830] sm:$0xff]
        %v1860 = vld [vmem:[%s1534 + $0x838] sm:$0xff]
        %v1861 = vld [vmem:[%s1534 + $0x840] sm:$0xff]
        %v1862 = vld [vmem:[%s1534 + $0x848] sm:$0xff]
        %v1863 = vld [vmem:[%s1534 + $0x850] sm:$0xff]
        %v1864 = vld [vmem:[%s1534 + $0x858] sm:$0xff]
        %v1865 = vld [vmem:[%s1534 + $0x860] sm:$0xff]
        %v1866 = vld [vmem:[%s1534 + $0x868] sm:$0xff]
        %v1867 = vld [vmem:[%s1534 + $0x870] sm:$0xff]
        %v1868 = vld [vmem:[%s1534 + $0x878] sm:$0xff]
        %v1869 = vld [vmem:[%s1534 + $0x880] sm:$0xff]
        %v1870 = vld [vmem:[%s1534 + $0x888] sm:$0xff]
        %v1871 = vld [vmem:[%s1534 + $0x890] sm:$0xff]
        %v1872 = vld [vmem:[%s1534 + $0x898] sm:$0xff]
        %v1873 = vld [vmem:[%s1534 + $0x8a0] sm:$0xff]
        %v1874 = vld [vmem:[%s1534 + $0x8a8] sm:$0xff]
        %v1875 = vld [vmem:[%s1534 + $0x8b0] sm:$0xff]
        %v1876 = vld [vmem:[%s1534 + $0x8b8] sm:$0xff]
        %v1877 = vld [vmem:[%s1534 + $0x8c0] sm:$0xff]
        %v1878 = vld [vmem:[%s1534 + $0x8c8] sm:$0xff]
        %v1879 = vld [vmem:[%s1534 + $0x8d0] sm:$0xff]
        %v1880 = vld [vmem:[%s1534 + $0x8d8] sm:$0xff]
        %v1881 = vld [vmem:[%s1534 + $0x8e0] sm:$0xff]
        %v1882 = vld [vmem:[%s1534 + $0x8e8] sm:$0xff]
        %v1883 = vld [vmem:[%s1534 + $0x8f0] sm:$0xff]
        %v1884 = vld [vmem:[%s1534 + $0x8f8] sm:$0xff]
        %v1885 = vld [vmem:[%s1534 + $0x900] sm:$0xff]
        %v1886 = vld [vmem:[%s1534 + $0x908] sm:$0xff]
        %v1887 = vld [vmem:[%s1534 + $0x910] sm:$0xff]
        %v1888 = vld [vmem:[%s1534 + $0x918] sm:$0xff]
        %v1889 = vld [vmem:[%s1534 + $0x920] sm:$0xff]
        %v1890 = vld [vmem:[%s1534 + $0x928] sm:$0xff]
        %v1891 = vld [vmem:[%s1534 + $0x930] sm:$0xff]
        %v1892 = vld [vmem:[%s1534 + $0x938] sm:$0xff]
        %v1893 = vld [vmem:[%s1534 + $0x940] sm:$0xff]
        %v1894 = vld [vmem:[%s1534 + $0x948] sm:$0xff]
        %v1895 = vld [vmem:[%s1534 + $0x950] sm:$0xff]
        %v1896 = vld [vmem:[%s1534 + $0x958] sm:$0xff]
        %v1897 = vld [vmem:[%s1534 + $0x960] sm:$0xff]
        %v1898 = vld [vmem:[%s1534 + $0x968] sm:$0xff]
        %v1899 = vld [vmem:[%s1534 + $0x970] sm:$0xff]
        %v1900 = vld [vmem:[%s1534 + $0x978] sm:$0xff]
        %v1901 = vld [vmem:[%s1534 + $0x980] sm:$0xff]
        %v1902 = vld [vmem:[%s1534 + $0x988] sm:$0xff]
        %v1903 = vld [vmem:[%s1534 + $0x990] sm:$0xff]
        %v1904 = vld [vmem:[%s1534 + $0x998] sm:$0xff]
        %v1905 = vld [vmem:[%s1534 + $0x9a0] sm:$0xff]
        %v1906 = vld [vmem:[%s1534 + $0x9a8] sm:$0xff]
        %v1907 = vld [vmem:[%s1534 + $0x9b0] sm:$0xff]
        %v1908 = vld [vmem:[%s1534 + $0x9b8] sm:$0xff]
        %v1909 = vld [vmem:[%s1534 + $0x9c0] sm:$0xff]
        %v1910 = vld [vmem:[%s1534 + $0x9c8] sm:$0xff]
        %v1911 = vld [vmem:[%s1534 + $0x9d0] sm:$0xff]
        %v1912 = vld [vmem:[%s1534 + $0x9d8] sm:$0xff]
        %v1913 = vld [vmem:[%s1534 + $0x9e0] sm:$0xff]
        %v1914 = vld [vmem:[%s1534 + $0x9e8] sm:$0xff]
        %v1915 = vld [vmem:[%s1534 + $0x9f0] sm:$0xff]
        %v1916 = vld [vmem:[%s1534 + $0x9f8] sm:$0xff]
        %v1917 = vld [vmem:[%s1534 + $0xa00] sm:$0xff]
        %v1918 = vld [vmem:[%s1534 + $0xa08] sm:$0xff]
        %v1919 = vld [vmem:[%s1534 + $0xa10] sm:$0xff]
        %v1920 = vld [vmem:[%s1534 + $0xa18] sm:$0xff]
        %v1921 = vld [vmem:[%s1534 + $0xa20] sm:$0xff]
        %v1922 = vld [vmem:[%s1534 + $0xa28] sm:$0xff]
        %v1923 = vld [vmem:[%s1534 + $0xa30] sm:$0xff]
        %v1924 = vld [vmem:[%s1534 + $0xa38] sm:$0xff]
        %v1925 = vld [vmem:[%s1534 + $0xa40] sm:$0xff]
        %v1926 = vld [vmem:[%s1534 + $0xa48] sm:$0xff]
        %v1927 = vld [vmem:[%s1534 + $0xa50] sm:$0xff]
        %v1928 = vld [vmem:[%s1534 + $0xa58] sm:$0xff]
        %v1929 = vld [vmem:[%s1534 + $0xa60] sm:$0xff]
        %v1930 = vld [vmem:[%s1534 + $0xa68] sm:$0xff]
        %v1931 = vld [vmem:[%s1534 + $0xa70] sm:$0xff]
        %v1932 = vld [vmem:[%s1534 + $0xa78] sm:$0xff]
        %v1933 = vld [vmem:[%s1534 + $0xa80] sm:$0xff]
        %v1934 = vld [vmem:[%s1534 + $0xa88] sm:$0xff]
        %v1935 = vld [vmem:[%s1534 + $0xa90] sm:$0xff]
        %v1936 = vld [vmem:[%s1534 + $0xa98] sm:$0xff]
        %v1937 = vld [vmem:[%s1534 + $0xaa0] sm:$0xff]
        %v1938 = vld [vmem:[%s1534 + $0xaa8] sm:$0xff]
        %v1939 = vld [vmem:[%s1534 + $0xab0] sm:$0xff]
        %v1940 = vld [vmem:[%s1534 + $0xab8] sm:$0xff]
        %v1941 = vld [vmem:[%s1534 + $0xac0] sm:$0xff]
        %v1942 = vld [vmem:[%s1534 + $0xac8] sm:$0xff]
        %v1943 = vld [vmem:[%s1534 + $0xad0] sm:$0xff]
        %v1944 = vld [vmem:[%s1534 + $0xad8] sm:$0xff]
        %v1945 = vld [vmem:[%s1534 + $0xae0] sm:$0xff]
        %v1946 = vld [vmem:[%s1534 + $0xae8] sm:$0xff]
        %v1947 = vld [vmem:[%s1534 + $0xaf0] sm:$0xff]
        %v1948 = vld [vmem:[%s1534 + $0xaf8] sm:$0xff]
        %v1949 = vld [vmem:[%s1534 + $0xb00] sm:$0xff]
        %v1950 = vld [vmem:[%s1534 + $0xb08] sm:$0xff]
        %v1951 = vld [vmem:[%s1534 + $0xb10] sm:$0xff]
        %v1952 = vld [vmem:[%s1534 + $0xb18] sm:$0xff]
        %v1953 = vld [vmem:[%s1534 + $0xb20] sm:$0xff]
        %v1954 = vld [vmem:[%s1534 + $0xb28] sm:$0xff]
        %v1955 = vld [vmem:[%s1534 + $0xb30] sm:$0xff]
        %v1956 = vld [vmem:[%s1534 + $0xb38] sm:$0xff]
        %v1957 = vld [vmem:[%s1534 + $0xb40] sm:$0xff]
        %v1958 = vld [vmem:[%s1534 + $0xb48] sm:$0xff]
        %v1959 = vld [vmem:[%s1534 + $0xb50] sm:$0xff]
        %v1960 = vld [vmem:[%s1534 + $0xb58] sm:$0xff]
        %v1961 = vld [vmem:[%s1534 + $0xb60] sm:$0xff]
        %v1962 = vld [vmem:[%s1534 + $0xb68] sm:$0xff]
        %v1963 = vld [vmem:[%s1534 + $0xb70] sm:$0xff]
        %v1964 = vld [vmem:[%s1534 + $0xb78] sm:$0xff]
        %v1965 = vld [vmem:[%s1534 + $0xb80] sm:$0xff]
        %v1966 = vld [vmem:[%s1534 + $0xb88] sm:$0xff]
        %v1967 = vld [vmem:[%s1534 + $0xb90] sm:$0xff]
        %v1968 = vld [vmem:[%s1534 + $0xb98] sm:$0xff]
        %v1969 = vld [vmem:[%s1534 + $0xba0] sm:$0xff]
        %v1970 = vld [vmem:[%s1534 + $0xba8] sm:$0xff]
        %v1971 = vld [vmem:[%s1534 + $0xbb0] sm:$0xff]
        %v1972 = vld [vmem:[%s1534 + $0xbb8] sm:$0xff]
        %v1973 = vld [vmem:[%s1534 + $0xbc0] sm:$0xff]
        %v1974 = vld [vmem:[%s1534 + $0xbc8] sm:$0xff]
        %v1975 = vld [vmem:[%s1534 + $0xbd0] sm:$0xff]
        %v1976 = vld [vmem:[%s1534 + $0xbd8] sm:$0xff]
        %v1977 = vld [vmem:[%s1534 + $0xbe0] sm:$0xff]
        %v1978 = vld [vmem:[%s1534 + $0xbe8] sm:$0xff]
        %v1979 = vld [vmem:[%s1534 + $0xbf0] sm:$0xff]
        %v1980 = vld [vmem:[%s1534 + $0xbf8] sm:$0xff]
        %v1981 = vld [vmem:[%s1534 + $0xc00] sm:$0xff]
        %v1982 = vld [vmem:[%s1534 + $0xc08] sm:$0xff]
        %v1983 = vld [vmem:[%s1534 + $0xc10] sm:$0xff]
        %v1984 = vld [vmem:[%s1534 + $0xc18] sm:$0xff]
        %v1985 = vld [vmem:[%s1534 + $0xc20] sm:$0xff]
        %v1986 = vld [vmem:[%s1534 + $0xc28] sm:$0xff]
        %v1987 = vld [vmem:[%s1534 + $0xc30] sm:$0xff]
        %v1988 = vld [vmem:[%s1534 + $0xc38] sm:$0xff]
        %v1989 = vld [vmem:[%s1534 + $0xc40] sm:$0xff]
        %v1990 = vld [vmem:[%s1534 + $0xc48] sm:$0xff]
        %v1991 = vld [vmem:[%s1534 + $0xc50] sm:$0xff]
        %v1992 = vld [vmem:[%s1534 + $0xc58] sm:$0xff]
        %v1993 = vld [vmem:[%s1534 + $0xc60] sm:$0xff]
        %v1994 = vld [vmem:[%s1534 + $0xc68] sm:$0xff]
        %v1995 = vld [vmem:[%s1534 + $0xc70] sm:$0xff]
        %v1996 = vld [vmem:[%s1534 + $0xc78] sm:$0xff]
        %v1997 = vld [vmem:[%s1534 + $0xc80] sm:$0xff]
        %v1998 = vld [vmem:[%s1534 + $0xc88] sm:$0xff]
        %v1999 = vld [vmem:[%s1534 + $0xc90] sm:$0xff]
        %v2000 = vld [vmem:[%s1534 + $0xc98] sm:$0xff]
        %v2001 = vld [vmem:[%s1534 + $0xca0] sm:$0xff]
        %v2002 = vld [vmem:[%s1534 + $0xca8] sm:$0xff]
        %v2003 = vld [vmem:[%s1534 + $0xcb0] sm:$0xff]
        %v2004 = vld [vmem:[%s1534 + $0xcb8] sm:$0xff]
        %v2005 = vld [vmem:[%s1534 + $0xcc0] sm:$0xff]
        %v2006 = vld [vmem:[%s1534 + $0xcc8] sm:$0xff]
        %v2007 = vld [vmem:[%s1534 + $0xcd0] sm:$0xff]
        %v2008 = vld [vmem:[%s1534 + $0xcd8] sm:$0xff]
        %v2009 = vld [vmem:[%s1534 + $0xce0] sm:$0xff]
        %v2010 = vld [vmem:[%s1534 + $0xce8] sm:$0xff]
        %v2011 = vld [vmem:[%s1534 + $0xcf0] sm:$0xff]
        %v2012 = vld [vmem:[%s1534 + $0xcf8] sm:$0xff]
        %v2013 = vld [vmem:[%s1534 + $0xd00] sm:$0xff]
        %v2014 = vld [vmem:[%s1534 + $0xd08] sm:$0xff]
        %v2015 = vld [vmem:[%s1534 + $0xd10] sm:$0xff]
        %v2016 = vld [vmem:[%s1534 + $0xd18] sm:$0xff]
        %v2017 = vld [vmem:[%s1534 + $0xd20] sm:$0xff]
        %v2018 = vld [vmem:[%s1534 + $0xd28] sm:$0xff]
        %v2019 = vld [vmem:[%s1534 + $0xd30] sm:$0xff]
        %v2020 = vld [vmem:[%s1534 + $0xd38] sm:$0xff]
        %v2021 = vld [vmem:[%s1534 + $0xd40] sm:$0xff]
        %v2022 = vld [vmem:[%s1534 + $0xd48] sm:$0xff]
        %v2023 = vld [vmem:[%s1534 + $0xd50] sm:$0xff]
        %v2024 = vld [vmem:[%s1534 + $0xd58] sm:$0xff]
        %v2025 = vld [vmem:[%s1534 + $0xd60] sm:$0xff]
        %v2026 = vld [vmem:[%s1534 + $0xd68] sm:$0xff]
        %v2027 = vld [vmem:[%s1534 + $0xd70] sm:$0xff]
        %v2028 = vld [vmem:[%s1534 + $0xd78] sm:$0xff]
        %v2029 = vld [vmem:[%s1534 + $0xd80] sm:$0xff]
        %v2030 = vld [vmem:[%s1534 + $0xd88] sm:$0xff]
        %v2031 = vld [vmem:[%s1534 + $0xd90] sm:$0xff]
        %v2032 = vld [vmem:[%s1534 + $0xd98] sm:$0xff]
        %v2033 = vld [vmem:[%s1534 + $0xda0] sm:$0xff]
        %v2034 = vld [vmem:[%s1534 + $0xda8] sm:$0xff]
        %v2035 = vld [vmem:[%s1534 + $0xdb0] sm:$0xff]
        %v2036 = vld [vmem:[%s1534 + $0xdb8] sm:$0xff]
        %v2037 = vld [vmem:[%s1534 + $0xdc0] sm:$0xff]
        %v2038 = vld [vmem:[%s1534 + $0xdc8] sm:$0xff]
        %v2039 = vld [vmem:[%s1534 + $0xdd0] sm:$0xff]
        %v2040 = vld [vmem:[%s1534 + $0xdd8] sm:$0xff]
        %v2041 = vld [vmem:[%s1534 + $0xde0] sm:$0xff]
        %v2042 = vld [vmem:[%s1534 + $0xde8] sm:$0xff]
        %v2043 = vld [vmem:[%s1534 + $0xdf0] sm:$0xff]
        %v2044 = vld [vmem:[%s1534 + $0xdf8] sm:$0xff]
        %v2045 = vld [vmem:[%s1534 + $0xe00] sm:$0xff]
        %v2046 = vld [vmem:[%s1534 + $0xe08] sm:$0xff]
        %v2047 = vld [vmem:[%s1534 + $0xe10] sm:$0xff]
        %v2048 = vld [vmem:[%s1534 + $0xe18] sm:$0xff]
        %v2049 = vld [vmem:[%s1534 + $0xe20] sm:$0xff]
        %v2050 = vld [vmem:[%s1534 + $0xe28] sm:$0xff]
        %v2051 = vld [vmem:[%s1534 + $0xe30] sm:$0xff]
        %v2052 = vld [vmem:[%s1534 + $0xe38] sm:$0xff]
        %v2053 = vld [vmem:[%s1534 + $0xe40] sm:$0xff]
        %v2054 = vld [vmem:[%s1534 + $0xe48] sm:$0xff]
        %v2055 = vld [vmem:[%s1534 + $0xe50] sm:$0xff]
        %v2056 = vld [vmem:[%s1534 + $0xe58] sm:$0xff]
        %v2057 = vld [vmem:[%s1534 + $0xe60] sm:$0xff]
        %v2058 = vld [vmem:[%s1534 + $0xe68] sm:$0xff]
        %v2059 = vld [vmem:[%s1534 + $0xe70] sm:$0xff]
        %v2060 = vld [vmem:[%s1534 + $0xe78] sm:$0xff]
        %v2061 = vld [vmem:[%s1534 + $0xe80] sm:$0xff]
        %v2062 = vld [vmem:[%s1534 + $0xe88] sm:$0xff]
        %v2063 = vld [vmem:[%s1534 + $0xe90] sm:$0xff]
        %v2064 = vld [vmem:[%s1534 + $0xe98] sm:$0xff]
        %v2065 = vld [vmem:[%s1534 + $0xea0] sm:$0xff]
        %v2066 = vld [vmem:[%s1534 + $0xea8] sm:$0xff]
        %v2067 = vld [vmem:[%s1534 + $0xeb0] sm:$0xff]
        %v2068 = vld [vmem:[%s1534 + $0xeb8] sm:$0xff]
        %v2069 = vld [vmem:[%s1534 + $0xec0] sm:$0xff]
        %v2070 = vld [vmem:[%s1534 + $0xec8] sm:$0xff]
        %v2071 = vld [vmem:[%s1534 + $0xed0] sm:$0xff]
        %v2072 = vld [vmem:[%s1534 + $0xed8] sm:$0xff]
        %v2073 = vld [vmem:[%s1534 + $0xee0] sm:$0xff]
        %v2074 = vld [vmem:[%s1534 + $0xee8] sm:$0xff]
        %v2075 = vld [vmem:[%s1534 + $0xef0] sm:$0xff]
        %v2076 = vld [vmem:[%s1534 + $0xef8] sm:$0xff]
        %v2077 = vld [vmem:[%s1534 + $0xf00] sm:$0xff]
        %v2078 = vld [vmem:[%s1534 + $0xf08] sm:$0xff]
        %v2079 = vld [vmem:[%s1534 + $0xf10] sm:$0xff]
        %v2080 = vld [vmem:[%s1534 + $0xf18] sm:$0xff]
        %v2081 = vld [vmem:[%s1534 + $0xf20] sm:$0xff]
        %v2082 = vld [vmem:[%s1534 + $0xf28] sm:$0xff]
        %v2083 = vld [vmem:[%s1534 + $0xf30] sm:$0xff]
        %v2084 = vld [vmem:[%s1534 + $0xf38] sm:$0xff]
        %v2085 = vld [vmem:[%s1534 + $0xf40] sm:$0xff]
        %v2086 = vld [vmem:[%s1534 + $0xf48] sm:$0xff]
        %v2087 = vld [vmem:[%s1534 + $0xf50] sm:$0xff]
        %v2088 = vld [vmem:[%s1534 + $0xf58] sm:$0xff]
        %v2089 = vld [vmem:[%s1534 + $0xf60] sm:$0xff]
        %v2090 = vld [vmem:[%s1534 + $0xf68] sm:$0xff]
        %v2091 = vld [vmem:[%s1534 + $0xf70] sm:$0xff]
        %v2092 = vld [vmem:[%s1534 + $0xf78] sm:$0xff]
        %v2093 = vld [vmem:[%s1534 + $0xf80] sm:$0xff]
        %v2094 = vld [vmem:[%s1534 + $0xf88] sm:$0xff]
        %v2095 = vld [vmem:[%s1534 + $0xf90] sm:$0xff]
        %v2096 = vld [vmem:[%s1534 + $0xf98] sm:$0xff]
        %v2097 = vld [vmem:[%s1534 + $0xfa0] sm:$0xff]
        %v2098 = vld [vmem:[%s1534 + $0xfa8] sm:$0xff]
        %v2099 = vld [vmem:[%s1534 + $0xfb0] sm:$0xff]
        %v2100 = vld [vmem:[%s1534 + $0xfb8] sm:$0xff]
        %v2101 = vld [vmem:[%s1534 + $0xfc0] sm:$0xff]
        %v2102 = vld [vmem:[%s1534 + $0xfc8] sm:$0xff]
        %v2103 = vld [vmem:[%s1534 + $0xfd0] sm:$0xff]
        %v2104 = vld [vmem:[%s1534 + $0xfd8] sm:$0xff]
        %v2105 = vld [vmem:[%s1534 + $0xfe0] sm:$0xff]
        %v2106 = vld [vmem:[%s1534 + $0xfe8] sm:$0xff]
        %v2107 = vld [vmem:[%s1534 + $0xff0] sm:$0xff]
        %v2108 = vld [vmem:[%s1534 + $0xff8] sm:$0xff]
        %v2109 = vld [vmem:[%s1534 + $0x1000] sm:$0xff]
        %v2110 = vld [vmem:[%s1534 + $0x1008] sm:$0xff]
        %v2111 = vld [vmem:[%s1534 + $0x1010] sm:$0xff]
        %v2112 = vld [vmem:[%s1534 + $0x1018] sm:$0xff]
        %v2113 = vld [vmem:[%s1534 + $0x1020] sm:$0xff]
        %v2114 = vld [vmem:[%s1534 + $0x1028] sm:$0xff]
        %v2115 = vld [vmem:[%s1534 + $0x1030] sm:$0xff]
        %v2116 = vld [vmem:[%s1534 + $0x1038] sm:$0xff]
        %v2117 = vld [vmem:[%s1534 + $0x1040] sm:$0xff]
        %v2118 = vld [vmem:[%s1534 + $0x1048] sm:$0xff]
        %v2119 = vld [vmem:[%s1534 + $0x1050] sm:$0xff]
        %v2120 = vld [vmem:[%s1534 + $0x1058] sm:$0xff]
        %v2121 = vld [vmem:[%s1534 + $0x1060] sm:$0xff]
        %v2122 = vld [vmem:[%s1534 + $0x1068] sm:$0xff]
        %v2123 = vld [vmem:[%s1534 + $0x1070] sm:$0xff]
        %v2124 = vld [vmem:[%s1534 + $0x1078] sm:$0xff]
        %v2125 = vld [vmem:[%s1534 + $0x1080] sm:$0xff]
        %v2126 = vld [vmem:[%s1534 + $0x1088] sm:$0xff]
        %v2127 = vld [vmem:[%s1534 + $0x1090] sm:$0xff]
        %v2128 = vld [vmem:[%s1534 + $0x1098] sm:$0xff]
        %v2129 = vld [vmem:[%s1534 + $0x10a0] sm:$0xff]
        %v2130 = vld [vmem:[%s1534 + $0x10a8] sm:$0xff]
        %v2131 = vld [vmem:[%s1534 + $0x10b0] sm:$0xff]
        %v2132 = vld [vmem:[%s1534 + $0x10b8] sm:$0xff]
        %v2133 = vld [vmem:[%s1534 + $0x10c0] sm:$0xff]
        %v2134 = vld [vmem:[%s1534 + $0x10c8] sm:$0xff]
        %v2135 = vld [vmem:[%s1534 + $0x10d0] sm:$0xff]
        %v2136 = vld [vmem:[%s1534 + $0x10d8] sm:$0xff]
        %v2137 = vld [vmem:[%s1534 + $0x10e0] sm:$0xff]
        %v2138 = vld [vmem:[%s1534 + $0x10e8] sm:$0xff]
        %v2139 = vld [vmem:[%s1534 + $0x10f0] sm:$0xff]
        %v2140 = vld [vmem:[%s1534 + $0x10f8] sm:$0xff]
        %v2141 = vld [vmem:[%s1534 + $0x1100] sm:$0xff]
        %v2142 = vld [vmem:[%s1534 + $0x1108] sm:$0xff]
        %v2143 = vld [vmem:[%s1534 + $0x1110] sm:$0xff]
        %v2144 = vld [vmem:[%s1534 + $0x1118] sm:$0xff]
        %v2145 = vld [vmem:[%s1534 + $0x1120] sm:$0xff]
        %v2146 = vld [vmem:[%s1534 + $0x1128] sm:$0xff]
        %v2147 = vld [vmem:[%s1534 + $0x1130] sm:$0xff]
        %v2148 = vld [vmem:[%s1534 + $0x1138] sm:$0xff]
        %v2149 = vld [vmem:[%s1534 + $0x1140] sm:$0xff]
        %v2150 = vld [vmem:[%s1534 + $0x1148] sm:$0xff]
        %v2151 = vld [vmem:[%s1534 + $0x1150] sm:$0xff]
        %v2152 = vld [vmem:[%s1534 + $0x1158] sm:$0xff]
        %v2153 = vld [vmem:[%s1534 + $0x1160] sm:$0xff]
        %v2154 = vld [vmem:[%s1534 + $0x1168] sm:$0xff]
        %v2155 = vld [vmem:[%s1534 + $0x1170] sm:$0xff]
        %v2156 = vld [vmem:[%s1534 + $0x1178] sm:$0xff]
        %v2157 = vld [vmem:[%s1534 + $0x1180] sm:$0xff]
        %v2158 = vld [vmem:[%s1534 + $0x1188] sm:$0xff]
        %v2159 = vld [vmem:[%s1534 + $0x1190] sm:$0xff]
        %v2160 = vld [vmem:[%s1534 + $0x1198] sm:$0xff]
        %v2161 = vld [vmem:[%s1534 + $0x11a0] sm:$0xff]
        %v2162 = vld [vmem:[%s1534 + $0x11a8] sm:$0xff]
        %v2163 = vld [vmem:[%s1534 + $0x11b0] sm:$0xff]
        %v2164 = vld [vmem:[%s1534 + $0x11b8] sm:$0xff]
        %v2165 = vld [vmem:[%s1534 + $0x11c0] sm:$0xff]
        %v2166 = vld [vmem:[%s1534 + $0x11c8] sm:$0xff]
        %v2167 = vld [vmem:[%s1534 + $0x11d0] sm:$0xff]
        %v2168 = vld [vmem:[%s1534 + $0x11d8] sm:$0xff]
        %v2169 = vld [vmem:[%s1534 + $0x11e0] sm:$0xff]
        %v2170 = vld [vmem:[%s1534 + $0x11e8] sm:$0xff]
        %v2171 = vld [vmem:[%s1534 + $0x11f0] sm:$0xff]
        %v2172 = vld [vmem:[%s1534 + $0x11f8] sm:$0xff]
        %2176 = vst [vmem:[#allocation1] ss:$4 sm:$0xff] %v1593
        %s2177 = scalar_lea.vmem [#allocation1], 32
        %2178 = vst [vmem:[%s2177] ss:$4 sm:$0xff] %v1594
        %v2179 = vld.sshfl [vmem:[#allocation1] sm:$0xff pattern:$0x73625140]
        %v2180 = vld.sshfl [vmem:[#allocation1 + $0x8] sm:$0xff pattern:$0x73625140]
        %v2181 = vld.sshfl [vmem:[#allocation1 + $0x10] sm:$0xff pattern:$0x73625140]
        %v2182 = vld.sshfl [vmem:[#allocation1 + $0x18] sm:$0xff pattern:$0x73625140]
        %v2183 = vld.sshfl [vmem:[#allocation1 + $0x20] sm:$0xff pattern:$0x73625140]
        %v2184 = vld.sshfl [vmem:[#allocation1 + $0x28] sm:$0xff pattern:$0x73625140]
        %v2185 = vld.sshfl [vmem:[#allocation1 + $0x30] sm:$0xff pattern:$0x73625140]
        %v2186 = vld.sshfl [vmem:[#allocation1 + $0x38] sm:$0xff pattern:$0x73625140]
        %2187 = vst [vmem:[#allocation1] ss:$4 sm:$0xff] %v1595
        %v2188 = vld.sshfl [vmem:[#allocation1] sm:$0xff pattern:$0x73625140]
        %2198 = vmatpush.xpose.msra.mxu0 %v1732
        %2199 = vmatpush.xpose.msra.mxu0 %v1723
        %2200 = vmatpush.xpose.msra.mxu0 %v1714
        %2201 = vmatpush.xpose.msra.mxu0 %v1705
        %2202 = vmatpush.xpose.msra.mxu0 %v1696
        %2203 = vmatpush.xpose.msra.mxu0 %v1687
        %2204 = vmatpush.xpose.msra.mxu0 %v1678
        %2205 = vmatpush.xpose.msra.mxu0 %v1669
        %2206 = vmatpush.xpose.msra.mxu0 %v1660
        %2207 = vmatpush.xpose.msra.mxu0 %v1651
        %2208 = vmatpush.xpose.msra.mxu0 %v1642
        %2209 = vmatpush.xpose.msra.mxu0 %v1633
        %2210 = vmatpush.xpose.msra.mxu0 %v1624
        %2211 = vmatpush.xpose.msra.mxu0 %v1615
        %2212 = vmatpush.xpose.msra.mxu0 %v1606
        %2213 = vmatpush.xpose.msra.mxu0 %v1597
        %2214 = vmatmul.f32.gmra.mxu0 %v2179
        %v2215 = vpop.f32.mrf.mxu0
        %v2216 = vadd.f32 0.0, %v2215
        %2217 = vdwg.mxu0
        %2218 = vmatpush.xpose.msra.mxu0 %v1733
        %2219 = vmatpush.xpose.msra.mxu0 %v1724
        %2220 = vmatpush.xpose.msra.mxu0 %v1715
        %2221 = vmatpush.xpose.msra.mxu0 %v1706
        %2222 = vmatpush.xpose.msra.mxu0 %v1697
        %2223 = vmatpush.xpose.msra.mxu0 %v1688
        %2224 = vmatpush.xpose.msra.mxu0 %v1679
        %2225 = vmatpush.xpose.msra.mxu0 %v1670
        %2226 = vmatpush.xpose.msra.mxu0 %v1661
        %2227 = vmatpush.xpose.msra.mxu0 %v1652
        %2228 = vmatpush.xpose.msra.mxu0 %v1643
        %2229 = vmatpush.xpose.msra.mxu0 %v1634
        %2230 = vmatpush.xpose.msra.mxu0 %v1625
        %2231 = vmatpush.xpose.msra.mxu0 %v1616
        %2232 = vmatpush.xpose.msra.mxu0 %v1607
        %2233 = vmatpush.xpose.msra.mxu0 %v1598
        %2234 = vmatmul.f32.gmra.mxu0 %v2180
        %v2235 = vpop.f32.mrf.mxu0
        %v2236 = vadd.f32 %v2216, %v2235
        %2237 = vdwg.mxu0
        %2238 = vmatpush.xpose.msra.mxu0 %v1734
        %2239 = vmatpush.xpose.msra.mxu0 %v1725
        %2240 = vmatpush.xpose.msra.mxu0 %v1716
        %2241 = vmatpush.xpose.msra.mxu0 %v1707
        %2242 = vmatpush.xpose.msra.mxu0 %v1698
        %2243 = vmatpush.xpose.msra.mxu0 %v1689
        %2244 = vmatpush.xpose.msra.mxu0 %v1680
        %2245 = vmatpush.xpose.msra.mxu0 %v1671
        %2246 = vmatpush.xpose.msra.mxu0 %v1662
        %2247 = vmatpush.xpose.msra.mxu0 %v1653
        %2248 = vmatpush.xpose.msra.mxu0 %v1644
        %2249 = vmatpush.xpose.msra.mxu0 %v1635
        %2250 = vmatpush.xpose.msra.mxu0 %v1626
        %2251 = vmatpush.xpose.msra.mxu0 %v1617
        %2252 = vmatpush.xpose.msra.mxu0 %v1608
        %2253 = vmatpush.xpose.msra.mxu0 %v1599
        %2254 = vmatmul.f32.gmra.mxu0 %v2181
        %v2255 = vpop.f32.mrf.mxu0
        %v2256 = vadd.f32 %v2236, %v2255
        %2257 = vdwg.mxu0
        %2258 = vmatpush.xpose.msra.mxu0 %v1735
        %2259 = vmatpush.xpose.msra.mxu0 %v1726
        %2260 = vmatpush.xpose.msra.mxu0 %v1717
        %2261 = vmatpush.xpose.msra.mxu0 %v1708
        %2262 = vmatpush.xpose.msra.mxu0 %v1699
        %2263 = vmatpush.xpose.msra.mxu0 %v1690
        %2264 = vmatpush.xpose.msra.mxu0 %v1681
        %2265 = vmatpush.xpose.msra.mxu0 %v1672
        %2266 = vmatpush.xpose.msra.mxu0 %v1663
        %2267 = vmatpush.xpose.msra.mxu0 %v1654
        %2268 = vmatpush.xpose.msra.mxu0 %v1645
        %2269 = vmatpush.xpose.msra.mxu0 %v1636
        %2270 = vmatpush.xpose.msra.mxu0 %v1627
        %2271 = vmatpush.xpose.msra.mxu0 %v1618
        %2272 = vmatpush.xpose.msra.mxu0 %v1609
        %2273 = vmatpush.xpose.msra.mxu0 %v1600
        %2274 = vmatmul.f32.gmra.mxu0 %v2182
        %v2275 = vpop.f32.mrf.mxu0
        %v2276 = vadd.f32 %v2256, %v2275
        %2277 = vdwg.mxu0
        %2278 = vmatpush.xpose.msra.mxu0 %v1736
        %2279 = vmatpush.xpose.msra.mxu0 %v1727
        %2280 = vmatpush.xpose.msra.mxu0 %v1718
        %2281 = vmatpush.xpose.msra.mxu0 %v1709
        %2282 = vmatpush.xpose.msra.mxu0 %v1700
        %2283 = vmatpush.xpose.msra.mxu0 %v1691
        %2284 = vmatpush.xpose.msra.mxu0 %v1682
        %2285 = vmatpush.xpose.msra.mxu0 %v1673
        %2286 = vmatpush.xpose.msra.mxu0 %v1664
        %2287 = vmatpush.xpose.msra.mxu0 %v1655
        %2288 = vmatpush.xpose.msra.mxu0 %v1646
        %2289 = vmatpush.xpose.msra.mxu0 %v1637
        %2290 = vmatpush.xpose.msra.mxu0 %v1628
        %2291 = vmatpush.xpose.msra.mxu0 %v1619
        %2292 = vmatpush.xpose.msra.mxu0 %v1610
        %2293 = vmatpush.xpose.msra.mxu0 %v1601
        %2294 = vmatmul.f32.gmra.mxu0 %v2183
        %v2295 = vpop.f32.mrf.mxu0
        %v2296 = vadd.f32 %v2276, %v2295
        %2297 = vdwg.mxu0
        %2298 = vmatpush.xpose.msra.mxu0 %v1737
        %2299 = vmatpush.xpose.msra.mxu0 %v1728
        %2300 = vmatpush.xpose.msra.mxu0 %v1719
        %2301 = vmatpush.xpose.msra.mxu0 %v1710
        %2302 = vmatpush.xpose.msra.mxu0 %v1701
        %2303 = vmatpush.xpose.msra.mxu0 %v1692
        %2304 = vmatpush.xpose.msra.mxu0 %v1683
        %2305 = vmatpush.xpose.msra.mxu0 %v1674
        %2306 = vmatpush.xpose.msra.mxu0 %v1665
        %2307 = vmatpush.xpose.msra.mxu0 %v1656
        %2308 = vmatpush.xpose.msra.mxu0 %v1647
        %2309 = vmatpush.xpose.msra.mxu0 %v1638
        %2310 = vmatpush.xpose.msra.mxu0 %v1629
        %2311 = vmatpush.xpose.msra.mxu0 %v1620
        %2312 = vmatpush.xpose.msra.mxu0 %v1611
        %2313 = vmatpush.xpose.msra.mxu0 %v1602
        %2314 = vmatmul.f32.gmra.mxu0 %v2184
        %v2315 = vpop.f32.mrf.mxu0
        %v2316 = vadd.f32 %v2296, %v2315
        %2317 = vdwg.mxu0
        %2318 = vmatpush.xpose.msra.mxu0 %v1738
        %2319 = vmatpush.xpose.msra.mxu0 %v1729
        %2320 = vmatpush.xpose.msra.mxu0 %v1720
        %2321 = vmatpush.xpose.msra.mxu0 %v1711
        %2322 = vmatpush.xpose.msra.mxu0 %v1702
        %2323 = vmatpush.xpose.msra.mxu0 %v1693
        %2324 = vmatpush.xpose.msra.mxu0 %v1684
        %2325 = vmatpush.xpose.msra.mxu0 %v1675
        %2326 = vmatpush.xpose.msra.mxu0 %v1666
        %2327 = vmatpush.xpose.msra.mxu0 %v1657
        %2328 = vmatpush.xpose.msra.mxu0 %v1648
        %2329 = vmatpush.xpose.msra.mxu0 %v1639
        %2330 = vmatpush.xpose.msra.mxu0 %v1630
        %2331 = vmatpush.xpose.msra.mxu0 %v1621
        %2332 = vmatpush.xpose.msra.mxu0 %v1612
        %2333 = vmatpush.xpose.msra.mxu0 %v1603
        %2334 = vmatmul.f32.gmra.mxu0 %v2185
        %v2335 = vpop.f32.mrf.mxu0
        %v2336 = vadd.f32 %v2316, %v2335
        %2337 = vdwg.mxu0
        %2338 = vmatpush.xpose.msra.mxu0 %v1739
        %2339 = vmatpush.xpose.msra.mxu0 %v1730
        %2340 = vmatpush.xpose.msra.mxu0 %v1721
        %2341 = vmatpush.xpose.msra.mxu0 %v1712
        %2342 = vmatpush.xpose.msra.mxu0 %v1703
        %2343 = vmatpush.xpose.msra.mxu0 %v1694
        %2344 = vmatpush.xpose.msra.mxu0 %v1685
        %2345 = vmatpush.xpose.msra.mxu0 %v1676
        %2346 = vmatpush.xpose.msra.mxu0 %v1667
        %2347 = vmatpush.xpose.msra.mxu0 %v1658
        %2348 = vmatpush.xpose.msra.mxu0 %v1649
        %2349 = vmatpush.xpose.msra.mxu0 %v1640
        %2350 = vmatpush.xpose.msra.mxu0 %v1631
        %2351 = vmatpush.xpose.msra.mxu0 %v1622
        %2352 = vmatpush.xpose.msra.mxu0 %v1613
        %2353 = vmatpush.xpose.msra.mxu0 %v1604
        %2354 = vmatmul.f32.gmra.mxu0 %v2186
        %v2355 = vpop.f32.mrf.mxu0
        %v2356 = vadd.f32 %v2336, %v2355
        %2357 = vdwg.mxu0
        %2358 = vmatpush.xpose.msra.mxu0 %v1740
        %2359 = vmatpush.xpose.msra.mxu0 %v1731
        %2360 = vmatpush.xpose.msra.mxu0 %v1722
        %2361 = vmatpush.xpose.msra.mxu0 %v1713
        %2362 = vmatpush.xpose.msra.mxu0 %v1704
        %2363 = vmatpush.xpose.msra.mxu0 %v1695
        %2364 = vmatpush.xpose.msra.mxu0 %v1686
        %2365 = vmatpush.xpose.msra.mxu0 %v1677
        %2366 = vmatpush.xpose.msra.mxu0 %v1668
        %2367 = vmatpush.xpose.msra.mxu0 %v1659
        %2368 = vmatpush.xpose.msra.mxu0 %v1650
        %2369 = vmatpush.xpose.msra.mxu0 %v1641
        %2370 = vmatpush.xpose.msra.mxu0 %v1632
        %2371 = vmatpush.xpose.msra.mxu0 %v1623
        %2372 = vmatpush.xpose.msra.mxu0 %v1614
        %2373 = vmatpush.xpose.msra.mxu0 %v1605
        %2374 = vmatmul.f32.gmra.mxu0 %v2188
        %v2375 = vpop.f32.mrf.mxu0
        %v2376 = vadd.f32 %v2356, %v2375
        %2377 = vdwg.mxu0
        %2378 = vmatpush.xpose.msra.mxu0 %v1876
        %2379 = vmatpush.xpose.msra.mxu0 %v1867
        %2380 = vmatpush.xpose.msra.mxu0 %v1858
        %2381 = vmatpush.xpose.msra.mxu0 %v1849
        %2382 = vmatpush.xpose.msra.mxu0 %v1840
        %2383 = vmatpush.xpose.msra.mxu0 %v1831
        %2384 = vmatpush.xpose.msra.mxu0 %v1822
        %2385 = vmatpush.xpose.msra.mxu0 %v1813
        %2386 = vmatpush.xpose.msra.mxu0 %v1804
        %2387 = vmatpush.xpose.msra.mxu0 %v1795
        %2388 = vmatpush.xpose.msra.mxu0 %v1786
        %2389 = vmatpush.xpose.msra.mxu0 %v1777
        %2390 = vmatpush.xpose.msra.mxu0 %v1768
        %2391 = vmatpush.xpose.msra.mxu0 %v1759
        %2392 = vmatpush.xpose.msra.mxu0 %v1750
        %2393 = vmatpush.xpose.msra.mxu0 %v1741
        %2394 = vmatmul.f32.gmra.mxu0 %v2179
        %v2395 = vpop.f32.mrf.mxu0
        %v2396 = vadd.f32 0.0, %v2395
        %2397 = vdwg.mxu0
        %2398 = vmatpush.xpose.msra.mxu0 %v1877
        %2399 = vmatpush.xpose.msra.mxu0 %v1868
        %2400 = vmatpush.xpose.msra.mxu0 %v1859
        %2401 = vmatpush.xpose.msra.mxu0 %v1850
        %2402 = vmatpush.xpose.msra.mxu0 %v1841
        %2403 = vmatpush.xpose.msra.mxu0 %v1832
        %2404 = vmatpush.xpose.msra.mxu0 %v1823
        %2405 = vmatpush.xpose.msra.mxu0 %v1814
        %2406 = vmatpush.xpose.msra.mxu0 %v1805
        %2407 = vmatpush.xpose.msra.mxu0 %v1796
        %2408 = vmatpush.xpose.msra.mxu0 %v1787
        %2409 = vmatpush.xpose.msra.mxu0 %v1778
        %2410 = vmatpush.xpose.msra.mxu0 %v1769
        %2411 = vmatpush.xpose.msra.mxu0 %v1760
        %2412 = vmatpush.xpose.msra.mxu0 %v1751
        %2413 = vmatpush.xpose.msra.mxu0 %v1742
        %2414 = vmatmul.f32.gmra.mxu0 %v2180
        %v2415 = vpop.f32.mrf.mxu0
        %v2416 = vadd.f32 %v2396, %v2415
        %2417 = vdwg.mxu0
        %2418 = vmatpush.xpose.msra.mxu0 %v1878
        %2419 = vmatpush.xpose.msra.mxu0 %v1869
        %2420 = vmatpush.xpose.msra.mxu0 %v1860
        %2421 = vmatpush.xpose.msra.mxu0 %v1851
        %2422 = vmatpush.xpose.msra.mxu0 %v1842
        %2423 = vmatpush.xpose.msra.mxu0 %v1833
        %2424 = vmatpush.xpose.msra.mxu0 %v1824
        %2425 = vmatpush.xpose.msra.mxu0 %v1815
        %2426 = vmatpush.xpose.msra.mxu0 %v1806
        %2427 = vmatpush.xpose.msra.mxu0 %v1797
        %2428 = vmatpush.xpose.msra.mxu0 %v1788
        %2429 = vmatpush.xpose.msra.mxu0 %v1779
        %2430 = vmatpush.xpose.msra.mxu0 %v1770
        %2431 = vmatpush.xpose.msra.mxu0 %v1761
        %2432 = vmatpush.xpose.msra.mxu0 %v1752
        %2433 = vmatpush.xpose.msra.mxu0 %v1743
        %2434 = vmatmul.f32.gmra.mxu0 %v2181
        %v2435 = vpop.f32.mrf.mxu0
        %v2436 = vadd.f32 %v2416, %v2435
        %2437 = vdwg.mxu0
        %2438 = vmatpush.xpose.msra.mxu0 %v1879
        %2439 = vmatpush.xpose.msra.mxu0 %v1870
        %2440 = vmatpush.xpose.msra.mxu0 %v1861
        %2441 = vmatpush.xpose.msra.mxu0 %v1852
        %2442 = vmatpush.xpose.msra.mxu0 %v1843
        %2443 = vmatpush.xpose.msra.mxu0 %v1834
        %2444 = vmatpush.xpose.msra.mxu0 %v1825
        %2445 = vmatpush.xpose.msra.mxu0 %v1816
        %2446 = vmatpush.xpose.msra.mxu0 %v1807
        %2447 = vmatpush.xpose.msra.mxu0 %v1798
        %2448 = vmatpush.xpose.msra.mxu0 %v1789
        %2449 = vmatpush.xpose.msra.mxu0 %v1780
        %2450 = vmatpush.xpose.msra.mxu0 %v1771
        %2451 = vmatpush.xpose.msra.mxu0 %v1762
        %2452 = vmatpush.xpose.msra.mxu0 %v1753
        %2453 = vmatpush.xpose.msra.mxu0 %v1744
        %2454 = vmatmul.f32.gmra.mxu0 %v2182
        %v2455 = vpop.f32.mrf.mxu0
        %v2456 = vadd.f32 %v2436, %v2455
        %2457 = vdwg.mxu0
        %2458 = vmatpush.xpose.msra.mxu0 %v1880
        %2459 = vmatpush.xpose.msra.mxu0 %v1871
        %2460 = vmatpush.xpose.msra.mxu0 %v1862
        %2461 = vmatpush.xpose.msra.mxu0 %v1853
        %2462 = vmatpush.xpose.msra.mxu0 %v1844
        %2463 = vmatpush.xpose.msra.mxu0 %v1835
        %2464 = vmatpush.xpose.msra.mxu0 %v1826
        %2465 = vmatpush.xpose.msra.mxu0 %v1817
        %2466 = vmatpush.xpose.msra.mxu0 %v1808
        %2467 = vmatpush.xpose.msra.mxu0 %v1799
        %2468 = vmatpush.xpose.msra.mxu0 %v1790
        %2469 = vmatpush.xpose.msra.mxu0 %v1781
        %2470 = vmatpush.xpose.msra.mxu0 %v1772
        %2471 = vmatpush.xpose.msra.mxu0 %v1763
        %2472 = vmatpush.xpose.msra.mxu0 %v1754
        %2473 = vmatpush.xpose.msra.mxu0 %v1745
        %2474 = vmatmul.f32.gmra.mxu0 %v2183
        %v2475 = vpop.f32.mrf.mxu0
        %v2476 = vadd.f32 %v2456, %v2475
        %2477 = vdwg.mxu0
        %2478 = vmatpush.xpose.msra.mxu0 %v1881
        %2479 = vmatpush.xpose.msra.mxu0 %v1872
        %2480 = vmatpush.xpose.msra.mxu0 %v1863
        %2481 = vmatpush.xpose.msra.mxu0 %v1854
        %2482 = vmatpush.xpose.msra.mxu0 %v1845
        %2483 = vmatpush.xpose.msra.mxu0 %v1836
        %2484 = vmatpush.xpose.msra.mxu0 %v1827
        %2485 = vmatpush.xpose.msra.mxu0 %v1818
        %2486 = vmatpush.xpose.msra.mxu0 %v1809
        %2487 = vmatpush.xpose.msra.mxu0 %v1800
        %2488 = vmatpush.xpose.msra.mxu0 %v1791
        %2489 = vmatpush.xpose.msra.mxu0 %v1782
        %2490 = vmatpush.xpose.msra.mxu0 %v1773
        %2491 = vmatpush.xpose.msra.mxu0 %v1764
        %2492 = vmatpush.xpose.msra.mxu0 %v1755
        %2493 = vmatpush.xpose.msra.mxu0 %v1746
        %2494 = vmatmul.f32.gmra.mxu0 %v2184
        %v2495 = vpop.f32.mrf.mxu0
        %v2496 = vadd.f32 %v2476, %v2495
        %2497 = vdwg.mxu0
        %2498 = vmatpush.xpose.msra.mxu0 %v1882
        %2499 = vmatpush.xpose.msra.mxu0 %v1873
        %2500 = vmatpush.xpose.msra.mxu0 %v1864
        %2501 = vmatpush.xpose.msra.mxu0 %v1855
        %2502 = vmatpush.xpose.msra.mxu0 %v1846
        %2503 = vmatpush.xpose.msra.mxu0 %v1837
        %2504 = vmatpush.xpose.msra.mxu0 %v1828
        %2505 = vmatpush.xpose.msra.mxu0 %v1819
        %2506 = vmatpush.xpose.msra.mxu0 %v1810
        %2507 = vmatpush.xpose.msra.mxu0 %v1801
        %2508 = vmatpush.xpose.msra.mxu0 %v1792
        %2509 = vmatpush.xpose.msra.mxu0 %v1783
        %2510 = vmatpush.xpose.msra.mxu0 %v1774
        %2511 = vmatpush.xpose.msra.mxu0 %v1765
        %2512 = vmatpush.xpose.msra.mxu0 %v1756
        %2513 = vmatpush.xpose.msra.mxu0 %v1747
        %2514 = vmatmul.f32.gmra.mxu0 %v2185
        %v2515 = vpop.f32.mrf.mxu0
        %v2516 = vadd.f32 %v2496, %v2515
        %2517 = vdwg.mxu0
        %2518 = vmatpush.xpose.msra.mxu0 %v1883
        %2519 = vmatpush.xpose.msra.mxu0 %v1874
        %2520 = vmatpush.xpose.msra.mxu0 %v1865
        %2521 = vmatpush.xpose.msra.mxu0 %v1856
        %2522 = vmatpush.xpose.msra.mxu0 %v1847
        %2523 = vmatpush.xpose.msra.mxu0 %v1838
        %2524 = vmatpush.xpose.msra.mxu0 %v1829
        %2525 = vmatpush.xpose.msra.mxu0 %v1820
        %2526 = vmatpush.xpose.msra.mxu0 %v1811
        %2527 = vmatpush.xpose.msra.mxu0 %v1802
        %2528 = vmatpush.xpose.msra.mxu0 %v1793
        %2529 = vmatpush.xpose.msra.mxu0 %v1784
        %2530 = vmatpush.xpose.msra.mxu0 %v1775
        %2531 = vmatpush.xpose.msra.mxu0 %v1766
        %2532 = vmatpush.xpose.msra.mxu0 %v1757
        %2533 = vmatpush.xpose.msra.mxu0 %v1748
        %2534 = vmatmul.f32.gmra.mxu0 %v2186
        %v2535 = vpop.f32.mrf.mxu0
        %v2536 = vadd.f32 %v2516, %v2535
        %2537 = vdwg.mxu0
        %2538 = vmatpush.xpose.msra.mxu0 %v1884
        %2539 = vmatpush.xpose.msra.mxu0 %v1875
        %2540 = vmatpush.xpose.msra.mxu0 %v1866
        %2541 = vmatpush.xpose.msra.mxu0 %v1857
        %2542 = vmatpush.xpose.msra.mxu0 %v1848
        %2543 = vmatpush.xpose.msra.mxu0 %v1839
        %2544 = vmatpush.xpose.msra.mxu0 %v1830
        %2545 = vmatpush.xpose.msra.mxu0 %v1821
        %2546 = vmatpush.xpose.msra.mxu0 %v1812
        %2547 = vmatpush.xpose.msra.mxu0 %v1803
        %2548 = vmatpush.xpose.msra.mxu0 %v1794
        %2549 = vmatpush.xpose.msra.mxu0 %v1785
        %2550 = vmatpush.xpose.msra.mxu0 %v1776
        %2551 = vmatpush.xpose.msra.mxu0 %v1767
        %2552 = vmatpush.xpose.msra.mxu0 %v1758
        %2553 = vmatpush.xpose.msra.mxu0 %v1749
        %2554 = vmatmul.f32.gmra.mxu0 %v2188
        %v2555 = vpop.f32.mrf.mxu0
        %v2556 = vadd.f32 %v2536, %v2555
        %2557 = vdwg.mxu0
        %2558 = vmatpush.xpose.msra.mxu0 %v2020
        %2559 = vmatpush.xpose.msra.mxu0 %v2011
        %2560 = vmatpush.xpose.msra.mxu0 %v2002
        %2561 = vmatpush.xpose.msra.mxu0 %v1993
        %2562 = vmatpush.xpose.msra.mxu0 %v1984
        %2563 = vmatpush.xpose.msra.mxu0 %v1975
        %2564 = vmatpush.xpose.msra.mxu0 %v1966
        %2565 = vmatpush.xpose.msra.mxu0 %v1957
        %2566 = vmatpush.xpose.msra.mxu0 %v1948
        %2567 = vmatpush.xpose.msra.mxu0 %v1939
        %2568 = vmatpush.xpose.msra.mxu0 %v1930
        %2569 = vmatpush.xpose.msra.mxu0 %v1921
        %2570 = vmatpush.xpose.msra.mxu0 %v1912
        %2571 = vmatpush.xpose.msra.mxu0 %v1903
        %2572 = vmatpush.xpose.msra.mxu0 %v1894
        %2573 = vmatpush.xpose.msra.mxu0 %v1885
        %2574 = vmatmul.f32.gmra.mxu0 %v2179
        %v2575 = vpop.f32.mrf.mxu0
        %v2576 = vadd.f32 0.0, %v2575
        %2577 = vdwg.mxu0
        %2578 = vmatpush.xpose.msra.mxu0 %v2021
        %2579 = vmatpush.xpose.msra.mxu0 %v2012
        %2580 = vmatpush.xpose.msra.mxu0 %v2003
        %2581 = vmatpush.xpose.msra.mxu0 %v1994
        %2582 = vmatpush.xpose.msra.mxu0 %v1985
        %2583 = vmatpush.xpose.msra.mxu0 %v1976
        %2584 = vmatpush.xpose.msra.mxu0 %v1967
        %2585 = vmatpush.xpose.msra.mxu0 %v1958
        %2586 = vmatpush.xpose.msra.mxu0 %v1949
        %2587 = vmatpush.xpose.msra.mxu0 %v1940
        %2588 = vmatpush.xpose.msra.mxu0 %v1931
        %2589 = vmatpush.xpose.msra.mxu0 %v1922
        %2590 = vmatpush.xpose.msra.mxu0 %v1913
        %2591 = vmatpush.xpose.msra.mxu0 %v1904
        %2592 = vmatpush.xpose.msra.mxu0 %v1895
        %2593 = vmatpush.xpose.msra.mxu0 %v1886
        %2594 = vmatmul.f32.gmra.mxu0 %v2180
        %v2595 = vpop.f32.mrf.mxu0
        %v2596 = vadd.f32 %v2576, %v2595
        %2597 = vdwg.mxu0
        %2598 = vmatpush.xpose.msra.mxu0 %v2022
        %2599 = vmatpush.xpose.msra.mxu0 %v2013
        %2600 = vmatpush.xpose.msra.mxu0 %v2004
        %2601 = vmatpush.xpose.msra.mxu0 %v1995
        %2602 = vmatpush.xpose.msra.mxu0 %v1986
        %2603 = vmatpush.xpose.msra.mxu0 %v1977
        %2604 = vmatpush.xpose.msra.mxu0 %v1968
        %2605 = vmatpush.xpose.msra.mxu0 %v1959
        %2606 = vmatpush.xpose.msra.mxu0 %v1950
        %2607 = vmatpush.xpose.msra.mxu0 %v1941
        %2608 = vmatpush.xpose.msra.mxu0 %v1932
        %2609 = vmatpush.xpose.msra.mxu0 %v1923
        %2610 = vmatpush.xpose.msra.mxu0 %v1914
        %2611 = vmatpush.xpose.msra.mxu0 %v1905
        %2612 = vmatpush.xpose.msra.mxu0 %v1896
        %2613 = vmatpush.xpose.msra.mxu0 %v1887
        %2614 = vmatmul.f32.gmra.mxu0 %v2181
        %v2615 = vpop.f32.mrf.mxu0
        %v2616 = vadd.f32 %v2596, %v2615
        %2617 = vdwg.mxu0
        %2618 = vmatpush.xpose.msra.mxu0 %v2023
        %2619 = vmatpush.xpose.msra.mxu0 %v2014
        %2620 = vmatpush.xpose.msra.mxu0 %v2005
        %2621 = vmatpush.xpose.msra.mxu0 %v1996
        %2622 = vmatpush.xpose.msra.mxu0 %v1987
        %2623 = vmatpush.xpose.msra.mxu0 %v1978
        %2624 = vmatpush.xpose.msra.mxu0 %v1969
        %2625 = vmatpush.xpose.msra.mxu0 %v1960
        %2626 = vmatpush.xpose.msra.mxu0 %v1951
        %2627 = vmatpush.xpose.msra.mxu0 %v1942
        %2628 = vmatpush.xpose.msra.mxu0 %v1933
        %2629 = vmatpush.xpose.msra.mxu0 %v1924
        %2630 = vmatpush.xpose.msra.mxu0 %v1915
        %2631 = vmatpush.xpose.msra.mxu0 %v1906
        %2632 = vmatpush.xpose.msra.mxu0 %v1897
        %2633 = vmatpush.xpose.msra.mxu0 %v1888
        %2634 = vmatmul.f32.gmra.mxu0 %v2182
        %v2635 = vpop.f32.mrf.mxu0
        %v2636 = vadd.f32 %v2616, %v2635
        %2637 = vdwg.mxu0
        %2638 = vmatpush.xpose.msra.mxu0 %v2024
        %2639 = vmatpush.xpose.msra.mxu0 %v2015
        %2640 = vmatpush.xpose.msra.mxu0 %v2006
        %2641 = vmatpush.xpose.msra.mxu0 %v1997
        %2642 = vmatpush.xpose.msra.mxu0 %v1988
        %2643 = vmatpush.xpose.msra.mxu0 %v1979
        %2644 = vmatpush.xpose.msra.mxu0 %v1970
        %2645 = vmatpush.xpose.msra.mxu0 %v1961
        %2646 = vmatpush.xpose.msra.mxu0 %v1952
        %2647 = vmatpush.xpose.msra.mxu0 %v1943
        %2648 = vmatpush.xpose.msra.mxu0 %v1934
        %2649 = vmatpush.xpose.msra.mxu0 %v1925
        %2650 = vmatpush.xpose.msra.mxu0 %v1916
        %2651 = vmatpush.xpose.msra.mxu0 %v1907
        %2652 = vmatpush.xpose.msra.mxu0 %v1898
        %2653 = vmatpush.xpose.msra.mxu0 %v1889
        %2654 = vmatmul.f32.gmra.mxu0 %v2183
        %v2655 = vpop.f32.mrf.mxu0
        %v2656 = vadd.f32 %v2636, %v2655
        %2657 = vdwg.mxu0
        %2658 = vmatpush.xpose.msra.mxu0 %v2025
        %2659 = vmatpush.xpose.msra.mxu0 %v2016
        %2660 = vmatpush.xpose.msra.mxu0 %v2007
        %2661 = vmatpush.xpose.msra.mxu0 %v1998
        %2662 = vmatpush.xpose.msra.mxu0 %v1989
        %2663 = vmatpush.xpose.msra.mxu0 %v1980
        %2664 = vmatpush.xpose.msra.mxu0 %v1971
        %2665 = vmatpush.xpose.msra.mxu0 %v1962
        %2666 = vmatpush.xpose.msra.mxu0 %v1953
        %2667 = vmatpush.xpose.msra.mxu0 %v1944
        %2668 = vmatpush.xpose.msra.mxu0 %v1935
        %2669 = vmatpush.xpose.msra.mxu0 %v1926
        %2670 = vmatpush.xpose.msra.mxu0 %v1917
        %2671 = vmatpush.xpose.msra.mxu0 %v1908
        %2672 = vmatpush.xpose.msra.mxu0 %v1899
        %2673 = vmatpush.xpose.msra.mxu0 %v1890
        %2674 = vmatmul.f32.gmra.mxu0 %v2184
        %v2675 = vpop.f32.mrf.mxu0
        %v2676 = vadd.f32 %v2656, %v2675
        %2677 = vdwg.mxu0
        %2678 = vmatpush.xpose.msra.mxu0 %v2026
        %2679 = vmatpush.xpose.msra.mxu0 %v2017
        %2680 = vmatpush.xpose.msra.mxu0 %v2008
        %2681 = vmatpush.xpose.msra.mxu0 %v1999
        %2682 = vmatpush.xpose.msra.mxu0 %v1990
        %2683 = vmatpush.xpose.msra.mxu0 %v1981
        %2684 = vmatpush.xpose.msra.mxu0 %v1972
        %2685 = vmatpush.xpose.msra.mxu0 %v1963
        %2686 = vmatpush.xpose.msra.mxu0 %v1954
        %2687 = vmatpush.xpose.msra.mxu0 %v1945
        %2688 = vmatpush.xpose.msra.mxu0 %v1936
        %2689 = vmatpush.xpose.msra.mxu0 %v1927
        %2690 = vmatpush.xpose.msra.mxu0 %v1918
        %2691 = vmatpush.xpose.msra.mxu0 %v1909
        %2692 = vmatpush.xpose.msra.mxu0 %v1900
        %2693 = vmatpush.xpose.msra.mxu0 %v1891
        %2694 = vmatmul.f32.gmra.mxu0 %v2185
        %v2695 = vpop.f32.mrf.mxu0
        %v2696 = vadd.f32 %v2676, %v2695
        %2697 = vdwg.mxu0
        %2698 = vmatpush.xpose.msra.mxu0 %v2027
        %2699 = vmatpush.xpose.msra.mxu0 %v2018
        %2700 = vmatpush.xpose.msra.mxu0 %v2009
        %2701 = vmatpush.xpose.msra.mxu0 %v2000
        %2702 = vmatpush.xpose.msra.mxu0 %v1991
        %2703 = vmatpush.xpose.msra.mxu0 %v1982
        %2704 = vmatpush.xpose.msra.mxu0 %v1973
        %2705 = vmatpush.xpose.msra.mxu0 %v1964
        %2706 = vmatpush.xpose.msra.mxu0 %v1955
        %2707 = vmatpush.xpose.msra.mxu0 %v1946
        %2708 = vmatpush.xpose.msra.mxu0 %v1937
        %2709 = vmatpush.xpose.msra.mxu0 %v1928
        %2710 = vmatpush.xpose.msra.mxu0 %v1919
        %2711 = vmatpush.xpose.msra.mxu0 %v1910
        %2712 = vmatpush.xpose.msra.mxu0 %v1901
        %2713 = vmatpush.xpose.msra.mxu0 %v1892
        %2714 = vmatmul.f32.gmra.mxu0 %v2186
        %v2715 = vpop.f32.mrf.mxu0
        %v2716 = vadd.f32 %v2696, %v2715
        %2717 = vdwg.mxu0
        %2718 = vmatpush.xpose.msra.mxu0 %v2028
        %2719 = vmatpush.xpose.msra.mxu0 %v2019
        %2720 = vmatpush.xpose.msra.mxu0 %v2010
        %2721 = vmatpush.xpose.msra.mxu0 %v2001
        %2722 = vmatpush.xpose.msra.mxu0 %v1992
        %2723 = vmatpush.xpose.msra.mxu0 %v1983
        %2724 = vmatpush.xpose.msra.mxu0 %v1974
        %2725 = vmatpush.xpose.msra.mxu0 %v1965
        %2726 = vmatpush.xpose.msra.mxu0 %v1956
        %2727 = vmatpush.xpose.msra.mxu0 %v1947
        %2728 = vmatpush.xpose.msra.mxu0 %v1938
        %2729 = vmatpush.xpose.msra.mxu0 %v1929
        %2730 = vmatpush.xpose.msra.mxu0 %v1920
        %2731 = vmatpush.xpose.msra.mxu0 %v1911
        %2732 = vmatpush.xpose.msra.mxu0 %v1902
        %2733 = vmatpush.xpose.msra.mxu0 %v1893
        %2734 = vmatmul.f32.gmra.mxu0 %v2188
        %v2735 = vpop.f32.mrf.mxu0
        %v2736 = vadd.f32 %v2716, %v2735
        %2737 = vdwg.mxu0
        %2738 = vmatpush.xpose.msra.mxu0 %v2164
        %2739 = vmatpush.xpose.msra.mxu0 %v2155
        %2740 = vmatpush.xpose.msra.mxu0 %v2146
        %2741 = vmatpush.xpose.msra.mxu0 %v2137
        %2742 = vmatpush.xpose.msra.mxu0 %v2128
        %2743 = vmatpush.xpose.msra.mxu0 %v2119
        %2744 = vmatpush.xpose.msra.mxu0 %v2110
        %2745 = vmatpush.xpose.msra.mxu0 %v2101
        %2746 = vmatpush.xpose.msra.mxu0 %v2092
        %2747 = vmatpush.xpose.msra.mxu0 %v2083
        %2748 = vmatpush.xpose.msra.mxu0 %v2074
        %2749 = vmatpush.xpose.msra.mxu0 %v2065
        %2750 = vmatpush.xpose.msra.mxu0 %v2056
        %2751 = vmatpush.xpose.msra.mxu0 %v2047
        %2752 = vmatpush.xpose.msra.mxu0 %v2038
        %2753 = vmatpush.xpose.msra.mxu0 %v2029
        %2754 = vmatmul.f32.gmra.mxu0 %v2179
        %v2755 = vpop.f32.mrf.mxu0
        %v2756 = vadd.f32 0.0, %v2755
        %2757 = vdwg.mxu0
        %2758 = vmatpush.xpose.msra.mxu0 %v2165
        %2759 = vmatpush.xpose.msra.mxu0 %v2156
        %2760 = vmatpush.xpose.msra.mxu0 %v2147
        %2761 = vmatpush.xpose.msra.mxu0 %v2138
        %2762 = vmatpush.xpose.msra.mxu0 %v2129
        %2763 = vmatpush.xpose.msra.mxu0 %v2120
        %2764 = vmatpush.xpose.msra.mxu0 %v2111
        %2765 = vmatpush.xpose.msra.mxu0 %v2102
        %2766 = vmatpush.xpose.msra.mxu0 %v2093
        %2767 = vmatpush.xpose.msra.mxu0 %v2084
        %2768 = vmatpush.xpose.msra.mxu0 %v2075
        %2769 = vmatpush.xpose.msra.mxu0 %v2066
        %2770 = vmatpush.xpose.msra.mxu0 %v2057
        %2771 = vmatpush.xpose.msra.mxu0 %v2048
        %2772 = vmatpush.xpose.msra.mxu0 %v2039
        %2773 = vmatpush.xpose.msra.mxu0 %v2030
        %2774 = vmatmul.f32.gmra.mxu0 %v2180
        %v2775 = vpop.f32.mrf.mxu0
        %v2776 = vadd.f32 %v2756, %v2775
        %2777 = vdwg.mxu0
        %2778 = vmatpush.xpose.msra.mxu0 %v2166
        %2779 = vmatpush.xpose.msra.mxu0 %v2157
        %2780 = vmatpush.xpose.msra.mxu0 %v2148
        %2781 = vmatpush.xpose.msra.mxu0 %v2139
        %2782 = vmatpush.xpose.msra.mxu0 %v2130
        %2783 = vmatpush.xpose.msra.mxu0 %v2121
        %2784 = vmatpush.xpose.msra.mxu0 %v2112
        %2785 = vmatpush.xpose.msra.mxu0 %v2103
        %2786 = vmatpush.xpose.msra.mxu0 %v2094
        %2787 = vmatpush.xpose.msra.mxu0 %v2085
        %2788 = vmatpush.xpose.msra.mxu0 %v2076
        %2789 = vmatpush.xpose.msra.mxu0 %v2067
        %2790 = vmatpush.xpose.msra.mxu0 %v2058
        %2791 = vmatpush.xpose.msra.mxu0 %v2049
        %2792 = vmatpush.xpose.msra.mxu0 %v2040
        %2793 = vmatpush.xpose.msra.mxu0 %v2031
        %2794 = vmatmul.f32.gmra.mxu0 %v2181
        %v2795 = vpop.f32.mrf.mxu0
        %v2796 = vadd.f32 %v2776, %v2795
        %2797 = vdwg.mxu0
        %2798 = vmatpush.xpose.msra.mxu0 %v2167
        %2799 = vmatpush.xpose.msra.mxu0 %v2158
        %2800 = vmatpush.xpose.msra.mxu0 %v2149
        %2801 = vmatpush.xpose.msra.mxu0 %v2140
        %2802 = vmatpush.xpose.msra.mxu0 %v2131
        %2803 = vmatpush.xpose.msra.mxu0 %v2122
        %2804 = vmatpush.xpose.msra.mxu0 %v2113
        %2805 = vmatpush.xpose.msra.mxu0 %v2104
        %2806 = vmatpush.xpose.msra.mxu0 %v2095
        %2807 = vmatpush.xpose.msra.mxu0 %v2086
        %2808 = vmatpush.xpose.msra.mxu0 %v2077
        %2809 = vmatpush.xpose.msra.mxu0 %v2068
        %2810 = vmatpush.xpose.msra.mxu0 %v2059
        %2811 = vmatpush.xpose.msra.mxu0 %v2050
        %2812 = vmatpush.xpose.msra.mxu0 %v2041
        %2813 = vmatpush.xpose.msra.mxu0 %v2032
        %2814 = vmatmul.f32.gmra.mxu0 %v2182
        %v2815 = vpop.f32.mrf.mxu0
        %v2816 = vadd.f32 %v2796, %v2815
        %2817 = vdwg.mxu0
        %2818 = vmatpush.xpose.msra.mxu0 %v2168
        %2819 = vmatpush.xpose.msra.mxu0 %v2159
        %2820 = vmatpush.xpose.msra.mxu0 %v2150
        %2821 = vmatpush.xpose.msra.mxu0 %v2141
        %2822 = vmatpush.xpose.msra.mxu0 %v2132
        %2823 = vmatpush.xpose.msra.mxu0 %v2123
        %2824 = vmatpush.xpose.msra.mxu0 %v2114
        %2825 = vmatpush.xpose.msra.mxu0 %v2105
        %2826 = vmatpush.xpose.msra.mxu0 %v2096
        %2827 = vmatpush.xpose.msra.mxu0 %v2087
        %2828 = vmatpush.xpose.msra.mxu0 %v2078
        %2829 = vmatpush.xpose.msra.mxu0 %v2069
        %2830 = vmatpush.xpose.msra.mxu0 %v2060
        %2831 = vmatpush.xpose.msra.mxu0 %v2051
        %2832 = vmatpush.xpose.msra.mxu0 %v2042
        %2833 = vmatpush.xpose.msra.mxu0 %v2033
        %2834 = vmatmul.f32.gmra.mxu0 %v2183
        %v2835 = vpop.f32.mrf.mxu0
        %v2836 = vadd.f32 %v2816, %v2835
        %2837 = vdwg.mxu0
        %2838 = vmatpush.xpose.msra.mxu0 %v2169
        %2839 = vmatpush.xpose.msra.mxu0 %v2160
        %2840 = vmatpush.xpose.msra.mxu0 %v2151
        %2841 = vmatpush.xpose.msra.mxu0 %v2142
        %2842 = vmatpush.xpose.msra.mxu0 %v2133
        %2843 = vmatpush.xpose.msra.mxu0 %v2124
        %2844 = vmatpush.xpose.msra.mxu0 %v2115
        %2845 = vmatpush.xpose.msra.mxu0 %v2106
        %2846 = vmatpush.xpose.msra.mxu0 %v2097
        %2847 = vmatpush.xpose.msra.mxu0 %v2088
        %2848 = vmatpush.xpose.msra.mxu0 %v2079
        %2849 = vmatpush.xpose.msra.mxu0 %v2070
        %2850 = vmatpush.xpose.msra.mxu0 %v2061
        %2851 = vmatpush.xpose.msra.mxu0 %v2052
        %2852 = vmatpush.xpose.msra.mxu0 %v2043
        %2853 = vmatpush.xpose.msra.mxu0 %v2034
        %2854 = vmatmul.f32.gmra.mxu0 %v2184
        %v2855 = vpop.f32.mrf.mxu0
        %v2856 = vadd.f32 %v2836, %v2855
        %2857 = vdwg.mxu0
        %2858 = vmatpush.xpose.msra.mxu0 %v2170
        %2859 = vmatpush.xpose.msra.mxu0 %v2161
        %2860 = vmatpush.xpose.msra.mxu0 %v2152
        %2861 = vmatpush.xpose.msra.mxu0 %v2143
        %2862 = vmatpush.xpose.msra.mxu0 %v2134
        %2863 = vmatpush.xpose.msra.mxu0 %v2125
        %2864 = vmatpush.xpose.msra.mxu0 %v2116
        %2865 = vmatpush.xpose.msra.mxu0 %v2107
        %2866 = vmatpush.xpose.msra.mxu0 %v2098
        %2867 = vmatpush.xpose.msra.mxu0 %v2089
        %2868 = vmatpush.xpose.msra.mxu0 %v2080
        %2869 = vmatpush.xpose.msra.mxu0 %v2071
        %2870 = vmatpush.xpose.msra.mxu0 %v2062
        %2871 = vmatpush.xpose.msra.mxu0 %v2053
        %2872 = vmatpush.xpose.msra.mxu0 %v2044
        %2873 = vmatpush.xpose.msra.mxu0 %v2035
        %2874 = vmatmul.f32.gmra.mxu0 %v2185
        %v2875 = vpop.f32.mrf.mxu0
        %v2876 = vadd.f32 %v2856, %v2875
        %2877 = vdwg.mxu0
        %2878 = vmatpush.xpose.msra.mxu0 %v2171
        %2879 = vmatpush.xpose.msra.mxu0 %v2162
        %2880 = vmatpush.xpose.msra.mxu0 %v2153
        %2881 = vmatpush.xpose.msra.mxu0 %v2144
        %2882 = vmatpush.xpose.msra.mxu0 %v2135
        %2883 = vmatpush.xpose.msra.mxu0 %v2126
        %2884 = vmatpush.xpose.msra.mxu0 %v2117
        %2885 = vmatpush.xpose.msra.mxu0 %v2108
        %2886 = vmatpush.xpose.msra.mxu0 %v2099
        %2887 = vmatpush.xpose.msra.mxu0 %v2090
        %2888 = vmatpush.xpose.msra.mxu0 %v2081
        %2889 = vmatpush.xpose.msra.mxu0 %v2072
        %2890 = vmatpush.xpose.msra.mxu0 %v2063
        %2891 = vmatpush.xpose.msra.mxu0 %v2054
        %2892 = vmatpush.xpose.msra.mxu0 %v2045
        %2893 = vmatpush.xpose.msra.mxu0 %v2036
        %2894 = vmatmul.f32.gmra.mxu0 %v2186
        %v2895 = vpop.f32.mrf.mxu0
        %v2896 = vadd.f32 %v2876, %v2895
        %2897 = vdwg.mxu0
        %2898 = vmatpush.xpose.msra.mxu0 %v2172
        %2899 = vmatpush.xpose.msra.mxu0 %v2163
        %2900 = vmatpush.xpose.msra.mxu0 %v2154
        %2901 = vmatpush.xpose.msra.mxu0 %v2145
        %2902 = vmatpush.xpose.msra.mxu0 %v2136
        %2903 = vmatpush.xpose.msra.mxu0 %v2127
        %2904 = vmatpush.xpose.msra.mxu0 %v2118
        %2905 = vmatpush.xpose.msra.mxu0 %v2109
        %2906 = vmatpush.xpose.msra.mxu0 %v2100
        %2907 = vmatpush.xpose.msra.mxu0 %v2091
        %2908 = vmatpush.xpose.msra.mxu0 %v2082
        %2909 = vmatpush.xpose.msra.mxu0 %v2073
        %2910 = vmatpush.xpose.msra.mxu0 %v2064
        %2911 = vmatpush.xpose.msra.mxu0 %v2055
        %2912 = vmatpush.xpose.msra.mxu0 %v2046
        %2913 = vmatpush.xpose.msra.mxu0 %v2037
        %2914 = vmatmul.f32.gmra.mxu0 %v2188
        %v2915 = vpop.f32.mrf.mxu0
        %v2916 = vadd.f32 %v2896, %v2915
        %2917 = vdwg.mxu0
        %v2922 = vrot.slane %v2556, 6
        %v2923 = vrot.slane %v2736, 4
        %v2924 = vrot.slane %v2916, 2
        %vm2925 = vcmask 1041408
        %v2926 = vsel %vm2925, %v2376, %v2922
        %vm2927 = vcmask 1045508
        %v2928 = vsel %vm2927, %v2923, %v2924
        %vm2929 = vcmask 1043456
        %v2930 = vsel %vm2929, %v2926, %v2928
        %v2932 = vadd.f32 %v1596, %v2930
        %2933 = vst [vmem:[#allocation2] sm:$0xff] %v2932
        %v2934 = vld [vmem:[#allocation3] sm:$0x3]
        %v2935 = vld [vmem:[%s1541] sm:$0xff]
        %v2936 = vld [vmem:[%s1541 + $0x8] sm:$0xff]
        %v2937 = vld [vmem:[%s1541 + $0x10] sm:$0xff]
        %v2938 = vld [vmem:[%s1541 + $0x18] sm:$0xff]
        %v2939 = vld [vmem:[%s1541 + $0x20] sm:$0xff]
        %v2940 = vld [vmem:[%s1541 + $0x28] sm:$0xff]
        %v2941 = vld [vmem:[%s1541 + $0x30] sm:$0xff]
        %v2942 = vld [vmem:[%s1541 + $0x38] sm:$0xff]
        %v2943 = vld [vmem:[%s1541 + $0x40] sm:$0xff]
        %v2944 = vld [vmem:[%s1541 + $0x48] sm:$0xff]
        %v2945 = vld [vmem:[%s1541 + $0x50] sm:$0xff]
        %v2946 = vld [vmem:[%s1541 + $0x58] sm:$0xff]
        %v2947 = vld [vmem:[%s1541 + $0x60] sm:$0xff]
        %v2948 = vld [vmem:[%s1541 + $0x68] sm:$0xff]
        %v2949 = vld [vmem:[%s1541 + $0x70] sm:$0xff]
        %v2950 = vld [vmem:[%s1541 + $0x78] sm:$0xff]
        %v2951 = vld [vmem:[%s1541 + $0x80] sm:$0xff]
        %v2952 = vld [vmem:[%s1541 + $0x88] sm:$0xff]
        %2953 = vst [vmem:[#allocation1] ss:$4 sm:$0xff] %v1593
        %s2954 = scalar_lea.vmem [#allocation1], 32
        %2955 = vst [vmem:[%s2954] ss:$4 sm:$0xff] %v1594
        %v2956 = vld.sshfl [vmem:[#allocation1] sm:$0xff pattern:$0x73625140]
        %v2957 = vld.sshfl [vmem:[#allocation1 + $0x8] sm:$0xff pattern:$0x73625140]
        %v2958 = vld.sshfl [vmem:[#allocation1 + $0x10] sm:$0xff pattern:$0x73625140]
        %v2959 = vld.sshfl [vmem:[#allocation1 + $0x18] sm:$0xff pattern:$0x73625140]
        %v2960 = vld.sshfl [vmem:[#allocation1 + $0x20] sm:$0xff pattern:$0x73625140]
        %v2961 = vld.sshfl [vmem:[#allocation1 + $0x28] sm:$0xff pattern:$0x73625140]
        %v2962 = vld.sshfl [vmem:[#allocation1 + $0x30] sm:$0xff pattern:$0x73625140]
        %v2963 = vld.sshfl [vmem:[#allocation1 + $0x38] sm:$0xff pattern:$0x73625140]
        %2964 = vst [vmem:[#allocation1] ss:$4 sm:$0xff] %v1595
        %v2965 = vld.sshfl [vmem:[#allocation1] sm:$0xff pattern:$0x73625140]
        %2975 = vmatpush.xpose.msra.mxu0 0.0
        %2976 = vmatpush.xpose.msra.mxu0 0.0
        %2977 = vmatpush.xpose.msra.mxu0 0.0
        %2978 = vmatpush.xpose.msra.mxu0 0.0
        %2979 = vmatpush.xpose.msra.mxu0 0.0
        %2980 = vmatpush.xpose.msra.mxu0 0.0
        %2981 = vmatpush.xpose.msra.mxu0 0.0
        %2982 = vmatpush.xpose.msra.mxu0 0.0
        %2983 = vmatpush.xpose.msra.mxu0 0.0
        %2984 = vmatpush.xpose.msra.mxu0 0.0
        %2985 = vmatpush.xpose.msra.mxu0 0.0
        %2986 = vmatpush.xpose.msra.mxu0 0.0
        %2987 = vmatpush.xpose.msra.mxu0 0.0
        %2988 = vmatpush.xpose.msra.mxu0 0.0
        %2989 = vmatpush.xpose.msra.mxu0 %v2944
        %2990 = vmatpush.xpose.msra.mxu0 %v2935
        %2991 = vmatmul.f32.gmra.mxu0 %v2956
        %v2992 = vpop.f32.mrf.mxu0
        %v2993 = vadd.f32 0.0, %v2992
        %2994 = vdwg.mxu0
        %2995 = vmatpush.xpose.msra.mxu0 0.0
        %2996 = vmatpush.xpose.msra.mxu0 0.0
        %2997 = vmatpush.xpose.msra.mxu0 0.0
        %2998 = vmatpush.xpose.msra.mxu0 0.0
        %2999 = vmatpush.xpose.msra.mxu0 0.0
        %3000 = vmatpush.xpose.msra.mxu0 0.0
        %3001 = vmatpush.xpose.msra.mxu0 0.0
        %3002 = vmatpush.xpose.msra.mxu0 0.0
        %3003 = vmatpush.xpose.msra.mxu0 0.0
        %3004 = vmatpush.xpose.msra.mxu0 0.0
        %3005 = vmatpush.xpose.msra.mxu0 0.0
        %3006 = vmatpush.xpose.msra.mxu0 0.0
        %3007 = vmatpush.xpose.msra.mxu0 0.0
        %3008 = vmatpush.xpose.msra.mxu0 0.0
        %3009 = vmatpush.xpose.msra.mxu0 %v2945
        %3010 = vmatpush.xpose.msra.mxu0 %v2936
        %3011 = vmatmul.f32.gmra.mxu0 %v2957
        %v3012 = vpop.f32.mrf.mxu0
        %v3013 = vadd.f32 %v2993, %v3012
        %3014 = vdwg.mxu0
        %3015 = vmatpush.xpose.msra.mxu0 0.0
        %3016 = vmatpush.xpose.msra.mxu0 0.0
        %3017 = vmatpush.xpose.msra.mxu0 0.0
        %3018 = vmatpush.xpose.msra.mxu0 0.0
        %3019 = vmatpush.xpose.msra.mxu0 0.0
        %3020 = vmatpush.xpose.msra.mxu0 0.0
        %3021 = vmatpush.xpose.msra.mxu0 0.0
        %3022 = vmatpush.xpose.msra.mxu0 0.0
        %3023 = vmatpush.xpose.msra.mxu0 0.0
        %3024 = vmatpush.xpose.msra.mxu0 0.0
        %3025 = vmatpush.xpose.msra.mxu0 0.0
        %3026 = vmatpush.xpose.msra.mxu0 0.0
        %3027 = vmatpush.xpose.msra.mxu0 0.0
        %3028 = vmatpush.xpose.msra.mxu0 0.0
        %3029 = vmatpush.xpose.msra.mxu0 %v2946
        %3030 = vmatpush.xpose.msra.mxu0 %v2937
        %3031 = vmatmul.f32.gmra.mxu0 %v2958
        %v3032 = vpop.f32.mrf.mxu0
        %v3033 = vadd.f32 %v3013, %v3032
        %3034 = vdwg.mxu0
        %3035 = vmatpush.xpose.msra.mxu0 0.0
        %3036 = vmatpush.xpose.msra.mxu0 0.0
        %3037 = vmatpush.xpose.msra.mxu0 0.0
        %3038 = vmatpush.xpose.msra.mxu0 0.0
        %3039 = vmatpush.xpose.msra.mxu0 0.0
        %3040 = vmatpush.xpose.msra.mxu0 0.0
        %3041 = vmatpush.xpose.msra.mxu0 0.0
        %3042 = vmatpush.xpose.msra.mxu0 0.0
        %3043 = vmatpush.xpose.msra.mxu0 0.0
        %3044 = vmatpush.xpose.msra.mxu0 0.0
        %3045 = vmatpush.xpose.msra.mxu0 0.0
        %3046 = vmatpush.xpose.msra.mxu0 0.0
        %3047 = vmatpush.xpose.msra.mxu0 0.0
        %3048 = vmatpush.xpose.msra.mxu0 0.0
        %3049 = vmatpush.xpose.msra.mxu0 %v2947
        %3050 = vmatpush.xpose.msra.mxu0 %v2938
        %3051 = vmatmul.f32.gmra.mxu0 %v2959
        %v3052 = vpop.f32.mrf.mxu0
        %v3053 = vadd.f32 %v3033, %v3052
        %3054 = vdwg.mxu0
        %3055 = vmatpush.xpose.msra.mxu0 0.0
        %3056 = vmatpush.xpose.msra.mxu0 0.0
        %3057 = vmatpush.xpose.msra.mxu0 0.0
        %3058 = vmatpush.xpose.msra.mxu0 0.0
        %3059 = vmatpush.xpose.msra.mxu0 0.0
        %3060 = vmatpush.xpose.msra.mxu0 0.0
        %3061 = vmatpush.xpose.msra.mxu0 0.0
        %3062 = vmatpush.xpose.msra.mxu0 0.0
        %3063 = vmatpush.xpose.msra.mxu0 0.0
        %3064 = vmatpush.xpose.msra.mxu0 0.0
        %3065 = vmatpush.xpose.msra.mxu0 0.0
        %3066 = vmatpush.xpose.msra.mxu0 0.0
        %3067 = vmatpush.xpose.msra.mxu0 0.0
        %3068 = vmatpush.xpose.msra.mxu0 0.0
        %3069 = vmatpush.xpose.msra.mxu0 %v2948
        %3070 = vmatpush.xpose.msra.mxu0 %v2939
        %3071 = vmatmul.f32.gmra.mxu0 %v2960
        %v3072 = vpop.f32.mrf.mxu0
        %v3073 = vadd.f32 %v3053, %v3072
        %3074 = vdwg.mxu0
        %3075 = vmatpush.xpose.msra.mxu0 0.0
        %3076 = vmatpush.xpose.msra.mxu0 0.0
        %3077 = vmatpush.xpose.msra.mxu0 0.0
        %3078 = vmatpush.xpose.msra.mxu0 0.0
        %3079 = vmatpush.xpose.msra.mxu0 0.0
        %3080 = vmatpush.xpose.msra.mxu0 0.0
        %3081 = vmatpush.xpose.msra.mxu0 0.0
        %3082 = vmatpush.xpose.msra.mxu0 0.0
        %3083 = vmatpush.xpose.msra.mxu0 0.0
        %3084 = vmatpush.xpose.msra.mxu0 0.0
        %3085 = vmatpush.xpose.msra.mxu0 0.0
        %3086 = vmatpush.xpose.msra.mxu0 0.0
        %3087 = vmatpush.xpose.msra.mxu0 0.0
        %3088 = vmatpush.xpose.msra.mxu0 0.0
        %3089 = vmatpush.xpose.msra.mxu0 %v2949
        %3090 = vmatpush.xpose.msra.mxu0 %v2940
        %3091 = vmatmul.f32.gmra.mxu0 %v2961
        %v3092 = vpop.f32.mrf.mxu0
        %v3093 = vadd.f32 %v3073, %v3092
        %3094 = vdwg.mxu0
        %3095 = vmatpush.xpose.msra.mxu0 0.0
        %3096 = vmatpush.xpose.msra.mxu0 0.0
        %3097 = vmatpush.xpose.msra.mxu0 0.0
        %3098 = vmatpush.xpose.msra.mxu0 0.0
        %3099 = vmatpush.xpose.msra.mxu0 0.0
        %3100 = vmatpush.xpose.msra.mxu0 0.0
        %3101 = vmatpush.xpose.msra.mxu0 0.0
        %3102 = vmatpush.xpose.msra.mxu0 0.0
        %3103 = vmatpush.xpose.msra.mxu0 0.0
        %3104 = vmatpush.xpose.msra.mxu0 0.0
        %3105 = vmatpush.xpose.msra.mxu0 0.0
        %3106 = vmatpush.xpose.msra.mxu0 0.0
        %3107 = vmatpush.xpose.msra.mxu0 0.0
        %3108 = vmatpush.xpose.msra.mxu0 0.0
        %3109 = vmatpush.xpose.msra.mxu0 %v2950
        %3110 = vmatpush.xpose.msra.mxu0 %v2941
        %3111 = vmatmul.f32.gmra.mxu0 %v2962
        %v3112 = vpop.f32.mrf.mxu0
        %v3113 = vadd.f32 %v3093, %v3112
        %3114 = vdwg.mxu0
        %3115 = vmatpush.xpose.msra.mxu0 0.0
        %3116 = vmatpush.xpose.msra.mxu0 0.0
        %3117 = vmatpush.xpose.msra.mxu0 0.0
        %3118 = vmatpush.xpose.msra.mxu0 0.0
        %3119 = vmatpush.xpose.msra.mxu0 0.0
        %3120 = vmatpush.xpose.msra.mxu0 0.0
        %3121 = vmatpush.xpose.msra.mxu0 0.0
        %3122 = vmatpush.xpose.msra.mxu0 0.0
        %3123 = vmatpush.xpose.msra.mxu0 0.0
        %3124 = vmatpush.xpose.msra.mxu0 0.0
        %3125 = vmatpush.xpose.msra.mxu0 0.0
        %3126 = vmatpush.xpose.msra.mxu0 0.0
        %3127 = vmatpush.xpose.msra.mxu0 0.0
        %3128 = vmatpush.xpose.msra.mxu0 0.0
        %3129 = vmatpush.xpose.msra.mxu0 %v2951
        %3130 = vmatpush.xpose.msra.mxu0 %v2942
        %3131 = vmatmul.f32.gmra.mxu0 %v2963
        %v3132 = vpop.f32.mrf.mxu0
        %v3133 = vadd.f32 %v3113, %v3132
        %3134 = vdwg.mxu0
        %3135 = vmatpush.xpose.msra.mxu0 0.0
        %3136 = vmatpush.xpose.msra.mxu0 0.0
        %3137 = vmatpush.xpose.msra.mxu0 0.0
        %3138 = vmatpush.xpose.msra.mxu0 0.0
        %3139 = vmatpush.xpose.msra.mxu0 0.0
        %3140 = vmatpush.xpose.msra.mxu0 0.0
        %3141 = vmatpush.xpose.msra.mxu0 0.0
        %3142 = vmatpush.xpose.msra.mxu0 0.0
        %3143 = vmatpush.xpose.msra.mxu0 0.0
        %3144 = vmatpush.xpose.msra.mxu0 0.0
        %3145 = vmatpush.xpose.msra.mxu0 0.0
        %3146 = vmatpush.xpose.msra.mxu0 0.0
        %3147 = vmatpush.xpose.msra.mxu0 0.0
        %3148 = vmatpush.xpose.msra.mxu0 0.0
        %3149 = vmatpush.xpose.msra.mxu0 %v2952
        %3150 = vmatpush.xpose.msra.mxu0 %v2943
        %3151 = vmatmul.f32.gmra.mxu0 %v2965
        %v3152 = vpop.f32.mrf.mxu0
        %v3153 = vadd.f32 %v3133, %v3152
        %3154 = vdwg.mxu0
        %v3155 = vadd.f32 %v2934, %v3153
        %vm3156 = vcmask 123904
        %3157 = vst.msk [vmem:[#allocation3] sm:$0x3] %vm3156, %v3155
        %p3158 = scmp.eq.s32.totalorder %s23, 3
        // Predicated region
        $region103: #{drqnv1_forward.5} parent=89 // pred_check
          %p3159 = pneg %p3158
        $region104: #{drqnv1_forward.5} parent=89 // pred_check_branch
          %3161 = sbr.rel (%p3159) target = $region106
        $region105: #{drqnv1_forward.5} parent=89 // pred_region
          %v3162 = vld [vmem:[#allocation2] sm:$0xff]
          %v3163 = vld [vmem:[%s3] sm:$0xf]
          %v3165 = vperm.slane %v3163, 0
          %v3166 = vperm.slane %v3163, 1
          %v3167 = vperm.slane %v3163, 2
          %v3168 = vperm.slane %v3163, 3
          %v3169 = vrot.slane %v3166, 6
          %v3170 = vrot.slane %v3167, 4
          %v3171 = vrot.slane %v3168, 2
          %v3172 = vsel %vm2925, %v3165, %v3169
          %v3173 = vsel %vm2927, %v3170, %v3171
          %v3174 = vsel %vm2929, %v3172, %v3173
          %v3176 = vadd.f32 %v3162, %v3174
          %v3177 = vxor.u32 %v3176, 2147483648
          %v3178 = vmul.f32 %v3177, 1.442695
          %v3179 = vpow.pop %v3178
          %v3180 = vadd.f32 %v3179, 1.0
          %v3181 = vrcp.pop %v3180
          %v3182 = vmul.f32 %v3180, %v3181
          %v3183 = vsub.f32 1.0, %v3182
          %v3184 = vmul.f32 %v3181, %v3183
          %v3185 = vadd.f32 %v3181, %v3184
          %vm3186 = vweird.f32 %v3180
          %vm3187 = vweird.f32 %v3181
          %vm3188 = vmor %vm3186, %vm3187
          %v3189 = vsel %vm3188, %v3181, %v3185
          %v3190 = vand.u32 2147483647, %v3180
          %vm3191 = vcmp.eq.f32.partialorder %v3190, 8.507059e+37
          %v3192 = vand.u32 %v3180, 2147483648
          %v3193 = vor.u32 1.1754944e-38, %v3192
          %v3194 = vsel %vm3191, %v3193, %v3189
          %v3195 = vmul.f32 1.0, %v3194
          %v3196 = vld [vmem:[%s4] sm:$0xff]
          %v3197 = vld [vmem:[%s4 + $0x8] sm:$0xff]
          %v3198 = vld [vmem:[%s4 + $0x10] sm:$0xff]
          %v3199 = vld [vmem:[%s4 + $0x18] sm:$0xff]
          %v3200 = vld [vmem:[%s5] sm:$0x1]
          %v3202 = vperm.slane %v3200, 0
          %3205 = vst [vmem:[#allocation1] ss:$4 sm:$0xff] %v3195
          %v3206 = vld.sshfl [vmem:[#allocation1] sm:$0xff pattern:$0x73625140]
          %v3207 = vld.sshfl [vmem:[#allocation1 + $0x8] sm:$0xff pattern:$0x73625140]
          %v3208 = vld.sshfl [vmem:[#allocation1 + $0x10] sm:$0xff pattern:$0x73625140]
          %v3209 = vld.sshfl [vmem:[#allocation1 + $0x18] sm:$0xff pattern:$0x73625140]
          %3214 = vmatpush.xpose.msra.mxu0 0.0
          %3215 = vmatpush.xpose.msra.mxu0 0.0
          %3216 = vmatpush.xpose.msra.mxu0 0.0
          %3217 = vmatpush.xpose.msra.mxu0 0.0
          %3218 = vmatpush.xpose.msra.mxu0 0.0
          %3219 = vmatpush.xpose.msra.mxu0 0.0
          %3220 = vmatpush.xpose.msra.mxu0 0.0
          %3221 = vmatpush.xpose.msra.mxu0 0.0
          %3222 = vmatpush.xpose.msra.mxu0 0.0
          %3223 = vmatpush.xpose.msra.mxu0 0.0
          %3224 = vmatpush.xpose.msra.mxu0 0.0
          %3225 = vmatpush.xpose.msra.mxu0 0.0
          %3226 = vmatpush.xpose.msra.mxu0 0.0
          %3227 = vmatpush.xpose.msra.mxu0 0.0
          %3228 = vmatpush.xpose.msra.mxu0 0.0
          %3229 = vmatpush.xpose.msra.mxu0 %v3196
          %3230 = vmatmul.f32.gmra.mxu0 %v3206
          %v3231 = vpop.f32.mrf.mxu0
          %v3232 = vadd.f32 %v3202, %v3231
          %3233 = vdwg.mxu0
          %3234 = vmatpush.xpose.msra.mxu0 0.0
          %3235 = vmatpush.xpose.msra.mxu0 0.0
          %3236 = vmatpush.xpose.msra.mxu0 0.0
          %3237 = vmatpush.xpose.msra.mxu0 0.0
          %3238 = vmatpush.xpose.msra.mxu0 0.0
          %3239 = vmatpush.xpose.msra.mxu0 0.0
          %3240 = vmatpush.xpose.msra.mxu0 0.0
          %3241 = vmatpush.xpose.msra.mxu0 0.0
          %3242 = vmatpush.xpose.msra.mxu0 0.0
          %3243 = vmatpush.xpose.msra.mxu0 0.0
          %3244 = vmatpush.xpose.msra.mxu0 0.0
          %3245 = vmatpush.xpose.msra.mxu0 0.0
          %3246 = vmatpush.xpose.msra.mxu0 0.0
          %3247 = vmatpush.xpose.msra.mxu0 0.0
          %3248 = vmatpush.xpose.msra.mxu0 0.0
          %3249 = vmatpush.xpose.msra.mxu0 %v3197
          %3250 = vmatmul.f32.gmra.mxu0 %v3207
          %v3251 = vpop.f32.mrf.mxu0
          %v3252 = vadd.f32 %v3232, %v3251
          %3253 = vdwg.mxu0
          %3254 = vmatpush.xpose.msra.mxu0 0.0
          %3255 = vmatpush.xpose.msra.mxu0 0.0
          %3256 = vmatpush.xpose.msra.mxu0 0.0
          %3257 = vmatpush.xpose.msra.mxu0 0.0
          %3258 = vmatpush.xpose.msra.mxu0 0.0
          %3259 = vmatpush.xpose.msra.mxu0 0.0
          %3260 = vmatpush.xpose.msra.mxu0 0.0
          %3261 = vmatpush.xpose.msra.mxu0 0.0
          %3262 = vmatpush.xpose.msra.mxu0 0.0
          %3263 = vmatpush.xpose.msra.mxu0 0.0
          %3264 = vmatpush.xpose.msra.mxu0 0.0
          %3265 = vmatpush.xpose.msra.mxu0 0.0
          %3266 = vmatpush.xpose.msra.mxu0 0.0
          %3267 = vmatpush.xpose.msra.mxu0 0.0
          %3268 = vmatpush.xpose.msra.mxu0 0.0
          %3269 = vmatpush.xpose.msra.mxu0 %v3198
          %3270 = vmatmul.f32.gmra.mxu0 %v3208
          %v3271 = vpop.f32.mrf.mxu0
          %v3272 = vadd.f32 %v3252, %v3271
          %3273 = vdwg.mxu0
          %3274 = vmatpush.xpose.msra.mxu0 0.0
          %3275 = vmatpush.xpose.msra.mxu0 0.0
          %3276 = vmatpush.xpose.msra.mxu0 0.0
          %3277 = vmatpush.xpose.msra.mxu0 0.0
          %3278 = vmatpush.xpose.msra.mxu0 0.0
          %3279 = vmatpush.xpose.msra.mxu0 0.0
          %3280 = vmatpush.xpose.msra.mxu0 0.0
          %3281 = vmatpush.xpose.msra.mxu0 0.0
          %3282 = vmatpush.xpose.msra.mxu0 0.0
          %3283 = vmatpush.xpose.msra.mxu0 0.0
          %3284 = vmatpush.xpose.msra.mxu0 0.0
          %3285 = vmatpush.xpose.msra.mxu0 0.0
          %3286 = vmatpush.xpose.msra.mxu0 0.0
          %3287 = vmatpush.xpose.msra.mxu0 0.0
          %3288 = vmatpush.xpose.msra.mxu0 0.0
          %3289 = vmatpush.xpose.msra.mxu0 %v3199
          %3290 = vmatmul.f32.gmra.mxu0 %v3209
          %v3291 = vpop.f32.mrf.mxu0
          %v3292 = vadd.f32 %v3272, %v3291
          %3293 = vdwg.mxu0
          %v3294 = vxor.u32 %v3292, 2147483648
          %v3295 = vmul.f32 %v3294, 1.442695
          %v3296 = vpow.pop %v3295
          %v3297 = vadd.f32 %v3296, 1.0
          %v3298 = vrcp.pop %v3297
          %v3299 = vmul.f32 %v3297, %v3298
          %v3300 = vsub.f32 1.0, %v3299
          %v3301 = vmul.f32 %v3298, %v3300
          %v3302 = vadd.f32 %v3298, %v3301
          %vm3303 = vweird.f32 %v3297
          %vm3304 = vweird.f32 %v3298
          %vm3305 = vmor %vm3303, %vm3304
          %v3306 = vsel %vm3305, %v3298, %v3302
          %v3307 = vand.u32 2147483647, %v3297
          %vm3308 = vcmp.eq.f32.partialorder %v3307, 8.507059e+37
          %v3309 = vand.u32 %v3297, 2147483648
          %v3310 = vor.u32 1.1754944e-38, %v3309
          %v3311 = vsel %vm3308, %v3310, %v3306
          %v3312 = vmul.f32 1.0, %v3311
          %vm3313 = vcmask 58368
          %3314 = vst.msk [vmem:[#allocation6] sm:$0x3] %vm3313, %v3312
          %v3315 = vld [vmem:[#allocation3] sm:$0x3]
          %v3316 = vld [vmem:[%s6] sm:$0x1]
          %v3318 = vperm.slane %v3316, 0
          %v3320 = vadd.f32 %v3315, %v3318
          %v3321 = vld [vmem:[%s7] sm:$0xff]
          %v3322 = vld [vmem:[%s7 + $0x8] sm:$0xff]
          %vm3323 = vcmask 31744
          %v3325 = vsel %vm3323, 0.0, 0
          %v3328 = vsel %vm3323, %v3321, 0
          %v3331 = vsel %vm3323, %v3322, 0
          %3333 = vmatpush.xpose.msra.mxu0 0.0
          %3334 = vmatpush.xpose.msra.mxu0 0.0
          %3335 = vmatpush.xpose.msra.mxu0 0.0
          %3336 = vmatpush.xpose.msra.mxu0 0.0
          %3337 = vmatpush.xpose.msra.mxu0 0.0
          %3338 = vmatpush.xpose.msra.mxu0 0.0
          %3339 = vmatpush.xpose.msra.mxu0 0.0
          %3340 = vmatpush.xpose.msra.mxu0 0.0
          %3341 = vmatpush.xpose.msra.mxu0 0.0
          %3342 = vmatpush.xpose.msra.mxu0 0.0
          %3343 = vmatpush.xpose.msra.mxu0 0.0
          %3344 = vmatpush.xpose.msra.mxu0 0.0
          %3345 = vmatpush.xpose.msra.mxu0 0.0
          %3346 = vmatpush.xpose.msra.mxu0 0.0
          %3347 = vmatpush.xpose.msra.mxu0 %v3331
          %3348 = vmatpush.xpose.msra.mxu0 %v3328
          %3349 = vmatmul.f32.gmra.mxu0 %v3325
          %v3350 = vpop.f32.mrf.mxu0
          %v3351 = vadd.f32 0.0, %v3350
          %3352 = vdwg.mxu0
          %v3353 = vadd.f32 %v3320, %v3351
          %v3354 = vxor.u32 %v3353, 2147483648
          %v3355 = vmul.f32 %v3354, 1.442695
          %v3356 = vpow.pop %v3355
          %v3357 = vadd.f32 %v3356, 1.0
          %v3358 = vrcp.pop %v3357
          %v3359 = vmul.f32 %v3357, %v3358
          %v3360 = vsub.f32 1.0, %v3359
          %v3361 = vmul.f32 %v3358, %v3360
          %v3362 = vadd.f32 %v3358, %v3361
          %vm3363 = vweird.f32 %v3357
          %vm3364 = vweird.f32 %v3358
          %vm3365 = vmor %vm3363, %vm3364
          %v3366 = vsel %vm3365, %v3358, %v3362
          %v3367 = vand.u32 2147483647, %v3357
          %vm3368 = vcmp.eq.f32.partialorder %v3367, 8.507059e+37
          %v3369 = vand.u32 %v3357, 2147483648
          %v3370 = vor.u32 1.1754944e-38, %v3369
          %v3371 = vsel %vm3368, %v3370, %v3366
          %v3372 = vmul.f32 1.0, %v3371
          %v3373 = vtanh.pop %v3353
          %v3374 = vmul.f32 %v3372, 0.0
          %3376 = vrot.lane.b32.xlu0 %v3373, 120
          %v3377 = vpop.permute.xlu0 %3376
          %v3379 = vmul.f32 %v3372, %v3377
          %3381 = vrot.lane.b32.xlu0 %v3379, 4
          %v3382 = vpop.permute.xlu0 %3381
          %v3384 = vadd.f32 %v3374, %v3382
          %v3385 = vtanh.pop %v3384
          %3387 = vrot.lane.b32.xlu0 %v3385, 8
          %v3388 = vpop.permute.xlu0 %3387
          %v3390 = vmul.f32 %v3372, %v3388
          %3392 = vrot.lane.b32.xlu0 %v3390, 116
          %v3393 = vpop.permute.xlu0 %3392
          %vm3395 = vcmask 24576
          %3396 = vst.msk [vmem:[#allocation8] sm:$0x1] %vm3395, %v3393
          %v3397 = vsel %vm3323, %v3393, 0
          %3399 = vmatpush.xpose.msra.mxu0 0.0
          %3400 = vmatpush.xpose.msra.mxu0 0.0
          %3401 = vmatpush.xpose.msra.mxu0 0.0
          %3402 = vmatpush.xpose.msra.mxu0 0.0
          %3403 = vmatpush.xpose.msra.mxu0 0.0
          %3404 = vmatpush.xpose.msra.mxu0 0.0
          %3405 = vmatpush.xpose.msra.mxu0 0.0
          %3406 = vmatpush.xpose.msra.mxu0 0.0
          %3407 = vmatpush.xpose.msra.mxu0 0.0
          %3408 = vmatpush.xpose.msra.mxu0 0.0
          %3409 = vmatpush.xpose.msra.mxu0 0.0
          %3410 = vmatpush.xpose.msra.mxu0 0.0
          %3411 = vmatpush.xpose.msra.mxu0 0.0
          %3412 = vmatpush.xpose.msra.mxu0 0.0
          %3413 = vmatpush.xpose.msra.mxu0 %v3331
          %3414 = vmatpush.xpose.msra.mxu0 %v3328
          %3415 = vmatmul.f32.gmra.mxu0 %v3397
          %v3416 = vpop.f32.mrf.mxu0
          %v3417 = vadd.f32 0.0, %v3416
          %3418 = vdwg.mxu0
          %v3420 = vrot.slane %v3417, 7
          %v3422 = vadd.f32 %v3320, %v3420
          %v3423 = vxor.u32 %v3422, 2147483648
          %v3424 = vmul.f32 %v3423, 1.442695
          %v3425 = vpow.pop %v3424
          %v3426 = vadd.f32 %v3425, 1.0
          %v3427 = vrcp.pop %v3426
          %v3428 = vmul.f32 %v3426, %v3427
          %v3429 = vsub.f32 1.0, %v3428
          %v3430 = vmul.f32 %v3427, %v3429
          %v3431 = vadd.f32 %v3427, %v3430
          %vm3432 = vweird.f32 %v3426
          %vm3433 = vweird.f32 %v3427
          %vm3434 = vmor %vm3432, %vm3433
          %v3435 = vsel %vm3434, %v3427, %v3431
          %v3436 = vand.u32 2147483647, %v3426
          %vm3437 = vcmp.eq.f32.partialorder %v3436, 8.507059e+37
          %v3438 = vand.u32 %v3426, 2147483648
          %v3439 = vor.u32 1.1754944e-38, %v3438
          %v3440 = vsel %vm3437, %v3439, %v3435
          %v3441 = vmul.f32 1.0, %v3440
          %v3442 = vtanh.pop %v3422
          %v3444 = vrot.slane %v3384, 7
          %v3446 = vmul.f32 %v3441, %v3444
          %3448 = vrot.lane.b32.xlu0 %v3442, 120
          %v3449 = vpop.permute.xlu0 %3448
          %v3451 = vmul.f32 %v3441, %v3449
          %3453 = vrot.lane.b32.xlu0 %v3451, 4
          %v3454 = vpop.permute.xlu0 %3453
          %v3456 = vadd.f32 %v3446, %v3454
          %v3457 = vtanh.pop %v3456
          %3459 = vrot.lane.b32.xlu0 %v3457, 8
          %v3460 = vpop.permute.xlu0 %3459
          %v3462 = vmul.f32 %v3441, %v3460
          %3464 = vrot.lane.b32.xlu0 %v3462, 116
          %v3465 = vpop.permute.xlu0 %3464
          %vm3467 = vcmask 25601
          %3468 = vst.msk [vmem:[#allocation8] sm:$0x2] %vm3467, %v3465
        $region106: #{drqnv1_forward.5} parent=89 // pred_fallthru
          _
        // Predicated region
        $region107: #{drqnv1_forward.5} parent=89 // pred_check
          %p3469 = pneg %p219
        $region108: #{drqnv1_forward.5} parent=89 // pred_check_branch
          %3471 = sbr.rel (%p3469) target = $region110
        $region109: #{drqnv1_forward.5} parent=89 // pred_region
          %3473 = vsyncadd [#allocation7], 0
          %s3475 = sshll.u32 [#allocation6], 4
          %s3476 = int_to_ptr.vmem [resolvable:$true] %s3475
          %s3477 = sshll.u32 %s8, 4
          %s3478 = int_to_ptr.hbm [resolvable:$true] %s3477
          %3480 = dma.vmem_to_hbm [thread:$0]  %s3476, 32, %s3478, [#allocation7]
        $region110: #{drqnv1_forward.5} parent=89 // pred_fallthru
          _
        // Predicated region
        $region111: #{drqnv1_forward.5} parent=89 // pred_check
          %p3481 = pneg %p240
        $region112: #{drqnv1_forward.5} parent=89 // pred_check_branch
          %3483 = sbr.rel (%p3481) target = $region114
        $region113: #{drqnv1_forward.5} parent=89 // pred_region
          %3485 = vsyncadd [#allocation9], 0
          %s3487 = sshll.u32 [#allocation8], 4
          %s3488 = int_to_ptr.vmem [resolvable:$true] %s3487
          %s3489 = sshll.u32 %s9, 4
          %s3490 = int_to_ptr.hbm [resolvable:$true] %s3489
          %3492 = dma.vmem_to_hbm [thread:$0]  %s3488, 32, %s3490, [#allocation9]
        $region114: #{drqnv1_forward.5} parent=89 // pred_fallthru
          _
        // Predicated region
        $region115: #{drqnv1_forward.5} parent=89 // pred_check
          %p3493 = pneg %p219
        $region116: #{drqnv1_forward.5} parent=89 // pred_check_branch
          %3495 = sbr.rel (%p3493) target = $region118
        $region117: #{drqnv1_forward.5} parent=89 // pred_region
          %3497 = dma.done [#allocation7], 32
        $region118: #{drqnv1_forward.5} parent=89 // pred_fallthru
          _
        // Predicated region
        $region119: #{drqnv1_forward.5} parent=89 // pred_check
          %p3498 = pneg %p240
        $region120: #{drqnv1_forward.5} parent=89 // pred_check_branch
          %3500 = sbr.rel (%p3498) target = $region122
        $region121: #{drqnv1_forward.5} parent=89 // pred_region
          %3502 = dma.done [#allocation9], 32
        $region122: #{drqnv1_forward.5} parent=89 // pred_fallthru
          _
      $region90: #{drqnv1_forward.5} parent=5 // pred_fallthru
        _
      %p3503 = scmp.le.s32.totalorder 2, %s18
      // Predicated region
      $region123: #{drqnv1_forward.5} parent=5 // pred_check
        %p3504 = pneg %p3503
      $region124: #{drqnv1_forward.5} parent=5 // pred_check_branch
        %3506 = sbr.rel (%p3504) target = $region126
      $region125: #{drqnv1_forward.5} parent=5 // pred_region
        %s3507 = ssub.s32 %s18, 2
      $region126: #{drqnv1_forward.5} parent=5 // pred_fallthru
        _
    $region6: #{drqnv1_forward.5} parent=1 // loop_footer
      %s22 = sadd.s32 1, %s18
    $region7: #{drqnv1_forward.5} parent=1 // loop_footer_branch
      %17 = sbr.rel target = $region3
    $region8: #{drqnv1_forward.5} parent=1 // loop_exit
      _
    %3508 = vsyncpa [#allocation7], 1
    %s3509 = scalar_lea.sflag [#allocation7], 1
    %3510 = vsyncpa %s3509, 1
    %3511 = vsyncpa [#allocation9], 1

</llo_original>
